<compile_context>
chip_gen: v7x
topology: tpu7x:2x2x1
jax: 0.10.0
libtpu: 0.0.40
codegen_flags: <defaults>
</compile_context>

<pallas_src>
import numpy as np
import jax
import jax.numpy as jnp
from jax.experimental import pallas as pl
from jax.experimental.pallas import tpu as pltpu


# ------------------------------ Pallas kernels --------------------------------

def _downsample_conv_kernel(a_ref, halo_ref, w01_ref, w2_ref, b_ref, o_ref, acc_ref):
    """One (batch, row-tile) step of the stride-2 3x3 conv on the (0,1,0,1)-padded input.

    a_ref    : (1, TM, 2*Wsp, 2*Cin) bf16  Hs rows [i*TM, i*TM+TM); dim2 = hp*Wsp + ws
               (hp = input-row parity, ws = output column), channels = q*Cin + ci
               (q = input-col parity).
    halo_ref : (1, 1, 2*Wsp, 2*Cin) bf16   Hs row (i+1)*TM (tap kh=2 for the tile's last row).
    w01_ref  : (3, 2*Cin, Cout) bf16       taps kw in {0,1} of kernel row kh (q-major rows).
    w2_ref   : (3, Cin, Cout)   bf16       tap kw=2 of kernel row kh.
    b_ref    : (1, Cout) f32
    o_ref    : (1, TM*Wo, Cout) f32
    acc_ref  : (TM*Wo, Cout) f32 VMEM scratch accumulator.
    """
    TM = a_ref.shape[1]
    Wsp = a_ref.shape[2] // 2
    Wo = Wsp - 1
    Cin2 = a_ref.shape[3]
    Cin = Cin2 // 2
    Cout = o_ref.shape[2]

    # Accumulator initialized with the bias (folds the bias add for free).
    acc_ref[...] = jnp.broadcast_to(b_ref[...], (TM * Wo, Cout))

    def accum(slab, w_tap, row0, nrows):
        # slab: (nrows, Wo, K) bf16 -> one MXU matmul accumulated (f32) into output rows
        # [row0, row0+nrows) of this tile.
        k = slab.shape[-1]
        lhs = slab.reshape(nrows * Wo, k)
        acc_ref[pl.ds(row0 * Wo, nrows * Wo), :] += jnp.dot(
            lhs, w_tap, preferred_element_type=jnp.float32)

    # Kernel rows kh in {0, 1}: input rows 2*ho + kh live at Hs = ho, row-parity kh.
    for kh in (0, 1):
        c0 = kh * Wsp
        accum(a_ref[0, pl.ds(0, TM), pl.ds(c0, Wo), pl.ds(0, Cin2)],
              w01_ref[kh], 0, TM)                                     # taps kw in {0,1}
        accum(a_ref[0, pl.ds(0, TM), pl.ds(c0 + 1, Wo), pl.ds(0, Cin)],
              w2_ref[kh], 0, TM)                                      # tap kw = 2

    # Kernel row kh = 2: input rows 2*ho + 2 live at Hs = ho + 1, row-parity 0.  Output rows
    # [0, TM-1) read rows [1, TM) of this tile's block; the last output row reads the halo.
    if TM > 1:
        accum(a_ref[0, pl.ds(1, TM - 1), pl.ds(0, Wo), pl.ds(0, Cin2)],
              w01_ref[2], 0, TM - 1)
        accum(a_ref[0, pl.ds(1, TM - 1), pl.ds(1, Wo), pl.ds(0, Cin)],
              w2_ref[2], 0, TM - 1)
    accum(halo_ref[0, pl.ds(0, 1), pl.ds(0, Wo), pl.ds(0, Cin2)], w01_ref[2], TM - 1, 1)
    accum(halo_ref[0, pl.ds(0, 1), pl.ds(1, Wo), pl.ds(0, Cin)], w2_ref[2], TM - 1, 1)

    o_ref[...] = acc_ref[...][None].astype(o_ref.dtype)


def _downsample_avg_kernel(x_ref, o_ref):
    """2x2 average pool.  x_ref: (1, TM, 2*Wo, 2*C) f32; o_ref: (1, TM*Wo, C) f32."""
    TM = x_ref.shape[1]
    Wo = x_ref.shape[2] // 2
    C = o_ref.shape[2]
    top = x_ref[0, pl.ds(0, TM), pl.ds(0, Wo), :]       # rows 2*ho   : (TM, Wo, 2C)
    bot = x_ref[0, pl.ds(0, TM), pl.ds(Wo, Wo), :]      # rows 2*ho+1
    s = (top + bot).astype(jnp.float32)
    y = 0.25 * (s[:, :, 0:C] + s[:, :, C:2 * C])        # (TM, Wo, C)
    o_ref[...] = y.reshape(TM * Wo, C)[None].astype(o_ref.dtype)


# ------------------------------ wrapper helpers ---------------------------------

def _pick_tile_rows(ho, wo, requested=None, target=16):
    """Largest divisor of Ho that is <= target and keeps TM*Wo sublane-aligned."""
    if requested is not None:
        assert ho % requested == 0, "tile_rows must divide Ho"
        return requested
    for tm in range(min(ho, target), 0, -1):
        if ho % tm == 0 and (tm * wo) % 8 == 0:
            return tm
    return ho   # whole-image row block (full-dim blocks are always layout-legal)


def _nbytes(shape, dtype):
    return int(np.prod(shape)) * np.dtype(dtype).itemsize


def _vmem_limit(need_bytes):
    # Explicit scoped-VMEM limit (v5e default is only 16 MiB); capped below v7x's 64 MiB.
    return int(min(max(need_bytes + (4 << 20), 32 << 20), 64 << 20))


def _repack_conv_weight(w_oihw):
    """(Cout, Cin, 3, 3) -> w01 (3, 2*Cin, Cout) for taps kw in {0,1} (q-major rows) and
    w2 (3, Cin, Cout) for kw=2.  No zero taps are packed (9-tap, not 16)."""
    cout, cin = w_oihw.shape[0], w_oihw.shape[1]
    wt = jnp.transpose(w_oihw, (2, 3, 1, 0))           # (kh, kw, ci, co)
    w01 = wt[:, 0:2].reshape(3, 2 * cin, cout)         # row index = q*Cin + ci
    w2 = wt[:, 2]                                       # (3, Cin, Cout)
    return w01, w2


def _conv_pallas_call(xs, w01, w2, bias, *, n, c, ho, wo, tm, single_buffer_consts):
    wsp = wo + 1
    n_tiles = ho // tm
    const_kw = {"pipeline_mode": pl.Buffered(1)} if single_buffer_consts else {}
    vmem_need = (2 * _nbytes((1, tm, 2 * wsp, 2 * c), jnp.bfloat16)          # activation blk
                 + 2 * _nbytes((1, 1, 2 * wsp, 2 * c), jnp.bfloat16)         # halo blk
                 + (1 if single_buffer_consts else 2) * (
                     _nbytes(w01.shape, jnp.bfloat16) + _nbytes(w2.shape, jnp.bfloat16)
                     + _nbytes(bias.shape, jnp.float32))
                 + 2 * _nbytes((1, tm * wo, c), jnp.float32)                 # output blk
                 + _nbytes((tm * wo, c), jnp.float32))                       # accumulator
    return pl.pallas_call(
        _downsample_conv_kernel,
        out_shape=jax.ShapeDtypeStruct((n, ho * wo, c), jnp.float32),
        grid=(n, n_tiles),
        in_specs=[
            pl.BlockSpec((1, tm, 2 * wsp, 2 * c), lambda b, i: (b, i, 0, 0)),
            pl.BlockSpec((1, 1, 2 * wsp, 2 * c), lambda b, i: (b, (i + 1) * tm, 0, 0)),
            pl.BlockSpec((3, 2 * c, c), lambda b, i: (0, 0, 0), **const_kw),
            pl.BlockSpec((3, c, c), lambda b, i: (0, 0, 0), **const_kw),
            pl.BlockSpec((1, c), lambda b, i: (0, 0), **const_kw),
        ],
        out_specs=pl.BlockSpec((1, tm * wo, c), lambda b, i: (b, i, 0)),
        scratch_shapes=[pltpu.VMEM((tm * wo, c), jnp.float32)],
        compiler_params=pltpu.CompilerParams(
            dimension_semantics=("parallel", "parallel"),
            vmem_limit_bytes=_vmem_limit(vmem_need)),
    )(xs, xs, w01, w2, bias)


def downsample_forward(x_nchw, params=None, *, with_conv, tile_rows=None):
    """Downsample.forward.  x_nchw: (N, C, H, W) -> (N, C, H//2, W//2)."""
    n, c, h, w = x_nchw.shape
    # TODO(synk): odd H/W (PyTorch floor behaviour) is not supported by the 2x2 packing.
    assert h % 2 == 0 and w % 2 == 0, "even spatial dims expected"
    ho, wo = h // 2, w // 2
    tm = _pick_tile_rows(ho, wo, tile_rows)
    x_nhwc = jnp.transpose(x_nchw, (0, 2, 3, 1))   # only real wrapper-side data movement

    if with_conv:
        # bf16 cast + (0,2,0,2) pad fuse with the transpose; the reshape below is a free
        # view: dim2 = hp*(Wo+1) + ws, channels = q*C + ci.  Row H+1 / col W+1 of the pad
        # are never read (only the PyTorch (0,1,0,1) pad row/col participate).
        xp = jnp.pad(x_nhwc.astype(jnp.bfloat16), ((0, 0), (0, 2), (0, 2), (0, 0)))
        xs = xp.reshape(n, ho + 1, 2 * (wo + 1), 2 * c)
        w01, w2 = _repack_conv_weight(params["conv_w"])
        w01 = w01.astype(jnp.bfloat16)
        w2 = w2.astype(jnp.bfloat16)
        bias = params["conv_b"].astype(jnp.float32).reshape(1, c)
        try:
            out_flat = _conv_pallas_call(xs, w01, w2, bias, n=n, c=c, ho=ho, wo=wo, tm=tm,
                                         single_buffer_consts=True)
        except Exception:
            # Fallback for builds without BlockSpec(pipeline_mode=pl.Buffered(1)).
            out_flat = _conv_pallas_call(xs, w01, w2, bias, n=n, c=c, ho=ho, wo=wo, tm=tm,
                                         single_buffer_consts=False)
    else:
        xs = x_nhwc.reshape(n, ho, 2 * wo, 2 * c)  # free reshape of the NHWC tensor
        n_tiles = ho // tm
        vmem_need = (2 * _nbytes((1, tm, 2 * wo, 2 * c), xs.dtype)
                     + 2 * _nbytes((1, tm * wo, c), jnp.float32))
        out_flat = pl.pallas_call(
            _downsample_avg_kernel,
            out_shape=jax.ShapeDtypeStruct((n, ho * wo, c), jnp.float32),
            grid=(n, n_tiles),
            in_specs=[pl.BlockSpec((1, tm, 2 * wo, 2 * c), lambda b, i: (b, i, 0, 0))],
            out_specs=pl.BlockSpec((1, tm * wo, c), lambda b, i: (b, i, 0)),
            compiler_params=pltpu.CompilerParams(
                dimension_semantics=("parallel", "parallel"),
                vmem_limit_bytes=_vmem_limit(vmem_need)),
        )(xs)

    out = out_flat.reshape(n, ho, wo, c)
    return jnp.transpose(out, (0, 3, 1, 2))        # NHWC -> NCHW


# ------------------------------ pure-JAX reference -----------------------------

def _ref_downsample_conv(x, w_oihw, b):
    xp = jnp.pad(x, ((0, 0), (0, 0), (0, 1), (0, 1)))        # PyTorch pad (0,1,0,1)
    y = jax.lax.conv_general_dilated(
        xp, w_oihw, (2, 2), ((0, 0), (0, 0)),
        dimension_numbers=("NCHW", "OIHW", "NCHW"),
        precision=jax.lax.Precision.HIGHEST)
    return y + b[None, :, None, None]


def _ref_downsample_avg(x):
    n, c, h, w = x.shape
    return x.reshape(n, c, h // 2, 2, w // 2, 2).mean(axis=(3, 5))


# ---------------------------------- main ----------------------------------------

if __name__ == "__main__":
    N, C, H, W = 2, 128, 16, 16          # C=128 -> fully lane-dense matmuls / stores

    key = jax.random.PRNGKey(0)
    k1, k2, k3 = jax.random.split(key, 3)
    x = jax.random.normal(k1, (N, C, H, W), jnp.float32)
    params = {
        "conv_w": jax.random.normal(k2, (C, C, 3, 3), jnp.float32) / np.sqrt(9 * C),
        "conv_b": 0.05 * jax.random.normal(k3, (C,), jnp.float32),
    }

    # Conv path with tile_rows=4 -> grid (N, 2): exercises the cross-tile halo row.
    out_conv = jax.block_until_ready(
        downsample_forward(x, params, with_conv=True, tile_rows=4))
    # Conv path again at the default (single row-tile) tiling.
    out_conv_full = jax.block_until_ready(downsample_forward(x, params, with_conv=True))
    # Avg-pool path.
    out_avg = jax.block_until_ready(downsample_forward(x, with_conv=False))

    assert out_conv.shape == (N, C, H // 2, W // 2) and out_conv.dtype == jnp.float32
    assert out_avg.shape == (N, C, H // 2, W // 2) and out_avg.dtype == jnp.float32

    ref_conv = jax.block_until_ready(
        _ref_downsample_conv(x, params["conv_w"], params["conv_b"]))
    ref_avg = jax.block_until_ready(_ref_downsample_avg(x))

    # bf16 matmul operands (f32 accumulate) -> loose tolerance vs the f32 reference.
    np.testing.assert_allclose(np.asarray(out_conv), np.asarray(ref_conv),
                               rtol=2e-2, atol=2e-2)
    np.testing.assert_allclose(np.asarray(out_conv_full), np.asarray(ref_conv),
                               rtol=2e-2, atol=2e-2)
    np.testing.assert_allclose(np.asarray(out_avg), np.asarray(ref_avg),
                               rtol=1e-5, atol=1e-5)

    print("KERNEL_OK")
</pallas_src>

<mosaic_0001>
module attributes {stable_mosaic.version = 11 : i64} {
  func.func @_downsample_conv_kernel(%arg0: i32, %arg1: i32, %arg2: memref<1x4x18x256xbf16, #tpu.memory_space<vmem>>, %arg3: memref<1x1x18x256xbf16, #tpu.memory_space<vmem>>, %arg4: memref<3x256x128xbf16, #tpu.memory_space<vmem>>, %arg5: memref<3x128x128xbf16, #tpu.memory_space<vmem>>, %arg6: memref<1x128xf32, #tpu.memory_space<vmem>>, %arg7: memref<1x32x128xf32, #tpu.memory_space<vmem>>, %arg8: memref<32x128xf32, #tpu.memory_space<vmem>>) attributes {dimension_semantics = [#tpu.dimension_semantics<parallel>, #tpu.dimension_semantics<parallel>], iteration_bounds = array<i64: 2, 2>, scalar_prefetch = 0 : i64, scratch_operands = 1 : i64, tpu.core_type = #tpu.core_type<tc>, window_params = [{transform_indices = @transform_0, window_bounds = array<i64: 1, 4, 18, 256>}, {transform_indices = @transform_1, window_bounds = array<i64: 1, 1, 18, 256>}, {pipeline_mode = #tpu.pipeline_mode<synchronous>, transform_indices = @transform_2, window_bounds = array<i64: 3, 256, 128>}, {pipeline_mode = #tpu.pipeline_mode<synchronous>, transform_indices = @transform_3, window_bounds = array<i64: 3, 128, 128>}, {pipeline_mode = #tpu.pipeline_mode<synchronous>, transform_indices = @transform_4, window_bounds = array<i64: 1, 128>}, {transform_indices = @transform_5, window_bounds = array<i64: 1, 32, 128>}]} {
    %c0 = arith.constant 0 : index
    %c0_0 = arith.constant 0 : index
    %0 = vector.load %arg6[%c0, %c0_0] : memref<1x128xf32, #tpu.memory_space<vmem>>, vector<1x128xf32>
    %1 = vector.shape_cast %0 : vector<1x128xf32> to vector<1x128xf32>
    %2 = vector.broadcast %1 : vector<1x128xf32> to vector<32x128xf32>
    %c0_1 = arith.constant 0 : index
    %c0_2 = arith.constant 0 : index
    %3 = vector.load %arg8[%c0_1, %c0_2] : memref<32x128xf32, #tpu.memory_space<vmem>>, vector<32x128xf32>
    tpu.vector_store %arg8[%c0_1, %c0_2], %2 {strides = array<i32>} : memref<32x128xf32, #tpu.memory_space<vmem>>, vector<32x128xf32>,
    %c0_3 = arith.constant 0 : index
    %c0_4 = arith.constant 0 : index
    %c0_5 = arith.constant 0 : index
    %c0_6 = arith.constant 0 : index
    %4 = vector.load %arg2[%c0_3, %c0_4, %c0_5, %c0_6] : memref<1x4x18x256xbf16, #tpu.memory_space<vmem>>, vector<1x4x8x256xbf16>
    %5 = vector.shape_cast %4 : vector<1x4x8x256xbf16> to vector<4x8x256xbf16>
    %c0_7 = arith.constant 0 : index
    %c0_8 = arith.constant 0 : index
    %c0_9 = arith.constant 0 : index
    %6 = vector.load %arg4[%c0_7, %c0_8, %c0_9] : memref<3x256x128xbf16, #tpu.memory_space<vmem>>, vector<1x256x128xbf16>
    %7 = vector.shape_cast %6 : vector<1x256x128xbf16> to vector<256x128xbf16>
    %8 = vector.shape_cast %5 : vector<4x8x256xbf16> to vector<32x256xbf16>
    %c0_10 = arith.constant 0 : index
    %c0_11 = arith.constant 0 : index
    %9 = vector.load %arg8[%c0_10, %c0_11] : memref<32x128xf32, #tpu.memory_space<vmem>>, vector<32x128xf32>
    %cst = arith.constant dense<0.000000e+00> : vector<32x128xf32>
    %10 = tpu.matmul %8, %7, %cst {dimension_numbers = #tpu.dot_dimension_numbers<[1], [0], [0], [1], [0, 0, 1, 1], [], []>} : vector<32x256xbf16>, vector<256x128xbf16>, vector<32x128xf32> -> vector<32x128xf32>
    %11 = arith.addf %9, %10 : vector<32x128xf32>
    %c0_12 = arith.constant 0 : index
    %c0_13 = arith.constant 0 : index
    %12 = vector.load %arg8[%c0_12, %c0_13] : memref<32x128xf32, #tpu.memory_space<vmem>>, vector<32x128xf32>
    tpu.vector_store %arg8[%c0_12, %c0_13], %11 {strides = array<i32>} : memref<32x128xf32, #tpu.memory_space<vmem>>, vector<32x128xf32>,
    %c0_14 = arith.constant 0 : index
    %c0_15 = arith.constant 0 : index
    %c1 = arith.constant 1 : index
    %c0_16 = arith.constant 0 : index
    %13 = vector.load %arg2[%c0_14, %c0_15, %c1, %c0_16] : memref<1x4x18x256xbf16, #tpu.memory_space<vmem>>, vector<1x4x8x128xbf16>
    %14 = vector.shape_cast %13 : vector<1x4x8x128xbf16> to vector<4x8x128xbf16>
    %c0_17 = arith.constant 0 : index
    %c0_18 = arith.constant 0 : index
    %c0_19 = arith.constant 0 : index
    %15 = vector.load %arg5[%c0_17, %c0_18, %c0_19] : memref<3x128x128xbf16, #tpu.memory_space<vmem>>, vector<1x128x128xbf16>
    %16 = vector.shape_cast %15 : vector<1x128x128xbf16> to vector<128x128xbf16>
    %17 = vector.shape_cast %14 : vector<4x8x128xbf16> to vector<32x128xbf16>
    %c0_20 = arith.constant 0 : index
    %c0_21 = arith.constant 0 : index
    %18 = vector.load %arg8[%c0_20, %c0_21] : memref<32x128xf32, #tpu.memory_space<vmem>>, vector<32x128xf32>
    %cst_22 = arith.constant dense<0.000000e+00> : vector<32x128xf32>
    %19 = tpu.matmul %17, %16, %cst_22 {dimension_numbers = #tpu.dot_dimension_numbers<[1], [0], [0], [1], [0, 0, 1, 1], [], []>} : vector<32x128xbf16>, vector<128x128xbf16>, vector<32x128xf32> -> vector<32x128xf32>
    %20 = arith.addf %18, %19 : vector<32x128xf32>
    %c0_23 = arith.constant 0 : index
    %c0_24 = arith.constant 0 : index
    %21 = vector.load %arg8[%c0_23, %c0_24] : memref<32x128xf32, #tpu.memory_space<vmem>>, vector<32x128xf32>
    tpu.vector_store %arg8[%c0_23, %c0_24], %20 {strides = array<i32>} : memref<32x128xf32, #tpu.memory_space<vmem>>, vector<32x128xf32>,
    %c0_25 = arith.constant 0 : index
    %c0_26 = arith.constant 0 : index
    %c9 = arith.constant 9 : index
    %c0_27 = arith.constant 0 : index
    %22 = vector.load %arg2[%c0_25, %c0_26, %c9, %c0_27] : memref<1x4x18x256xbf16, #tpu.memory_space<vmem>>, vector<1x4x8x256xbf16>
    %23 = vector.shape_cast %22 : vector<1x4x8x256xbf16> to vector<4x8x256xbf16>
    %c1_28 = arith.constant 1 : index
    %c0_29 = arith.constant 0 : index
    %c0_30 = arith.constant 0 : index
    %24 = vector.load %arg4[%c1_28, %c0_29, %c0_30] : memref<3x256x128xbf16, #tpu.memory_space<vmem>>, vector<1x256x128xbf16>
    %25 = vector.shape_cast %24 : vector<1x256x128xbf16> to vector<256x128xbf16>
    %26 = vector.shape_cast %23 : vector<4x8x256xbf16> to vector<32x256xbf16>
    %c0_31 = arith.constant 0 : index
    %c0_32 = arith.constant 0 : index
    %27 = vector.load %arg8[%c0_31, %c0_32] : memref<32x128xf32, #tpu.memory_space<vmem>>, vector<32x128xf32>
    %cst_33 = arith.constant dense<0.000000e+00> : vector<32x128xf32>
    %28 = tpu.matmul %26, %25, %cst_33 {dimension_numbers = #tpu.dot_dimension_numbers<[1], [0], [0], [1], [0, 0, 1, 1], [], []>} : vector<32x256xbf16>, vector<256x128xbf16>, vector<32x128xf32> -> vector<32x128xf32>
    %29 = arith.addf %27, %28 : vector<32x128xf32>
    %c0_34 = arith.constant 0 : index
    %c0_35 = arith.constant 0 : index
    %30 = vector.load %arg8[%c0_34, %c0_35] : memref<32x128xf32, #tpu.memory_space<vmem>>, vector<32x128xf32>
    tpu.vector_store %arg8[%c0_34, %c0_35], %29 {strides = array<i32>} : memref<32x128xf32, #tpu.memory_space<vmem>>, vector<32x128xf32>,
    %c0_36 = arith.constant 0 : index
    %c0_37 = arith.constant 0 : index
    %c10 = arith.constant 10 : index
    %c0_38 = arith.constant 0 : index
    %31 = vector.load %arg2[%c0_36, %c0_37, %c10, %c0_38] : memref<1x4x18x256xbf16, #tpu.memory_space<vmem>>, vector<1x4x8x128xbf16>
    %32 = vector.shape_cast %31 : vector<1x4x8x128xbf16> to vector<4x8x128xbf16>
    %c1_39 = arith.constant 1 : index
    %c0_40 = arith.constant 0 : index
    %c0_41 = arith.constant 0 : index
    %33 = vector.load %arg5[%c1_39, %c0_40, %c0_41] : memref<3x128x128xbf16, #tpu.memory_space<vmem>>, vector<1x128x128xbf16>
    %34 = vector.shape_cast %33 : vector<1x128x128xbf16> to vector<128x128xbf16>
    %35 = vector.shape_cast %32 : vector<4x8x128xbf16> to vector<32x128xbf16>
    %c0_42 = arith.constant 0 : index
    %c0_43 = arith.constant 0 : index
    %36 = vector.load %arg8[%c0_42, %c0_43] : memref<32x128xf32, #tpu.memory_space<vmem>>, vector<32x128xf32>
    %cst_44 = arith.constant dense<0.000000e+00> : vector<32x128xf32>
    %37 = tpu.matmul %35, %34, %cst_44 {dimension_numbers = #tpu.dot_dimension_numbers<[1], [0], [0], [1], [0, 0, 1, 1], [], []>} : vector<32x128xbf16>, vector<128x128xbf16>, vector<32x128xf32> -> vector<32x128xf32>
    %38 = arith.addf %36, %37 : vector<32x128xf32>
    %c0_45 = arith.constant 0 : index
    %c0_46 = arith.constant 0 : index
    %39 = vector.load %arg8[%c0_45, %c0_46] : memref<32x128xf32, #tpu.memory_space<vmem>>, vector<32x128xf32>
    tpu.vector_store %arg8[%c0_45, %c0_46], %38 {strides = array<i32>} : memref<32x128xf32, #tpu.memory_space<vmem>>, vector<32x128xf32>,
    %c0_47 = arith.constant 0 : index
    %c1_48 = arith.constant 1 : index
    %c0_49 = arith.constant 0 : index
    %c0_50 = arith.constant 0 : index
    %40 = vector.load %arg2[%c0_47, %c1_48, %c0_49, %c0_50] : memref<1x4x18x256xbf16, #tpu.memory_space<vmem>>, vector<1x3x8x256xbf16>
    %41 = vector.shape_cast %40 : vector<1x3x8x256xbf16> to vector<3x8x256xbf16>
    %c2 = arith.constant 2 : index
    %c0_51 = arith.constant 0 : index
    %c0_52 = arith.constant 0 : index
    %42 = vector.load %arg4[%c2, %c0_51, %c0_52] : memref<3x256x128xbf16, #tpu.memory_space<vmem>>, vector<1x256x128xbf16>
    %43 = vector.shape_cast %42 : vector<1x256x128xbf16> to vector<256x128xbf16>
    %44 = vector.shape_cast %41 : vector<3x8x256xbf16> to vector<24x256xbf16>
    %c0_53 = arith.constant 0 : index
    %c0_54 = arith.constant 0 : index
    %45 = vector.load %arg8[%c0_53, %c0_54] : memref<32x128xf32, #tpu.memory_space<vmem>>, vector<24x128xf32>
    %cst_55 = arith.constant dense<0.000000e+00> : vector<24x128xf32>
    %46 = tpu.matmul %44, %43, %cst_55 {dimension_numbers = #tpu.dot_dimension_numbers<[1], [0], [0], [1], [0, 0, 1, 1], [], []>} : vector<24x256xbf16>, vector<256x128xbf16>, vector<24x128xf32> -> vector<24x128xf32>
    %47 = arith.addf %45, %46 : vector<24x128xf32>
    %c0_56 = arith.constant 0 : index
    %c0_57 = arith.constant 0 : index
    %48 = vector.load %arg8[%c0_56, %c0_57] : memref<32x128xf32, #tpu.memory_space<vmem>>, vector<24x128xf32>
    tpu.vector_store %arg8[%c0_56, %c0_57], %47 {strides = array<i32>} : memref<32x128xf32, #tpu.memory_space<vmem>>, vector<24x128xf32>,
    %c0_58 = arith.constant 0 : index
    %c1_59 = arith.constant 1 : index
    %c1_60 = arith.constant 1 : index
    %c0_61 = arith.constant 0 : index
    %49 = vector.load %arg2[%c0_58, %c1_59, %c1_60, %c0_61] : memref<1x4x18x256xbf16, #tpu.memory_space<vmem>>, vector<1x3x8x128xbf16>
    %50 = vector.shape_cast %49 : vector<1x3x8x128xbf16> to vector<3x8x128xbf16>
    %c2_62 = arith.constant 2 : index
    %c0_63 = arith.constant 0 : index
    %c0_64 = arith.constant 0 : index
    %51 = vector.load %arg5[%c2_62, %c0_63, %c0_64] : memref<3x128x128xbf16, #tpu.memory_space<vmem>>, vector<1x128x128xbf16>
    %52 = vector.shape_cast %51 : vector<1x128x128xbf16> to vector<128x128xbf16>
    %53 = vector.shape_cast %50 : vector<3x8x128xbf16> to vector<24x128xbf16>
    %c0_65 = arith.constant 0 : index
    %c0_66 = arith.constant 0 : index
    %54 = vector.load %arg8[%c0_65, %c0_66] : memref<32x128xf32, #tpu.memory_space<vmem>>, vector<24x128xf32>
    %cst_67 = arith.constant dense<0.000000e+00> : vector<24x128xf32>
    %55 = tpu.matmul %53, %52, %cst_67 {dimension_numbers = #tpu.dot_dimension_numbers<[1], [0], [0], [1], [0, 0, 1, 1], [], []>} : vector<24x128xbf16>, vector<128x128xbf16>, vector<24x128xf32> -> vector<24x128xf32>
    %56 = arith.addf %54, %55 : vector<24x128xf32>
    %c0_68 = arith.constant 0 : index
    %c0_69 = arith.constant 0 : index
    %57 = vector.load %arg8[%c0_68, %c0_69] : memref<32x128xf32, #tpu.memory_space<vmem>>, vector<24x128xf32>
    tpu.vector_store %arg8[%c0_68, %c0_69], %56 {strides = array<i32>} : memref<32x128xf32, #tpu.memory_space<vmem>>, vector<24x128xf32>,
    %c0_70 = arith.constant 0 : index
    %c0_71 = arith.constant 0 : index
    %c0_72 = arith.constant 0 : index
    %c0_73 = arith.constant 0 : index
    %58 = vector.load %arg3[%c0_70, %c0_71, %c0_72, %c0_73] : memref<1x1x18x256xbf16, #tpu.memory_space<vmem>>, vector<1x1x8x256xbf16>
    %59 = vector.shape_cast %58 : vector<1x1x8x256xbf16> to vector<1x8x256xbf16>
    %c2_74 = arith.constant 2 : index
    %c0_75 = arith.constant 0 : index
    %c0_76 = arith.constant 0 : index
    %60 = vector.load %arg4[%c2_74, %c0_75, %c0_76] : memref<3x256x128xbf16, #tpu.memory_space<vmem>>, vector<1x256x128xbf16>
    %61 = vector.shape_cast %60 : vector<1x256x128xbf16> to vector<256x128xbf16>
    %62 = vector.shape_cast %59 : vector<1x8x256xbf16> to vector<8x256xbf16>
    %c24 = arith.constant 24 : index
    %c0_77 = arith.constant 0 : index
    %63 = vector.load %arg8[%c24, %c0_77] : memref<32x128xf32, #tpu.memory_space<vmem>>, vector<8x128xf32>
    %cst_78 = arith.constant dense<0.000000e+00> : vector<8x128xf32>
    %64 = tpu.matmul %62, %61, %cst_78 {dimension_numbers = #tpu.dot_dimension_numbers<[1], [0], [0], [1], [0, 0, 1, 1], [], []>} : vector<8x256xbf16>, vector<256x128xbf16>, vector<8x128xf32> -> vector<8x128xf32>
    %65 = arith.addf %63, %64 : vector<8x128xf32>
    %c24_79 = arith.constant 24 : index
    %c0_80 = arith.constant 0 : index
    %66 = vector.load %arg8[%c24_79, %c0_80] : memref<32x128xf32, #tpu.memory_space<vmem>>, vector<8x128xf32>
    tpu.vector_store %arg8[%c24_79, %c0_80], %65 {strides = array<i32>} : memref<32x128xf32, #tpu.memory_space<vmem>>, vector<8x128xf32>,
    %c0_81 = arith.constant 0 : index
    %c0_82 = arith.constant 0 : index
    %c1_83 = arith.constant 1 : index
    %c0_84 = arith.constant 0 : index
    %67 = vector.load %arg3[%c0_81, %c0_82, %c1_83, %c0_84] : memref<1x1x18x256xbf16, #tpu.memory_space<vmem>>, vector<1x1x8x128xbf16>
    %68 = vector.shape_cast %67 : vector<1x1x8x128xbf16> to vector<1x8x128xbf16>
    %c2_85 = arith.constant 2 : index
    %c0_86 = arith.constant 0 : index
    %c0_87 = arith.constant 0 : index
    %69 = vector.load %arg5[%c2_85, %c0_86, %c0_87] : memref<3x128x128xbf16, #tpu.memory_space<vmem>>, vector<1x128x128xbf16>
    %70 = vector.shape_cast %69 : vector<1x128x128xbf16> to vector<128x128xbf16>
    %71 = vector.shape_cast %68 : vector<1x8x128xbf16> to vector<8x128xbf16>
    %c24_88 = arith.constant 24 : index
    %c0_89 = arith.constant 0 : index
    %72 = vector.load %arg8[%c24_88, %c0_89] : memref<32x128xf32, #tpu.memory_space<vmem>>, vector<8x128xf32>
    %cst_90 = arith.constant dense<0.000000e+00> : vector<8x128xf32>
    %73 = tpu.matmul %71, %70, %cst_90 {dimension_numbers = #tpu.dot_dimension_numbers<[1], [0], [0], [1], [0, 0, 1, 1], [], []>} : vector<8x128xbf16>, vector<128x128xbf16>, vector<8x128xf32> -> vector<8x128xf32>
    %74 = arith.addf %72, %73 : vector<8x128xf32>
    %c24_91 = arith.constant 24 : index
    %c0_92 = arith.constant 0 : index
    %75 = vector.load %arg8[%c24_91, %c0_92] : memref<32x128xf32, #tpu.memory_space<vmem>>, vector<8x128xf32>
    tpu.vector_store %arg8[%c24_91, %c0_92], %74 {strides = array<i32>} : memref<32x128xf32, #tpu.memory_space<vmem>>, vector<8x128xf32>,
    %c0_93 = arith.constant 0 : index
    %c0_94 = arith.constant 0 : index
    %76 = vector.load %arg8[%c0_93, %c0_94] : memref<32x128xf32, #tpu.memory_space<vmem>>, vector<32x128xf32>
    %77 = vector.shape_cast %76 : vector<32x128xf32> to vector<1x32x128xf32>
    %c0_95 = arith.constant 0 : index
    %c0_96 = arith.constant 0 : index
    %c0_97 = arith.constant 0 : index
    %78 = vector.load %arg7[%c0_95, %c0_96, %c0_97] : memref<1x32x128xf32, #tpu.memory_space<vmem>>, vector<1x32x128xf32>
    tpu.vector_store %arg7[%c0_95, %c0_96, %c0_97], %77 {strides = array<i32>} : memref<1x32x128xf32, #tpu.memory_space<vmem>>, vector<1x32x128xf32>,
    return
  }
  func.func @transform_0(%arg0: i32, %arg1: i32) -> (i32, i32, i32, i32) {
    %c0_i32 = arith.constant 0 : i32
    %c0_i32_0 = arith.constant 0 : i32
    %c0_i32_1 = arith.constant 0 : i32
    return %arg0, %arg1, %c0_i32, %c0_i32_0 : i32, i32, i32, i32
  }
  func.func @transform_1(%arg0: i32, %arg1: i32) -> (i32, i32, i32, i32) {
    %c1_i32 = arith.constant 1 : i32
    %0 = arith.addi %arg1, %c1_i32 : i32
    %c4_i32 = arith.constant 4 : i32
    %1 = arith.muli %0, %c4_i32 : i32
    %c0_i32 = arith.constant 0 : i32
    %c0_i32_0 = arith.constant 0 : i32
    %c0_i32_1 = arith.constant 0 : i32
    return %arg0, %1, %c0_i32, %c0_i32_0 : i32, i32, i32, i32
  }
  func.func @transform_2(%arg0: i32, %arg1: i32) -> (i32, i32, i32) {
    %c0_i32 = arith.constant 0 : i32
    %c0_i32_0 = arith.constant 0 : i32
    %c0_i32_1 = arith.constant 0 : i32
    %c0_i32_2 = arith.constant 0 : i32
    return %c0_i32, %c0_i32_0, %c0_i32_1 : i32, i32, i32
  }
  func.func @transform_3(%arg0: i32, %arg1: i32) -> (i32, i32, i32) {
    %c0_i32 = arith.constant 0 : i32
    %c0_i32_0 = arith.constant 0 : i32
    %c0_i32_1 = arith.constant 0 : i32
    %c0_i32_2 = arith.constant 0 : i32
    return %c0_i32, %c0_i32_0, %c0_i32_1 : i32, i32, i32
  }
  func.func @transform_4(%arg0: i32, %arg1: i32) -> (i32, i32) {
    %c0_i32 = arith.constant 0 : i32
    %c0_i32_0 = arith.constant 0 : i32
    %c0_i32_1 = arith.constant 0 : i32
    return %c0_i32, %c0_i32_0 : i32, i32
  }
  func.func @transform_5(%arg0: i32, %arg1: i32) -> (i32, i32, i32) {
    %c0_i32 = arith.constant 0 : i32
    %c0_i32_0 = arith.constant 0 : i32
    return %arg0, %arg1, %c0_i32 : i32, i32, i32
  }
}

module attributes {stable_mosaic.version = 11 : i64} {
  func.func @_downsample_conv_kernel(%arg0: i32, %arg1: i32, %arg2: memref<1x4x18x256xbf16, #tpu.memory_space<vmem>>, %arg3: memref<1x1x18x256xbf16, #tpu.memory_space<vmem>>, %arg4: memref<3x256x128xbf16, #tpu.memory_space<vmem>>, %arg5: memref<3x128x128xbf16, #tpu.memory_space<vmem>>, %arg6: memref<1x128xf32, #tpu.memory_space<vmem>>, %arg7: memref<1x32x128xf32, #tpu.memory_space<vmem>>, %arg8: memref<32x128xf32, #tpu.memory_space<vmem>>) attributes {dimension_semantics = [#tpu.dimension_semantics<parallel>, #tpu.dimension_semantics<parallel>], iteration_bounds = array<i64: 2, 2>, scalar_prefetch = 0 : i64, scratch_operands = 1 : i64, tpu.core_type = #tpu.core_type<tc>, window_params = [{transform_indices = @transform_0, window_bounds = array<i64: 1, 4, 18, 256>}, {transform_indices = @transform_1, window_bounds = array<i64: 1, 1, 18, 256>}, {pipeline_mode = #tpu.pipeline_mode<synchronous>, transform_indices = @transform_2, window_bounds = array<i64: 3, 256, 128>}, {pipeline_mode = #tpu.pipeline_mode<synchronous>, transform_indices = @transform_3, window_bounds = array<i64: 3, 128, 128>}, {pipeline_mode = #tpu.pipeline_mode<synchronous>, transform_indices = @transform_4, window_bounds = array<i64: 1, 128>}, {transform_indices = @transform_5, window_bounds = array<i64: 1, 32, 128>}]} {
    %c0 = arith.constant 0 : index
    %c0_0 = arith.constant 0 : index
    %0 = vector.load %arg6[%c0, %c0_0] : memref<1x128xf32, #tpu.memory_space<vmem>>, vector<1x128xf32>
    %1 = vector.shape_cast %0 : vector<1x128xf32> to vector<1x128xf32>
    %2 = vector.broadcast %1 : vector<1x128xf32> to vector<32x128xf32>
    %c0_1 = arith.constant 0 : index
    %c0_2 = arith.constant 0 : index
    %3 = vector.load %arg8[%c0_1, %c0_2] : memref<32x128xf32, #tpu.memory_space<vmem>>, vector<32x128xf32>
    tpu.vector_store %arg8[%c0_1, %c0_2], %2 {strides = array<i32>} : memref<32x128xf32, #tpu.memory_space<vmem>>, vector<32x128xf32>,
    %c0_3 = arith.constant 0 : index
    %c0_4 = arith.constant 0 : index
    %c0_5 = arith.constant 0 : index
    %c0_6 = arith.constant 0 : index
    %4 = vector.load %arg2[%c0_3, %c0_4, %c0_5, %c0_6] : memref<1x4x18x256xbf16, #tpu.memory_space<vmem>>, vector<1x4x8x256xbf16>
    %5 = vector.shape_cast %4 : vector<1x4x8x256xbf16> to vector<4x8x256xbf16>
    %c0_7 = arith.constant 0 : index
    %c0_8 = arith.constant 0 : index
    %c0_9 = arith.constant 0 : index
    %6 = vector.load %arg4[%c0_7, %c0_8, %c0_9] : memref<3x256x128xbf16, #tpu.memory_space<vmem>>, vector<1x256x128xbf16>
    %7 = vector.shape_cast %6 : vector<1x256x128xbf16> to vector<256x128xbf16>
    %8 = vector.shape_cast %5 : vector<4x8x256xbf16> to vector<32x256xbf16>
    %c0_10 = arith.constant 0 : index
    %c0_11 = arith.constant 0 : index
    %9 = vector.load %arg8[%c0_10, %c0_11] : memref<32x128xf32, #tpu.memory_space<vmem>>, vector<32x128xf32>
    %cst = arith.constant dense<0.000000e+00> : vector<32x128xf32>
    %10 = tpu.matmul %8, %7, %cst {dimension_numbers = #tpu.dot_dimension_numbers<[1], [0], [0], [1], [0, 0, 1, 1], [], []>} : vector<32x256xbf16>, vector<256x128xbf16>, vector<32x128xf32> -> vector<32x128xf32>
    %11 = arith.addf %9, %10 : vector<32x128xf32>
    %c0_12 = arith.constant 0 : index
    %c0_13 = arith.constant 0 : index
    %12 = vector.load %arg8[%c0_12, %c0_13] : memref<32x128xf32, #tpu.memory_space<vmem>>, vector<32x128xf32>
    tpu.vector_store %arg8[%c0_12, %c0_13], %11 {strides = array<i32>} : memref<32x128xf32, #tpu.memory_space<vmem>>, vector<32x128xf32>,
    %c0_14 = arith.constant 0 : index
    %c0_15 = arith.constant 0 : index
    %c1 = arith.constant 1 : index
    %c0_16 = arith.constant 0 : index
    %13 = vector.load %arg2[%c0_14, %c0_15, %c1, %c0_16] : memref<1x4x18x256xbf16, #tpu.memory_space<vmem>>, vector<1x4x8x128xbf16>
    %14 = vector.shape_cast %13 : vector<1x4x8x128xbf16> to vector<4x8x128xbf16>
    %c0_17 = arith.constant 0 : index
    %c0_18 = arith.constant 0 : index
    %c0_19 = arith.constant 0 : index
    %15 = vector.load %arg5[%c0_17, %c0_18, %c0_19] : memref<3x128x128xbf16, #tpu.memory_space<vmem>>, vector<1x128x128xbf16>
    %16 = vector.shape_cast %15 : vector<1x128x128xbf16> to vector<128x128xbf16>
    %17 = vector.shape_cast %14 : vector<4x8x128xbf16> to vector<32x128xbf16>
    %c0_20 = arith.constant 0 : index
    %c0_21 = arith.constant 0 : index
    %18 = vector.load %arg8[%c0_20, %c0_21] : memref<32x128xf32, #tpu.memory_space<vmem>>, vector<32x128xf32>
    %cst_22 = arith.constant dense<0.000000e+00> : vector<32x128xf32>
    %19 = tpu.matmul %17, %16, %cst_22 {dimension_numbers = #tpu.dot_dimension_numbers<[1], [0], [0], [1], [0, 0, 1, 1], [], []>} : vector<32x128xbf16>, vector<128x128xbf16>, vector<32x128xf32> -> vector<32x128xf32>
    %20 = arith.addf %18, %19 : vector<32x128xf32>
    %c0_23 = arith.constant 0 : index
    %c0_24 = arith.constant 0 : index
    %21 = vector.load %arg8[%c0_23, %c0_24] : memref<32x128xf32, #tpu.memory_space<vmem>>, vector<32x128xf32>
    tpu.vector_store %arg8[%c0_23, %c0_24], %20 {strides = array<i32>} : memref<32x128xf32, #tpu.memory_space<vmem>>, vector<32x128xf32>,
    %c0_25 = arith.constant 0 : index
    %c0_26 = arith.constant 0 : index
    %c9 = arith.constant 9 : index
    %c0_27 = arith.constant 0 : index
    %22 = vector.load %arg2[%c0_25, %c0_26, %c9, %c0_27] : memref<1x4x18x256xbf16, #tpu.memory_space<vmem>>, vector<1x4x8x256xbf16>
    %23 = vector.shape_cast %22 : vector<1x4x8x256xbf16> to vector<4x8x256xbf16>
    %c1_28 = arith.constant 1 : index
    %c0_29 = arith.constant 0 : index
    %c0_30 = arith.constant 0 : index
    %24 = vector.load %arg4[%c1_28, %c0_29, %c0_30] : memref<3x256x128xbf16, #tpu.memory_space<vmem>>, vector<1x256x128xbf16>
    %25 = vector.shape_cast %24 : vector<1x256x128xbf16> to vector<256x128xbf16>
    %26 = vector.shape_cast %23 : vector<4x8x256xbf16> to vector<32x256xbf16>
    %c0_31 = arith.constant 0 : index
    %c0_32 = arith.constant 0 : index
    %27 = vector.load %arg8[%c0_31, %c0_32] : memref<32x128xf32, #tpu.memory_space<vmem>>, vector<32x128xf32>
    %cst_33 = arith.constant dense<0.000000e+00> : vector<32x128xf32>
    %28 = tpu.matmul %26, %25, %cst_33 {dimension_numbers = #tpu.dot_dimension_numbers<[1], [0], [0], [1], [0, 0, 1, 1], [], []>} : vector<32x256xbf16>, vector<256x128xbf16>, vector<32x128xf32> -> vector<32x128xf32>
    %29 = arith.addf %27, %28 : vector<32x128xf32>
    %c0_34 = arith.constant 0 : index
    %c0_35 = arith.constant 0 : index
    %30 = vector.load %arg8[%c0_34, %c0_35] : memref<32x128xf32, #tpu.memory_space<vmem>>, vector<32x128xf32>
    tpu.vector_store %arg8[%c0_34, %c0_35], %29 {strides = array<i32>} : memref<32x128xf32, #tpu.memory_space<vmem>>, vector<32x128xf32>,
    %c0_36 = arith.constant 0 : index
    %c0_37 = arith.constant 0 : index
    %c10 = arith.constant 10 : index
    %c0_38 = arith.constant 0 : index
    %31 = vector.load %arg2[%c0_36, %c0_37, %c10, %c0_38] : memref<1x4x18x256xbf16, #tpu.memory_space<vmem>>, vector<1x4x8x128xbf16>
    %32 = vector.shape_cast %31 : vector<1x4x8x128xbf16> to vector<4x8x128xbf16>
    %c1_39 = arith.constant 1 : index
    %c0_40 = arith.constant 0 : index
    %c0_41 = arith.constant 0 : index
    %33 = vector.load %arg5[%c1_39, %c0_40, %c0_41] : memref<3x128x128xbf16, #tpu.memory_space<vmem>>, vector<1x128x128xbf16>
    %34 = vector.shape_cast %33 : vector<1x128x128xbf16> to vector<128x128xbf16>
    %35 = vector.shape_cast %32 : vector<4x8x128xbf16> to vector<32x128xbf16>
    %c0_42 = arith.constant 0 : index
    %c0_43 = arith.constant 0 : index
    %36 = vector.load %arg8[%c0_42, %c0_43] : memref<32x128xf32, #tpu.memory_space<vmem>>, vector<32x128xf32>
    %cst_44 = arith.constant dense<0.000000e+00> : vector<32x128xf32>
    %37 = tpu.matmul %35, %34, %cst_44 {dimension_numbers = #tpu.dot_dimension_numbers<[1], [0], [0], [1], [0, 0, 1, 1], [], []>} : vector<32x128xbf16>, vector<128x128xbf16>, vector<32x128xf32> -> vector<32x128xf32>
    %38 = arith.addf %36, %37 : vector<32x128xf32>
    %c0_45 = arith.constant 0 : index
    %c0_46 = arith.constant 0 : index
    %39 = vector.load %arg8[%c0_45, %c0_46] : memref<32x128xf32, #tpu.memory_space<vmem>>, vector<32x128xf32>
    tpu.vector_store %arg8[%c0_45, %c0_46], %38 {strides = array<i32>} : memref<32x128xf32, #tpu.memory_space<vmem>>, vector<32x128xf32>,
    %c0_47 = arith.constant 0 : index
    %c1_48 = arith.constant 1 : index
    %c0_49 = arith.constant 0 : index
    %c0_50 = arith.constant 0 : index
    %40 = vector.load %arg2[%c0_47, %c1_48, %c0_49, %c0_50] : memref<1x4x18x256xbf16, #tpu.memory_space<vmem>>, vector<1x3x8x256xbf16>
    %41 = vector.shape_cast %40 : vector<1x3x8x256xbf16> to vector<3x8x256xbf16>
    %c2 = arith.constant 2 : index
    %c0_51 = arith.constant 0 : index
    %c0_52 = arith.constant 0 : index
    %42 = vector.load %arg4[%c2, %c0_51, %c0_52] : memref<3x256x128xbf16, #tpu.memory_space<vmem>>, vector<1x256x128xbf16>
    %43 = vector.shape_cast %42 : vector<1x256x128xbf16> to vector<256x128xbf16>
    %44 = vector.shape_cast %41 : vector<3x8x256xbf16> to vector<24x256xbf16>
    %c0_53 = arith.constant 0 : index
    %c0_54 = arith.constant 0 : index
    %45 = vector.load %arg8[%c0_53, %c0_54] : memref<32x128xf32, #tpu.memory_space<vmem>>, vector<24x128xf32>
    %cst_55 = arith.constant dense<0.000000e+00> : vector<24x128xf32>
    %46 = tpu.matmul %44, %43, %cst_55 {dimension_numbers = #tpu.dot_dimension_numbers<[1], [0], [0], [1], [0, 0, 1, 1], [], []>} : vector<24x256xbf16>, vector<256x128xbf16>, vector<24x128xf32> -> vector<24x128xf32>
    %47 = arith.addf %45, %46 : vector<24x128xf32>
    %c0_56 = arith.constant 0 : index
    %c0_57 = arith.constant 0 : index
    %48 = vector.load %arg8[%c0_56, %c0_57] : memref<32x128xf32, #tpu.memory_space<vmem>>, vector<24x128xf32>
    tpu.vector_store %arg8[%c0_56, %c0_57], %47 {strides = array<i32>} : memref<32x128xf32, #tpu.memory_space<vmem>>, vector<24x128xf32>,
    %c0_58 = arith.constant 0 : index
    %c1_59 = arith.constant 1 : index
    %c1_60 = arith.constant 1 : index
    %c0_61 = arith.constant 0 : index
    %49 = vector.load %arg2[%c0_58, %c1_59, %c1_60, %c0_61] : memref<1x4x18x256xbf16, #tpu.memory_space<vmem>>, vector<1x3x8x128xbf16>
    %50 = vector.shape_cast %49 : vector<1x3x8x128xbf16> to vector<3x8x128xbf16>
    %c2_62 = arith.constant 2 : index
    %c0_63 = arith.constant 0 : index
    %c0_64 = arith.constant 0 : index
    %51 = vector.load %arg5[%c2_62, %c0_63, %c0_64] : memref<3x128x128xbf16, #tpu.memory_space<vmem>>, vector<1x128x128xbf16>
    %52 = vector.shape_cast %51 : vector<1x128x128xbf16> to vector<128x128xbf16>
    %53 = vector.shape_cast %50 : vector<3x8x128xbf16> to vector<24x128xbf16>
    %c0_65 = arith.constant 0 : index
    %c0_66 = arith.constant 0 : index
    %54 = vector.load %arg8[%c0_65, %c0_66] : memref<32x128xf32, #tpu.memory_space<vmem>>, vector<24x128xf32>
    %cst_67 = arith.constant dense<0.000000e+00> : vector<24x128xf32>
    %55 = tpu.matmul %53, %52, %cst_67 {dimension_numbers = #tpu.dot_dimension_numbers<[1], [0], [0], [1], [0, 0, 1, 1], [], []>} : vector<24x128xbf16>, vector<128x128xbf16>, vector<24x128xf32> -> vector<24x128xf32>
    %56 = arith.addf %54, %55 : vector<24x128xf32>
    %c0_68 = arith.constant 0 : index
    %c0_69 = arith.constant 0 : index
    %57 = vector.load %arg8[%c0_68, %c0_69] : memref<32x128xf32, #tpu.memory_space<vmem>>, vector<24x128xf32>
    tpu.vector_store %arg8[%c0_68, %c0_69], %56 {strides = array<i32>} : memref<32x128xf32, #tpu.memory_space<vmem>>, vector<24x128xf32>,
    %c0_70 = arith.constant 0 : index
    %c0_71 = arith.constant 0 : index
    %c0_72 = arith.constant 0 : index
    %c0_73 = arith.constant 0 : index
    %58 = vector.load %arg3[%c0_70, %c0_71, %c0_72, %c0_73] : memref<1x1x18x256xbf16, #tpu.memory_space<vmem>>, vector<1x1x8x256xbf16>
    %59 = vector.shape_cast %58 : vector<1x1x8x256xbf16> to vector<1x8x256xbf16>
    %c2_74 = arith.constant 2 : index
    %c0_75 = arith.constant 0 : index
    %c0_76 = arith.constant 0 : index
    %60 = vector.load %arg4[%c2_74, %c0_75, %c0_76] : memref<3x256x128xbf16, #tpu.memory_space<vmem>>, vector<1x256x128xbf16>
    %61 = vector.shape_cast %60 : vector<1x256x128xbf16> to vector<256x128xbf16>
    %62 = vector.shape_cast %59 : vector<1x8x256xbf16> to vector<8x256xbf16>
    %c24 = arith.constant 24 : index
    %c0_77 = arith.constant 0 : index
    %63 = vector.load %arg8[%c24, %c0_77] : memref<32x128xf32, #tpu.memory_space<vmem>>, vector<8x128xf32>
    %cst_78 = arith.constant dense<0.000000e+00> : vector<8x128xf32>
    %64 = tpu.matmul %62, %61, %cst_78 {dimension_numbers = #tpu.dot_dimension_numbers<[1], [0], [0], [1], [0, 0, 1, 1], [], []>} : vector<8x256xbf16>, vector<256x128xbf16>, vector<8x128xf32> -> vector<8x128xf32>
    %65 = arith.addf %63, %64 : vector<8x128xf32>
    %c24_79 = arith.constant 24 : index
    %c0_80 = arith.constant 0 : index
    %66 = vector.load %arg8[%c24_79, %c0_80] : memref<32x128xf32, #tpu.memory_space<vmem>>, vector<8x128xf32>
    tpu.vector_store %arg8[%c24_79, %c0_80], %65 {strides = array<i32>} : memref<32x128xf32, #tpu.memory_space<vmem>>, vector<8x128xf32>,
    %c0_81 = arith.constant 0 : index
    %c0_82 = arith.constant 0 : index
    %c1_83 = arith.constant 1 : index
    %c0_84 = arith.constant 0 : index
    %67 = vector.load %arg3[%c0_81, %c0_82, %c1_83, %c0_84] : memref<1x1x18x256xbf16, #tpu.memory_space<vmem>>, vector<1x1x8x128xbf16>
    %68 = vector.shape_cast %67 : vector<1x1x8x128xbf16> to vector<1x8x128xbf16>
    %c2_85 = arith.constant 2 : index
    %c0_86 = arith.constant 0 : index
    %c0_87 = arith.constant 0 : index
    %69 = vector.load %arg5[%c2_85, %c0_86, %c0_87] : memref<3x128x128xbf16, #tpu.memory_space<vmem>>, vector<1x128x128xbf16>
    %70 = vector.shape_cast %69 : vector<1x128x128xbf16> to vector<128x128xbf16>
    %71 = vector.shape_cast %68 : vector<1x8x128xbf16> to vector<8x128xbf16>
    %c24_88 = arith.constant 24 : index
    %c0_89 = arith.constant 0 : index
    %72 = vector.load %arg8[%c24_88, %c0_89] : memref<32x128xf32, #tpu.memory_space<vmem>>, vector<8x128xf32>
    %cst_90 = arith.constant dense<0.000000e+00> : vector<8x128xf32>
    %73 = tpu.matmul %71, %70, %cst_90 {dimension_numbers = #tpu.dot_dimension_numbers<[1], [0], [0], [1], [0, 0, 1, 1], [], []>} : vector<8x128xbf16>, vector<128x128xbf16>, vector<8x128xf32> -> vector<8x128xf32>
    %74 = arith.addf %72, %73 : vector<8x128xf32>
    %c24_91 = arith.constant 24 : index
    %c0_92 = arith.constant 0 : index
    %75 = vector.load %arg8[%c24_91, %c0_92] : memref<32x128xf32, #tpu.memory_space<vmem>>, vector<8x128xf32>
    tpu.vector_store %arg8[%c24_91, %c0_92], %74 {strides = array<i32>} : memref<32x128xf32, #tpu.memory_space<vmem>>, vector<8x128xf32>,
    %c0_93 = arith.constant 0 : index
    %c0_94 = arith.constant 0 : index
    %76 = vector.load %arg8[%c0_93, %c0_94] : memref<32x128xf32, #tpu.memory_space<vmem>>, vector<32x128xf32>
    %77 = vector.shape_cast %76 : vector<32x128xf32> to vector<1x32x128xf32>
    %c0_95 = arith.constant 0 : index
    %c0_96 = arith.constant 0 : index
    %c0_97 = arith.constant 0 : index
    %78 = vector.load %arg7[%c0_95, %c0_96, %c0_97] : memref<1x32x128xf32, #tpu.memory_space<vmem>>, vector<1x32x128xf32>
    tpu.vector_store %arg7[%c0_95, %c0_96, %c0_97], %77 {strides = array<i32>} : memref<1x32x128xf32, #tpu.memory_space<vmem>>, vector<1x32x128xf32>,
    return
  }
  func.func @transform_0(%arg0: i32, %arg1: i32) -> (i32, i32, i32, i32) {
    %c0_i32 = arith.constant 0 : i32
    %c0_i32_0 = arith.constant 0 : i32
    %c0_i32_1 = arith.constant 0 : i32
    return %arg0, %arg1, %c0_i32, %c0_i32_0 : i32, i32, i32, i32
  }
  func.func @transform_1(%arg0: i32, %arg1: i32) -> (i32, i32, i32, i32) {
    %c1_i32 = arith.constant 1 : i32
    %0 = arith.addi %arg1, %c1_i32 : i32
    %c4_i32 = arith.constant 4 : i32
    %1 = arith.muli %0, %c4_i32 : i32
    %c0_i32 = arith.constant 0 : i32
    %c0_i32_0 = arith.constant 0 : i32
    %c0_i32_1 = arith.constant 0 : i32
    return %arg0, %1, %c0_i32, %c0_i32_0 : i32, i32, i32, i32
  }
  func.func @transform_2(%arg0: i32, %arg1: i32) -> (i32, i32, i32) {
    %c0_i32 = arith.constant 0 : i32
    %c0_i32_0 = arith.constant 0 : i32
    %c0_i32_1 = arith.constant 0 : i32
    %c0_i32_2 = arith.constant 0 : i32
    return %c0_i32, %c0_i32_0, %c0_i32_1 : i32, i32, i32
  }
  func.func @transform_3(%arg0: i32, %arg1: i32) -> (i32, i32, i32) {
    %c0_i32 = arith.constant 0 : i32
    %c0_i32_0 = arith.constant 0 : i32
    %c0_i32_1 = arith.constant 0 : i32
    %c0_i32_2 = arith.constant 0 : i32
    return %c0_i32, %c0_i32_0, %c0_i32_1 : i32, i32, i32
  }
  func.func @transform_4(%arg0: i32, %arg1: i32) -> (i32, i32) {
    %c0_i32 = arith.constant 0 : i32
    %c0_i32_0 = arith.constant 0 : i32
    %c0_i32_1 = arith.constant 0 : i32
    return %c0_i32, %c0_i32_0 : i32, i32
  }
  func.func @transform_5(%arg0: i32, %arg1: i32) -> (i32, i32, i32) {
    %c0_i32 = arith.constant 0 : i32
    %c0_i32_0 = arith.constant 0 : i32
    return %arg0, %arg1, %c0_i32 : i32, i32, i32
  }
}

</mosaic_0001>

<llo_original>
// kernel: tpu_custom_call.1
$region0: #{tpu_custom_call.1}
  #allocation0 [shape = 'u32[]', space=smem, size = 0x4, offset = 0x4, fixed_abs, tag = 'smem constant byte address 0x4 - core index']
  #allocation1 [shape = 'u32[144,128]{1,0:T(1,128)}', space=vmem, size = 0x12000, scoped, tag = 'internal scratch']
  #allocation2 [shape = 'f32[32,128]{1,0:T(8,128)}', space=vmem, size = 0x4000, scoped, tag = 'scratch operand']
  %s0 = inlined_call_operand.vmem [shape: bf16[2,9,18,256], index: 0, kind: input, shape index: {}]
  %s1 = inlined_call_operand.vmem [shape: bf16[2,9,18,256], index: 1, kind: input, shape index: {}]
  %s2 = inlined_call_operand.vmem [shape: bf16[3,256,128], index: 2, kind: input, shape index: {}]
  %s3 = inlined_call_operand.vmem [shape: bf16[3,128,128], index: 3, kind: input, shape index: {}]
  %s4 = inlined_call_operand.vmem [shape: f32[1,128], index: 4, kind: input, shape index: {}]
  %s5 = inlined_call_operand.hbm [shape: f32[2,64,128], index: 5, kind: output, shape index: {}]
  %s6 = sld [smem:[#allocation0]]
  $region53: #{tpu_custom_call.1} parent=0
    _
  %s8 = ssub.s32 1, %s6
  %s9 = scalar_select 0, %s8, %s6
  $region1: #{tpu_custom_call.1} parent=0
    #allocation3 [shape = 'u8[32768]{0}', space=vmem, size = 0x8000, scoped, tag = 'output window, operand 0']
    #allocation4 [shape = 's32[2]{0}', space=sflag, size = 0x8, scoped, tag = 'scoped memory for tpu_custom_call.1']
    %10 = vsyncpa [#allocation4], 0
    %s11 = scalar_lea.sflag [#allocation4], 1
    %12 = vsyncpa %s11, 0
    loop: start=0, step=1, limit=6
    $region2: #{tpu_custom_call.1} parent=1 // loop_pre_header
      _
    $region3: #{tpu_custom_call.1} parent=1 // loop_header
      %s14 = sphi 0, %s18
      %p15 = scmp.ge.s32.totalorder %s14, 6
      %s21 = sphi 0, %s33
      %s22 = sphi 0, %s29
      %s23 = sphi 0, %s21
      %s24 = sphi 0, %s22
      %s25 = sphi 0, %s23
      %s26 = sphi 0, %s24
      %s38 = sphi 0, %s40
      %s41 = sphi 0, %s38
      %s42 = sphi 0, %s41
      %s58 = sphi 0, %s42
      %s70 = sphi 0, %s72
      %s73 = sphi 0, %s70
      %s74 = sphi 0, %s73
      %s90 = sphi 0, %s74
      %s94 = sphi 0, %s94
      %s96 = sphi 0, %s94
      %s97 = sphi 0, %s96
      %s111 = sphi 0, %s97
      %s115 = sphi 0, %s115
      %s117 = sphi 0, %s115
      %s118 = sphi 0, %s117
      %s132 = sphi 0, %s118
      %s136 = sphi 0, %s136
      %s138 = sphi 0, %s136
      %s139 = sphi 0, %s138
      %s153 = sphi 0, %s139
      %s161 = sphi 0, %s163
      %s164 = sphi 0, %s161
      %s165 = sphi 0, %s164
      %s181 = sphi 0, %s165
    $region4: #{tpu_custom_call.1} parent=1 // loop_header_branch
      %17 = sbr.rel (%p15) target = $region8
    $region5: #{tpu_custom_call.1} parent=1 // loop_body
      %s19 = ssub.s32 %s14, 1
      %s20 = ssub.s32 %s14, 2
      %s27 = sadd.s32 1, %s22
      %p28 = scmp.ge.s32.totalorder %s27, 2
      %s29 = scalar_select %p28, 0, %s27
      %s30 = sadd.s32 1, %s21
      %s31 = scalar_select %p28, %s30, %s21
      %p32 = scmp.ge.s32.totalorder %s31, 2
      %s33 = scalar_select %p32, 0, %s31
      %s34 = ssub.s32 %s21, %s33
      %s35 = ssub.s32 %s22, %s29
      %s36 = sor.u32 %s34, %s35
      %p37 = scmp.eq.s32.totalorder %s36, 0
      %s39 = sadd.s32 %s38, 1
      %s40 = scalar_select %p37, %s38, %s39
      %p43 = pneg %p37
      %p44 = scmp.eq.s32.totalorder %s14, 3
      %p45 = por %p43, %p44
      %p46 = scmp.ne.s32.totalorder %s38, %s41
      %p47 = scmp.eq.s32.totalorder %s14, 0
      %p48 = por %p46, %p47
      %p49 = scmp.ne.s32.totalorder %s38, %s41
      %p50 = scmp.eq.s32.totalorder %s19, 3
      %p51 = por %p49, %p50
      %p52 = scmp.ne.s32.totalorder %s41, %s42
      %p53 = scmp.eq.s32.totalorder %s19, 0
      %p54 = por %p52, %p53
      %p55 = scmp.ne.s32.totalorder %s41, %s42
      %p56 = scmp.eq.s32.totalorder %s20, 3
      %p57 = por %p55, %p56
      %p59 = scmp.ne.s32.totalorder %s42, %s58
      %p60 = scmp.eq.s32.totalorder %s20, 0
      %p61 = por %p59, %p60
      %s62 = sadd.s32 %s22, 1
      %s63 = smul.u32 %s62, 4
      %s64 = sadd.s32 %s29, 1
      %s65 = smul.u32 %s64, 4
      %s66 = ssub.s32 %s21, %s33
      %s67 = ssub.s32 %s63, %s65
      %s68 = sor.u32 %s66, %s67
      %p69 = scmp.eq.s32.totalorder %s68, 0
      %s71 = sadd.s32 %s70, 1
      %s72 = scalar_select %p69, %s70, %s71
      %p75 = pneg %p69
      %p76 = scmp.eq.s32.totalorder %s14, 3
      %p77 = por %p75, %p76
      %p78 = scmp.ne.s32.totalorder %s70, %s73
      %p79 = scmp.eq.s32.totalorder %s14, 0
      %p80 = por %p78, %p79
      %p81 = scmp.ne.s32.totalorder %s70, %s73
      %p82 = scmp.eq.s32.totalorder %s19, 3
      %p83 = por %p81, %p82
      %p84 = scmp.ne.s32.totalorder %s73, %s74
      %p85 = scmp.eq.s32.totalorder %s19, 0
      %p86 = por %p84, %p85
      %p87 = scmp.ne.s32.totalorder %s73, %s74
      %p88 = scmp.eq.s32.totalorder %s20, 3
      %p89 = por %p87, %p88
      %p91 = scmp.ne.s32.totalorder %s74, %s90
      %p92 = scmp.eq.s32.totalorder %s20, 0
      %p93 = por %p91, %p92
      %s95 = sadd.s32 %s94, 1
      %p98 = scmp.eq.s32.totalorder %s14, 3
      %p99 = scmp.ne.s32.totalorder %s94, %s96
      %p100 = scmp.eq.s32.totalorder %s14, 0
      %p101 = por %p99, %p100
      %p102 = scmp.ne.s32.totalorder %s94, %s96
      %p103 = scmp.eq.s32.totalorder %s19, 3
      %p104 = por %p102, %p103
      %p105 = scmp.ne.s32.totalorder %s96, %s97
      %p106 = scmp.eq.s32.totalorder %s19, 0
      %p107 = por %p105, %p106
      %p108 = scmp.ne.s32.totalorder %s96, %s97
      %p109 = scmp.eq.s32.totalorder %s20, 3
      %p110 = por %p108, %p109
      %p112 = scmp.ne.s32.totalorder %s97, %s111
      %p113 = scmp.eq.s32.totalorder %s20, 0
      %p114 = por %p112, %p113
      %s116 = sadd.s32 %s115, 1
      %p119 = scmp.eq.s32.totalorder %s14, 3
      %p120 = scmp.ne.s32.totalorder %s115, %s117
      %p121 = scmp.eq.s32.totalorder %s14, 0
      %p122 = por %p120, %p121
      %p123 = scmp.ne.s32.totalorder %s115, %s117
      %p124 = scmp.eq.s32.totalorder %s19, 3
      %p125 = por %p123, %p124
      %p126 = scmp.ne.s32.totalorder %s117, %s118
      %p127 = scmp.eq.s32.totalorder %s19, 0
      %p128 = por %p126, %p127
      %p129 = scmp.ne.s32.totalorder %s117, %s118
      %p130 = scmp.eq.s32.totalorder %s20, 3
      %p131 = por %p129, %p130
      %p133 = scmp.ne.s32.totalorder %s118, %s132
      %p134 = scmp.eq.s32.totalorder %s20, 0
      %p135 = por %p133, %p134
      %s137 = sadd.s32 %s136, 1
      %p140 = scmp.eq.s32.totalorder %s14, 3
      %p141 = scmp.ne.s32.totalorder %s136, %s138
      %p142 = scmp.eq.s32.totalorder %s14, 0
      %p143 = por %p141, %p142
      %p144 = scmp.ne.s32.totalorder %s136, %s138
      %p145 = scmp.eq.s32.totalorder %s19, 3
      %p146 = por %p144, %p145
      %p147 = scmp.ne.s32.totalorder %s138, %s139
      %p148 = scmp.eq.s32.totalorder %s19, 0
      %p149 = por %p147, %p148
      %p150 = scmp.ne.s32.totalorder %s138, %s139
      %p151 = scmp.eq.s32.totalorder %s20, 3
      %p152 = por %p150, %p151
      %p154 = scmp.ne.s32.totalorder %s139, %s153
      %p155 = scmp.eq.s32.totalorder %s20, 0
      %p156 = por %p154, %p155
      %s157 = ssub.s32 %s21, %s33
      %s158 = ssub.s32 %s22, %s29
      %s159 = sor.u32 %s157, %s158
      %p160 = scmp.eq.s32.totalorder %s159, 0
      %s162 = sadd.s32 %s161, 1
      %s163 = scalar_select %p160, %s161, %s162
      %p166 = pneg %p160
      %p167 = scmp.eq.s32.totalorder %s14, 3
      %p168 = por %p166, %p167
      %p169 = scmp.ne.s32.totalorder %s161, %s164
      %p170 = scmp.eq.s32.totalorder %s14, 0
      %p171 = por %p169, %p170
      %p172 = scmp.ne.s32.totalorder %s161, %s164
      %p173 = scmp.eq.s32.totalorder %s19, 3
      %p174 = por %p172, %p173
      %p175 = scmp.ne.s32.totalorder %s164, %s165
      %p176 = scmp.eq.s32.totalorder %s19, 0
      %p177 = por %p175, %p176
      %p178 = scmp.ne.s32.totalorder %s164, %s165
      %p179 = scmp.eq.s32.totalorder %s20, 3
      %p180 = por %p178, %p179
      %p182 = scmp.ne.s32.totalorder %s165, %s181
      %p183 = scmp.eq.s32.totalorder %s20, 0
      %p184 = por %p182, %p183
      %p185 = scmp.le.s32.totalorder 1, %s14
      %p186 = scmp.lt.s32.totalorder %s14, 5
      %p187 = pnand %p185, %p186
      %p188 = pneg %p187
      // Predicated region
      $region9: #{tpu_custom_call.1} parent=5 // pred_check
        _
      $region10: #{tpu_custom_call.1} parent=5 // pred_check_branch
        %190 = sbr.rel (%p187) target = $region12
      $region11: #{tpu_custom_call.1} parent=5 // pred_region
        %s191 = ssub.s32 %s14, 1
        // Predicated region
        $region13: #{tpu_custom_call.1} parent=11 // pred_check
          %p192 = pneg %p107
        $region14: #{tpu_custom_call.1} parent=11 // pred_check_branch
          %194 = sbr.rel (%p192) target = $region16
        $region15: #{tpu_custom_call.1} parent=11 // pred_region
          _
        $region16: #{tpu_custom_call.1} parent=11 // pred_fallthru
          _
        // Predicated region
        $region17: #{tpu_custom_call.1} parent=11 // pred_check
          %p195 = pneg %p128
        $region18: #{tpu_custom_call.1} parent=11 // pred_check_branch
          %197 = sbr.rel (%p195) target = $region20
        $region19: #{tpu_custom_call.1} parent=11 // pred_region
          _
        $region20: #{tpu_custom_call.1} parent=11 // pred_fallthru
          _
        // Predicated region
        $region21: #{tpu_custom_call.1} parent=11 // pred_check
          %p198 = pneg %p149
        $region22: #{tpu_custom_call.1} parent=11 // pred_check_branch
          %200 = sbr.rel (%p198) target = $region24
        $region23: #{tpu_custom_call.1} parent=11 // pred_region
          _
        $region24: #{tpu_custom_call.1} parent=11 // pred_fallthru
          _
      $region12: #{tpu_custom_call.1} parent=5 // pred_fallthru
        _
      %p201 = scmp.lt.s32.totalorder %s14, 4
      // Predicated region
      $region25: #{tpu_custom_call.1} parent=5 // pred_check
        %p202 = pneg %p201
      $region26: #{tpu_custom_call.1} parent=5 // pred_check_branch
        %204 = sbr.rel (%p202) target = $region28
      $region27: #{tpu_custom_call.1} parent=5 // pred_region
        // Predicated region
        $region29: #{tpu_custom_call.1} parent=27 // pred_check
          %p205 = pneg %p48
        $region30: #{tpu_custom_call.1} parent=27 // pred_check_branch
          %207 = sbr.rel (%p205) target = $region32
        $region31: #{tpu_custom_call.1} parent=27 // pred_region
          %s208 = smul.u32 4, %s22
          %s209 = ssub.s32 9, %s208
          %p210 = scmp.lt.s32.totalorder %s209, 4
          %s211 = scalar_select %p210, %s209, 4
          %s212 = smul.u32 64, %s211
          %s213 = smul.u32 %s212, 3
          %s214 = smul.u32 %s213, 2
          %p215 = scmp.lt.s32.totalorder %s21, 1
          %s216 = scalar_select %p215, %s21, 1
          %p217 = scmp.lt.s32.totalorder %s208, 8
          %s218 = scalar_select %p217, %s208, 8
          %s219 = smul.addr %s218, 6
          %s220 = smul.addr %s216, 54
          %s221 = sadd.s32 %s219, %s220
          %s222 = smul.addr %s221, 4
          %s223 = scalar_lea.vmem %s0, %s222
          %s224 = smul.u32 4, %s22
          %s225 = ssub.s32 9, %s224
          %p226 = scmp.lt.s32.totalorder %s225, 4
          %s227 = scalar_select %p226, %s225, 4
          %s228 = smul.u32 64, %s227
          %s229 = smul.u32 %s228, 3
          %s230 = smul.u32 %s229, 2
        $region32: #{tpu_custom_call.1} parent=27 // pred_fallthru
          _
        // Predicated region
        $region33: #{tpu_custom_call.1} parent=27 // pred_check
          %p231 = pneg %p80
        $region34: #{tpu_custom_call.1} parent=27 // pred_check_branch
          %233 = sbr.rel (%p231) target = $region36
        $region35: #{tpu_custom_call.1} parent=27 // pred_region
          %s234 = sadd.s32 %s22, 1
          %s235 = smul.u32 %s234, 4
          %p236 = scmp.lt.s32.totalorder %s21, 1
          %s237 = scalar_select %p236, %s21, 1
          %p238 = scmp.lt.s32.totalorder %s235, 8
          %s239 = scalar_select %p238, %s235, 8
          %s240 = smul.addr %s239, 6
          %s241 = smul.addr %s237, 54
          %s242 = sadd.s32 %s240, %s241
          %s243 = smul.addr %s242, 4
          %s244 = scalar_lea.vmem %s1, %s243
          %s245 = sadd.s32 %s22, 1
          %s246 = smul.u32 %s245, 4
        $region36: #{tpu_custom_call.1} parent=27 // pred_fallthru
          _
      $region28: #{tpu_custom_call.1} parent=5 // pred_fallthru
        _
      %p247 = scmp.le.s32.totalorder 1, %s14
      %p248 = scmp.lt.s32.totalorder %s14, 5
      %p249 = pnand %p247, %p248
      %p250 = pneg %p249
      // Predicated region
      $region37: #{tpu_custom_call.1} parent=5 // pred_check
        _
      $region38: #{tpu_custom_call.1} parent=5 // pred_check_branch
        %252 = sbr.rel (%p249) target = $region40
      $region39: #{tpu_custom_call.1} parent=5 // pred_region
        %s253 = ssub.s32 %s14, 1
        %s254 = smul.u32 4, %s24
        %s255 = ssub.s32 9, %s254
        %p256 = scmp.lt.s32.totalorder %s255, 4
        %s257 = scalar_select %p256, %s255, 4
        %s258 = smul.u32 64, %s257
        %s259 = smul.u32 %s258, 3
        %s260 = smul.u32 %s259, 2
        %p261 = scmp.lt.s32.totalorder %s23, 1
        %s262 = scalar_select %p261, %s23, 1
        %p263 = scmp.lt.s32.totalorder %s254, 8
        %s264 = scalar_select %p263, %s254, 8
        %s265 = smul.addr %s264, 6
        %s266 = smul.addr %s262, 54
        %s267 = sadd.s32 %s265, %s266
        %s268 = smul.addr %s267, 4
        %s269 = scalar_lea.vmem %s0, %s268
        %p270 = pneg %p54
        %p271 = pneg %p51
        %s272 = sadd.s32 %s24, 1
        %s273 = smul.u32 %s272, 4
        %p274 = scmp.lt.s32.totalorder %s23, 1
        %s275 = scalar_select %p274, %s23, 1
        %p276 = scmp.lt.s32.totalorder %s273, 8
        %s277 = scalar_select %p276, %s273, 8
        %s278 = smul.addr %s277, 6
        %s279 = smul.addr %s275, 54
        %s280 = sadd.s32 %s278, %s279
        %s281 = smul.addr %s280, 4
        %s282 = scalar_lea.vmem %s1, %s281
        %p283 = pneg %p86
        %p284 = pneg %p83
        %p285 = pneg %p107
        %p286 = pneg %p104
        %p287 = pneg %p128
        %p288 = pneg %p125
        %p289 = pneg %p149
        %p290 = pneg %p146
        %p291 = pneg %p177
        %p292 = pneg %p174
        %s293 = sand.u32 %s164, 1
        %s294 = scalar_lea.sflag [#allocation4], %s293
        %s295 = sand.u32 %s164, 1
        %s296 = smul.addr %s295, 32
        %s297 = scalar_lea.vmem [#allocation3], %s296
        %s298 = smul.u32 4, %s24
        %s299 = ssub.s32 9, %s298
        %p300 = scmp.lt.s32.totalorder %s299, 4
        %s301 = scalar_select %p300, %s299, 4
        %s302 = smul.u32 64, %s301
        %s303 = smul.u32 %s302, 3
        %s304 = smul.u32 %s303, 2
        %p305 = scmp.lt.s32.totalorder %s23, 1
        %s306 = scalar_select %p305, %s23, 1
        %p307 = scmp.lt.s32.totalorder %s298, 8
        %s308 = scalar_select %p307, %s298, 8
        %s309 = smul.addr %s308, 6
        %s310 = smul.addr %s306, 54
        %s311 = sadd.s32 %s309, %s310
        %s312 = smul.addr %s311, 4
        %s313 = scalar_lea.vmem %s0, %s312
        %s314 = smul.u32 4, %s24
        %s315 = ssub.s32 9, %s314
        %p316 = scmp.lt.s32.totalorder %s315, 4
        %s317 = scalar_select %p316, %s315, 4
        %s318 = smul.u32 64, %s317
        %s319 = smul.u32 %s318, 3
        %s320 = smul.u32 %s319, 2
        %s321 = sadd.s32 %s24, 1
        %s322 = smul.u32 %s321, 4
        %p323 = scmp.lt.s32.totalorder %s23, 1
        %s324 = scalar_select %p323, %s23, 1
        %p325 = scmp.lt.s32.totalorder %s322, 8
        %s326 = scalar_select %p325, %s322, 8
        %s327 = smul.addr %s326, 6
        %s328 = smul.addr %s324, 54
        %s329 = sadd.s32 %s327, %s328
        %s330 = smul.addr %s329, 4
        %s331 = scalar_lea.vmem %s1, %s330
        %s332 = sadd.s32 %s24, 1
        %s333 = smul.u32 %s332, 4
        %s334 = smul.u32 4, %s24
        %v336 = vld [vmem:[%s4] sm:$0x1]
        %v338 = vlaneseq
        %v339 = vshrl.u32 %v338, 7
        %v340 = vsub.s32 0, %v339
        %v341 = vrot.slane %v336, %v340
        %343 = vst [vmem:[#allocation2] sm:$0xff] %v341
        %344 = vst [vmem:[#allocation2 + $0x8] sm:$0xff] %v341
        %345 = vst [vmem:[#allocation2 + $0x10] sm:$0xff] %v341
        %346 = vst [vmem:[#allocation2 + $0x18] sm:$0xff] %v341
        %v347 = vld [vmem:[%s313] sm:$0xff]
        %v348 = vld [vmem:[%s313 + $0x18] sm:$0xff]
        %v349 = vld [vmem:[%s313 + $0x30] sm:$0xff]
        %v350 = vld [vmem:[%s313 + $0x48] sm:$0xff]
        %v351 = vld [vmem:[%s2] sm:$0xf]
        %v352 = vld [vmem:[%s2 + $0x4] sm:$0xf]
        %v353 = vld [vmem:[%s2 + $0x8] sm:$0xf]
        %v354 = vld [vmem:[%s2 + $0xc] sm:$0xf]
        %v355 = vld [vmem:[%s2 + $0x10] sm:$0xf]
        %v356 = vld [vmem:[%s2 + $0x14] sm:$0xf]
        %v357 = vld [vmem:[%s2 + $0x18] sm:$0xf]
        %v358 = vld [vmem:[%s2 + $0x1c] sm:$0xf]
        %v359 = vld [vmem:[%s2 + $0x20] sm:$0xf]
        %v360 = vld [vmem:[%s2 + $0x24] sm:$0xf]
        %v361 = vld [vmem:[%s2 + $0x28] sm:$0xf]
        %v362 = vld [vmem:[%s2 + $0x2c] sm:$0xf]
        %v363 = vld [vmem:[%s2 + $0x30] sm:$0xf]
        %v364 = vld [vmem:[%s2 + $0x34] sm:$0xf]
        %v365 = vld [vmem:[%s2 + $0x38] sm:$0xf]
        %v366 = vld [vmem:[%s2 + $0x3c] sm:$0xf]
        %v367 = vld [vmem:[%s2 + $0x40] sm:$0xf]
        %v368 = vld [vmem:[%s2 + $0x44] sm:$0xf]
        %v369 = vld [vmem:[%s2 + $0x48] sm:$0xf]
        %v370 = vld [vmem:[%s2 + $0x4c] sm:$0xf]
        %v371 = vld [vmem:[%s2 + $0x50] sm:$0xf]
        %v372 = vld [vmem:[%s2 + $0x54] sm:$0xf]
        %v373 = vld [vmem:[%s2 + $0x58] sm:$0xf]
        %v374 = vld [vmem:[%s2 + $0x5c] sm:$0xf]
        %v375 = vld [vmem:[%s2 + $0x60] sm:$0xf]
        %v376 = vld [vmem:[%s2 + $0x64] sm:$0xf]
        %v377 = vld [vmem:[%s2 + $0x68] sm:$0xf]
        %v378 = vld [vmem:[%s2 + $0x6c] sm:$0xf]
        %v379 = vld [vmem:[%s2 + $0x70] sm:$0xf]
        %v380 = vld [vmem:[%s2 + $0x74] sm:$0xf]
        %v381 = vld [vmem:[%s2 + $0x78] sm:$0xf]
        %v382 = vld [vmem:[%s2 + $0x7c] sm:$0xf]
        %v383 = vld [vmem:[#allocation2] sm:$0xff]
        %v384 = vld [vmem:[#allocation2 + $0x8] sm:$0xff]
        %v385 = vld [vmem:[#allocation2 + $0x10] sm:$0xff]
        %v386 = vld [vmem:[#allocation2 + $0x18] sm:$0xff]
        %v391 = vunpack.c.l.b16 %v347
        %v392 = vunpack.c.h.b16 %v347
        %v393 = vunpack.c.l.b16 %v348
        %v394 = vunpack.c.h.b16 %v348
        %v395 = vunpack.c.l.b16 %v349
        %v396 = vunpack.c.h.b16 %v349
        %v397 = vunpack.c.l.b16 %v350
        %v398 = vunpack.c.h.b16 %v350
        %v399 = vpack.c.b16 %v393, %v391
        %v400 = vpack.c.b16 %v394, %v392
        %v401 = vpack.c.b16 %v397, %v395
        %v402 = vpack.c.b16 %v398, %v396
        %v439 = vunpack.c.l.b16 %v351
        %v440 = vunpack.c.l.b16 %v352
        %v441 = vunpack.c.l.b16 %v353
        %v442 = vunpack.c.l.b16 %v354
        %v443 = vunpack.c.l.b16 %v355
        %v444 = vunpack.c.l.b16 %v356
        %v445 = vunpack.c.l.b16 %v357
        %v446 = vunpack.c.l.b16 %v358
        %v447 = vunpack.c.l.b16 %v359
        %v448 = vunpack.c.l.b16 %v360
        %v449 = vunpack.c.l.b16 %v361
        %v450 = vunpack.c.l.b16 %v362
        %v451 = vunpack.c.l.b16 %v363
        %v452 = vunpack.c.l.b16 %v364
        %v453 = vunpack.c.l.b16 %v365
        %v454 = vunpack.c.l.b16 %v366
        %v455 = vunpack.c.l.b16 %v367
        %v456 = vunpack.c.l.b16 %v368
        %v457 = vunpack.c.l.b16 %v369
        %v458 = vunpack.c.l.b16 %v370
        %v459 = vunpack.c.l.b16 %v371
        %v460 = vunpack.c.l.b16 %v372
        %v461 = vunpack.c.l.b16 %v373
        %v462 = vunpack.c.l.b16 %v374
        %v463 = vunpack.c.l.b16 %v375
        %v464 = vunpack.c.l.b16 %v376
        %v465 = vunpack.c.l.b16 %v377
        %v466 = vunpack.c.l.b16 %v378
        %v467 = vunpack.c.l.b16 %v379
        %v468 = vunpack.c.l.b16 %v380
        %v469 = vunpack.c.l.b16 %v381
        %v470 = vunpack.c.l.b16 %v382
        %v471 = vpack.c.b16 %v440, %v439
        %v472 = vpack.c.b16 %v442, %v441
        %v473 = vpack.c.b16 %v444, %v443
        %v474 = vpack.c.b16 %v446, %v445
        %v475 = vpack.c.b16 %v448, %v447
        %v476 = vpack.c.b16 %v450, %v449
        %v477 = vpack.c.b16 %v452, %v451
        %v478 = vpack.c.b16 %v454, %v453
        %v479 = vpack.c.b16 %v456, %v455
        %v480 = vpack.c.b16 %v458, %v457
        %v481 = vpack.c.b16 %v460, %v459
        %v482 = vpack.c.b16 %v462, %v461
        %v483 = vpack.c.b16 %v464, %v463
        %v484 = vpack.c.b16 %v466, %v465
        %v485 = vpack.c.b16 %v468, %v467
        %v486 = vpack.c.b16 %v470, %v469
        %503 = vmatprep.subr.bf16.mxu0 0
        %504 = vmatpush1.bf16.msra.mxu0 %v471
        %505 = vmatprep.subr.bf16.mxu0 0
        %506 = vmatpush1.bf16.msra.mxu0 %v472
        %507 = vmatprep.subr.bf16.mxu0 0
        %508 = vmatpush1.bf16.msra.mxu0 %v473
        %509 = vmatprep.subr.bf16.mxu0 0
        %510 = vmatpush1.bf16.msra.mxu0 %v474
        %511 = vmatprep.subr.bf16.mxu0 0
        %512 = vmatpush1.bf16.msra.mxu0 %v475
        %513 = vmatprep.subr.bf16.mxu0 0
        %514 = vmatpush1.bf16.msra.mxu0 %v476
        %515 = vmatprep.subr.bf16.mxu0 0
        %516 = vmatpush1.bf16.msra.mxu0 %v477
        %517 = vmatprep.subr.bf16.mxu0 0
        %518 = vmatpush1.bf16.msra.mxu0 %v478
        %519 = vmatprep.subr.bf16.mxu0 0
        %520 = vmatpush1.bf16.msra.mxu0 %v479
        %521 = vmatprep.subr.bf16.mxu0 0
        %522 = vmatpush1.bf16.msra.mxu0 %v480
        %523 = vmatprep.subr.bf16.mxu0 0
        %524 = vmatpush1.bf16.msra.mxu0 %v481
        %525 = vmatprep.subr.bf16.mxu0 0
        %526 = vmatpush1.bf16.msra.mxu0 %v482
        %527 = vmatprep.subr.bf16.mxu0 0
        %528 = vmatpush1.bf16.msra.mxu0 %v483
        %529 = vmatprep.subr.bf16.mxu0 0
        %530 = vmatpush1.bf16.msra.mxu0 %v484
        %531 = vmatprep.subr.bf16.mxu0 0
        %532 = vmatpush1.bf16.msra.mxu0 %v485
        %533 = vmatprep.subr.bf16.mxu0 0
        %534 = vmatpush1.bf16.msra.mxu0 %v486
        %535 = vmatprep.mubr.bf16.mxu0 %v400
        %536 = vmatmul.mubr.bf16.gmra.mrb[0].mxu0 %v399
        %v537 = vpop.f32.mrb[0].mxu0
        %v538 = vadd.f32 0.0, %v537
        %v539 = vpop.f32.mrb[0].mxu0
        %v540 = vpop.f32.mrb[0].mxu0
        %v541 = vadd.f32 0.0, %v540
        %v542 = vpop.f32.mrb[0].mxu0
        %543 = vmatprep.mubr.bf16.mxu0 %v402
        %544 = vmatmul.mubr.bf16.gmra.mrb[0].mxu0 %v401
        %v545 = vpop.f32.mrb[0].mxu0
        %v546 = vadd.f32 0.0, %v545
        %v547 = vpop.f32.mrb[0].mxu0
        %v548 = vpop.f32.mrb[0].mxu0
        %v549 = vadd.f32 0.0, %v548
        %v550 = vpop.f32.mrb[0].mxu0
        %551 = vdwg.mxu0
        %v552 = vadd.f32 %v383, %v538
        %v553 = vadd.f32 %v384, %v541
        %v554 = vadd.f32 %v385, %v546
        %v555 = vadd.f32 %v386, %v549
        %556 = vst [vmem:[#allocation2] sm:$0xff] %v552
        %557 = vst [vmem:[#allocation2 + $0x8] sm:$0xff] %v553
        %558 = vst [vmem:[#allocation2 + $0x10] sm:$0xff] %v554
        %559 = vst [vmem:[#allocation2 + $0x18] sm:$0xff] %v555
        %v560 = vld [vmem:[%s313] sm:$0xf]
        %v561 = vld [vmem:[%s313 + $0x8] sm:$0x1]
        %v562 = vld [vmem:[%s313 + $0x18] sm:$0xf]
        %v563 = vld [vmem:[%s313 + $0x20] sm:$0x1]
        %v564 = vld [vmem:[%s313 + $0x30] sm:$0xf]
        %v565 = vld [vmem:[%s313 + $0x38] sm:$0x1]
        %v566 = vld [vmem:[%s313 + $0x48] sm:$0xf]
        %v567 = vld [vmem:[%s313 + $0x50] sm:$0x1]
        %v568 = vld [vmem:[%s3] sm:$0xf]
        %v569 = vld [vmem:[%s3 + $0x4] sm:$0xf]
        %v570 = vld [vmem:[%s3 + $0x8] sm:$0xf]
        %v571 = vld [vmem:[%s3 + $0xc] sm:$0xf]
        %v572 = vld [vmem:[%s3 + $0x10] sm:$0xf]
        %v573 = vld [vmem:[%s3 + $0x14] sm:$0xf]
        %v574 = vld [vmem:[%s3 + $0x18] sm:$0xf]
        %v575 = vld [vmem:[%s3 + $0x1c] sm:$0xf]
        %v576 = vld [vmem:[%s3 + $0x20] sm:$0xf]
        %v577 = vld [vmem:[%s3 + $0x24] sm:$0xf]
        %v578 = vld [vmem:[%s3 + $0x28] sm:$0xf]
        %v579 = vld [vmem:[%s3 + $0x2c] sm:$0xf]
        %v580 = vld [vmem:[%s3 + $0x30] sm:$0xf]
        %v581 = vld [vmem:[%s3 + $0x34] sm:$0xf]
        %v582 = vld [vmem:[%s3 + $0x38] sm:$0xf]
        %v583 = vld [vmem:[%s3 + $0x3c] sm:$0xf]
        %vm584 = vsmask.f32 3328
        %vm585 = vsmask.f32 7440
        %vm586 = vmor %vm584, %vm585
        %v588 = vshrl.u32 %v560, 16
        %v590 = vrot.slane %v588, 4
        %v591 = vshll.u32 %v560, 16
        %v593 = vrot.slane %v591, 5
        %v594 = vor.u32 %v590, %v593
        %v595 = vrot.slane %v594, 4
        %v597 = vshll.u32 %v561, 16
        %v599 = vrot.slane %v597, 5
        %v600 = vsel %vm586, %v595, %v599
        %v602 = vshrl.u32 %v562, 16
        %v604 = vrot.slane %v602, 4
        %v605 = vshll.u32 %v562, 16
        %v607 = vrot.slane %v605, 5
        %v608 = vor.u32 %v604, %v607
        %v609 = vrot.slane %v608, 4
        %v611 = vshll.u32 %v563, 16
        %v613 = vrot.slane %v611, 5
        %v614 = vsel %vm586, %v609, %v613
        %v616 = vshrl.u32 %v564, 16
        %v618 = vrot.slane %v616, 4
        %v619 = vshll.u32 %v564, 16
        %v621 = vrot.slane %v619, 5
        %v622 = vor.u32 %v618, %v621
        %v623 = vrot.slane %v622, 4
        %v625 = vshll.u32 %v565, 16
        %v627 = vrot.slane %v625, 5
        %v628 = vsel %vm586, %v623, %v627
        %v630 = vshrl.u32 %v566, 16
        %v632 = vrot.slane %v630, 4
        %v633 = vshll.u32 %v566, 16
        %v635 = vrot.slane %v633, 5
        %v636 = vor.u32 %v632, %v635
        %v637 = vrot.slane %v636, 4
        %v639 = vshll.u32 %v567, 16
        %v641 = vrot.slane %v639, 5
        %v642 = vsel %vm586, %v637, %v641
        %v643 = vld [vmem:[#allocation2] sm:$0xff]
        %v644 = vld [vmem:[#allocation2 + $0x8] sm:$0xff]
        %v645 = vld [vmem:[#allocation2 + $0x10] sm:$0xff]
        %v646 = vld [vmem:[#allocation2 + $0x18] sm:$0xff]
        %v647 = vunpack.c.l.b16 %v600
        %v648 = vunpack.c.l.b16 %v614
        %v649 = vunpack.c.l.b16 %v628
        %v650 = vunpack.c.l.b16 %v642
        %v651 = vpack.c.b16 %v648, %v647
        %v652 = vpack.c.b16 %v650, %v649
        %v671 = vunpack.c.l.b16 %v568
        %v672 = vunpack.c.l.b16 %v569
        %v673 = vunpack.c.l.b16 %v570
        %v674 = vunpack.c.l.b16 %v571
        %v675 = vunpack.c.l.b16 %v572
        %v676 = vunpack.c.l.b16 %v573
        %v677 = vunpack.c.l.b16 %v574
        %v678 = vunpack.c.l.b16 %v575
        %v679 = vunpack.c.l.b16 %v576
        %v680 = vunpack.c.l.b16 %v577
        %v681 = vunpack.c.l.b16 %v578
        %v682 = vunpack.c.l.b16 %v579
        %v683 = vunpack.c.l.b16 %v580
        %v684 = vunpack.c.l.b16 %v581
        %v685 = vunpack.c.l.b16 %v582
        %v686 = vunpack.c.l.b16 %v583
        %v687 = vpack.c.b16 %v672, %v671
        %v688 = vpack.c.b16 %v674, %v673
        %v689 = vpack.c.b16 %v676, %v675
        %v690 = vpack.c.b16 %v678, %v677
        %v691 = vpack.c.b16 %v680, %v679
        %v692 = vpack.c.b16 %v682, %v681
        %v693 = vpack.c.b16 %v684, %v683
        %v694 = vpack.c.b16 %v686, %v685
        %703 = vmatprep.subr.bf16.mxu0 0
        %704 = vmatpush1.bf16.msra.mxu0 %v687
        %705 = vmatprep.subr.bf16.mxu0 0
        %706 = vmatpush1.bf16.msra.mxu0 %v688
        %707 = vmatprep.subr.bf16.mxu0 0
        %708 = vmatpush1.bf16.msra.mxu0 %v689
        %709 = vmatprep.subr.bf16.mxu0 0
        %710 = vmatpush1.bf16.msra.mxu0 %v690
        %711 = vmatprep.subr.bf16.mxu0 0
        %712 = vmatpush1.bf16.msra.mxu0 %v691
        %713 = vmatprep.subr.bf16.mxu0 0
        %714 = vmatpush1.bf16.msra.mxu0 %v692
        %715 = vmatprep.subr.bf16.mxu0 0
        %716 = vmatpush1.bf16.msra.mxu0 %v693
        %717 = vmatprep.subr.bf16.mxu0 0
        %718 = vmatpush1.bf16.msra.mxu0 %v694
        %719 = vmatprep.subr.bf16.mxu0 0
        %720 = vmatpush1.bf16.msra.mxu0 0
        %721 = vmatprep.subr.bf16.mxu0 0
        %722 = vmatpush1.bf16.msra.mxu0 0
        %723 = vmatprep.subr.bf16.mxu0 0
        %724 = vmatpush1.bf16.msra.mxu0 0
        %725 = vmatprep.subr.bf16.mxu0 0
        %726 = vmatpush1.bf16.msra.mxu0 0
        %727 = vmatprep.subr.bf16.mxu0 0
        %728 = vmatpush1.bf16.msra.mxu0 0
        %729 = vmatprep.subr.bf16.mxu0 0
        %730 = vmatpush1.bf16.msra.mxu0 0
        %731 = vmatprep.subr.bf16.mxu0 0
        %732 = vmatpush1.bf16.msra.mxu0 0
        %733 = vmatprep.subr.bf16.mxu0 0
        %734 = vmatpush1.bf16.msra.mxu0 0
        %735 = vmatprep.mubr.bf16.mxu0 0
        %736 = vmatmul.mubr.bf16.gmra.mrb[0].mxu0 %v651
        %v737 = vpop.f32.mrb[0].mxu0
        %v738 = vadd.f32 0.0, %v737
        %v739 = vpop.f32.mrb[0].mxu0
        %v740 = vpop.f32.mrb[0].mxu0
        %v741 = vadd.f32 0.0, %v740
        %v742 = vpop.f32.mrb[0].mxu0
        %743 = vmatprep.mubr.bf16.mxu0 0
        %744 = vmatmul.mubr.bf16.gmra.mrb[0].mxu0 %v652
        %v745 = vpop.f32.mrb[0].mxu0
        %v746 = vadd.f32 0.0, %v745
        %v747 = vpop.f32.mrb[0].mxu0
        %v748 = vpop.f32.mrb[0].mxu0
        %v749 = vadd.f32 0.0, %v748
        %v750 = vpop.f32.mrb[0].mxu0
        %751 = vdwg.mxu0
        %v752 = vadd.f32 %v643, %v738
        %v753 = vadd.f32 %v644, %v741
        %v754 = vadd.f32 %v645, %v746
        %v755 = vadd.f32 %v646, %v749
        %756 = vst [vmem:[#allocation2] sm:$0xff] %v752
        %757 = vst [vmem:[#allocation2 + $0x8] sm:$0xff] %v753
        %758 = vst [vmem:[#allocation2 + $0x10] sm:$0xff] %v754
        %759 = vst [vmem:[#allocation2 + $0x18] sm:$0xff] %v755
        %v760 = vld [vmem:[%s313 + $0x8] sm:$0xff]
        %v761 = vld [vmem:[%s313 + $0x10] sm:$0x11]
        %v762 = vld [vmem:[%s313 + $0x20] sm:$0xff]
        %v763 = vld [vmem:[%s313 + $0x28] sm:$0x11]
        %v764 = vld [vmem:[%s313 + $0x38] sm:$0xff]
        %v765 = vld [vmem:[%s313 + $0x40] sm:$0x11]
        %v766 = vld [vmem:[%s313 + $0x50] sm:$0xff]
        %v767 = vld [vmem:[%s313 + $0x58] sm:$0x11]
        %s768 = scalar_lea.vmem %s2, 128
        %v769 = vld [vmem:[%s768] sm:$0xf]
        %v770 = vld [vmem:[%s768 + $0x4] sm:$0xf]
        %v771 = vld [vmem:[%s768 + $0x8] sm:$0xf]
        %v772 = vld [vmem:[%s768 + $0xc] sm:$0xf]
        %v773 = vld [vmem:[%s768 + $0x10] sm:$0xf]
        %v774 = vld [vmem:[%s768 + $0x14] sm:$0xf]
        %v775 = vld [vmem:[%s768 + $0x18] sm:$0xf]
        %v776 = vld [vmem:[%s768 + $0x1c] sm:$0xf]
        %v777 = vld [vmem:[%s768 + $0x20] sm:$0xf]
        %v778 = vld [vmem:[%s768 + $0x24] sm:$0xf]
        %v779 = vld [vmem:[%s768 + $0x28] sm:$0xf]
        %v780 = vld [vmem:[%s768 + $0x2c] sm:$0xf]
        %v781 = vld [vmem:[%s768 + $0x30] sm:$0xf]
        %v782 = vld [vmem:[%s768 + $0x34] sm:$0xf]
        %v783 = vld [vmem:[%s768 + $0x38] sm:$0xf]
        %v784 = vld [vmem:[%s768 + $0x3c] sm:$0xf]
        %v785 = vld [vmem:[%s768 + $0x40] sm:$0xf]
        %v786 = vld [vmem:[%s768 + $0x44] sm:$0xf]
        %v787 = vld [vmem:[%s768 + $0x48] sm:$0xf]
        %v788 = vld [vmem:[%s768 + $0x4c] sm:$0xf]
        %v789 = vld [vmem:[%s768 + $0x50] sm:$0xf]
        %v790 = vld [vmem:[%s768 + $0x54] sm:$0xf]
        %v791 = vld [vmem:[%s768 + $0x58] sm:$0xf]
        %v792 = vld [vmem:[%s768 + $0x5c] sm:$0xf]
        %v793 = vld [vmem:[%s768 + $0x60] sm:$0xf]
        %v794 = vld [vmem:[%s768 + $0x64] sm:$0xf]
        %v795 = vld [vmem:[%s768 + $0x68] sm:$0xf]
        %v796 = vld [vmem:[%s768 + $0x6c] sm:$0xf]
        %v797 = vld [vmem:[%s768 + $0x70] sm:$0xf]
        %v798 = vld [vmem:[%s768 + $0x74] sm:$0xf]
        %v799 = vld [vmem:[%s768 + $0x78] sm:$0xf]
        %v800 = vld [vmem:[%s768 + $0x7c] sm:$0xf]
        %v802 = vshrl.u32 %v760, 16
        %v804 = vrot.slane %v802, 4
        %v805 = vshll.u32 %v760, 16
        %v807 = vrot.slane %v805, 5
        %v808 = vor.u32 %v804, %v807
        %v809 = vrot.slane %v808, 4
        %v811 = vshll.u32 %v761, 16
        %v813 = vrot.slane %v811, 5
        %v814 = vsel %vm586, %v809, %v813
        %v816 = vshrl.u32 %v762, 16
        %v818 = vrot.slane %v816, 4
        %v819 = vshll.u32 %v762, 16
        %v821 = vrot.slane %v819, 5
        %v822 = vor.u32 %v818, %v821
        %v823 = vrot.slane %v822, 4
        %v825 = vshll.u32 %v763, 16
        %v827 = vrot.slane %v825, 5
        %v828 = vsel %vm586, %v823, %v827
        %v830 = vshrl.u32 %v764, 16
        %v832 = vrot.slane %v830, 4
        %v833 = vshll.u32 %v764, 16
        %v835 = vrot.slane %v833, 5
        %v836 = vor.u32 %v832, %v835
        %v837 = vrot.slane %v836, 4
        %v839 = vshll.u32 %v765, 16
        %v841 = vrot.slane %v839, 5
        %v842 = vsel %vm586, %v837, %v841
        %v844 = vshrl.u32 %v766, 16
        %v846 = vrot.slane %v844, 4
        %v847 = vshll.u32 %v766, 16
        %v849 = vrot.slane %v847, 5
        %v850 = vor.u32 %v846, %v849
        %v851 = vrot.slane %v850, 4
        %v853 = vshll.u32 %v767, 16
        %v855 = vrot.slane %v853, 5
        %v856 = vsel %vm586, %v851, %v855
        %v857 = vld [vmem:[#allocation2] sm:$0xff]
        %v858 = vld [vmem:[#allocation2 + $0x8] sm:$0xff]
        %v859 = vld [vmem:[#allocation2 + $0x10] sm:$0xff]
        %v860 = vld [vmem:[#allocation2 + $0x18] sm:$0xff]
        %v861 = vunpack.c.l.b16 %v814
        %v862 = vunpack.c.h.b16 %v814
        %v863 = vunpack.c.l.b16 %v828
        %v864 = vunpack.c.h.b16 %v828
        %v865 = vunpack.c.l.b16 %v842
        %v866 = vunpack.c.h.b16 %v842
        %v867 = vunpack.c.l.b16 %v856
        %v868 = vunpack.c.h.b16 %v856
        %v869 = vpack.c.b16 %v863, %v861
        %v870 = vpack.c.b16 %v864, %v862
        %v871 = vpack.c.b16 %v867, %v865
        %v872 = vpack.c.b16 %v868, %v866
        %v909 = vunpack.c.l.b16 %v769
        %v910 = vunpack.c.l.b16 %v770
        %v911 = vunpack.c.l.b16 %v771
        %v912 = vunpack.c.l.b16 %v772
        %v913 = vunpack.c.l.b16 %v773
        %v914 = vunpack.c.l.b16 %v774
        %v915 = vunpack.c.l.b16 %v775
        %v916 = vunpack.c.l.b16 %v776
        %v917 = vunpack.c.l.b16 %v777
        %v918 = vunpack.c.l.b16 %v778
        %v919 = vunpack.c.l.b16 %v779
        %v920 = vunpack.c.l.b16 %v780
        %v921 = vunpack.c.l.b16 %v781
        %v922 = vunpack.c.l.b16 %v782
        %v923 = vunpack.c.l.b16 %v783
        %v924 = vunpack.c.l.b16 %v784
        %v925 = vunpack.c.l.b16 %v785
        %v926 = vunpack.c.l.b16 %v786
        %v927 = vunpack.c.l.b16 %v787
        %v928 = vunpack.c.l.b16 %v788
        %v929 = vunpack.c.l.b16 %v789
        %v930 = vunpack.c.l.b16 %v790
        %v931 = vunpack.c.l.b16 %v791
        %v932 = vunpack.c.l.b16 %v792
        %v933 = vunpack.c.l.b16 %v793
        %v934 = vunpack.c.l.b16 %v794
        %v935 = vunpack.c.l.b16 %v795
        %v936 = vunpack.c.l.b16 %v796
        %v937 = vunpack.c.l.b16 %v797
        %v938 = vunpack.c.l.b16 %v798
        %v939 = vunpack.c.l.b16 %v799
        %v940 = vunpack.c.l.b16 %v800
        %v941 = vpack.c.b16 %v910, %v909
        %v942 = vpack.c.b16 %v912, %v911
        %v943 = vpack.c.b16 %v914, %v913
        %v944 = vpack.c.b16 %v916, %v915
        %v945 = vpack.c.b16 %v918, %v917
        %v946 = vpack.c.b16 %v920, %v919
        %v947 = vpack.c.b16 %v922, %v921
        %v948 = vpack.c.b16 %v924, %v923
        %v949 = vpack.c.b16 %v926, %v925
        %v950 = vpack.c.b16 %v928, %v927
        %v951 = vpack.c.b16 %v930, %v929
        %v952 = vpack.c.b16 %v932, %v931
        %v953 = vpack.c.b16 %v934, %v933
        %v954 = vpack.c.b16 %v936, %v935
        %v955 = vpack.c.b16 %v938, %v937
        %v956 = vpack.c.b16 %v940, %v939
        %973 = vmatprep.subr.bf16.mxu0 0
        %974 = vmatpush1.bf16.msra.mxu0 %v941
        %975 = vmatprep.subr.bf16.mxu0 0
        %976 = vmatpush1.bf16.msra.mxu0 %v942
        %977 = vmatprep.subr.bf16.mxu0 0
        %978 = vmatpush1.bf16.msra.mxu0 %v943
        %979 = vmatprep.subr.bf16.mxu0 0
        %980 = vmatpush1.bf16.msra.mxu0 %v944
        %981 = vmatprep.subr.bf16.mxu0 0
        %982 = vmatpush1.bf16.msra.mxu0 %v945
        %983 = vmatprep.subr.bf16.mxu0 0
        %984 = vmatpush1.bf16.msra.mxu0 %v946
        %985 = vmatprep.subr.bf16.mxu0 0
        %986 = vmatpush1.bf16.msra.mxu0 %v947
        %987 = vmatprep.subr.bf16.mxu0 0
        %988 = vmatpush1.bf16.msra.mxu0 %v948
        %989 = vmatprep.subr.bf16.mxu0 0
        %990 = vmatpush1.bf16.msra.mxu0 %v949
        %991 = vmatprep.subr.bf16.mxu0 0
        %992 = vmatpush1.bf16.msra.mxu0 %v950
        %993 = vmatprep.subr.bf16.mxu0 0
        %994 = vmatpush1.bf16.msra.mxu0 %v951
        %995 = vmatprep.subr.bf16.mxu0 0
        %996 = vmatpush1.bf16.msra.mxu0 %v952
        %997 = vmatprep.subr.bf16.mxu0 0
        %998 = vmatpush1.bf16.msra.mxu0 %v953
        %999 = vmatprep.subr.bf16.mxu0 0
        %1000 = vmatpush1.bf16.msra.mxu0 %v954
        %1001 = vmatprep.subr.bf16.mxu0 0
        %1002 = vmatpush1.bf16.msra.mxu0 %v955
        %1003 = vmatprep.subr.bf16.mxu0 0
        %1004 = vmatpush1.bf16.msra.mxu0 %v956
        %1005 = vmatprep.mubr.bf16.mxu0 %v870
        %1006 = vmatmul.mubr.bf16.gmra.mrb[0].mxu0 %v869
        %v1007 = vpop.f32.mrb[0].mxu0
        %v1008 = vadd.f32 0.0, %v1007
        %v1009 = vpop.f32.mrb[0].mxu0
        %v1010 = vpop.f32.mrb[0].mxu0
        %v1011 = vadd.f32 0.0, %v1010
        %v1012 = vpop.f32.mrb[0].mxu0
        %1013 = vmatprep.mubr.bf16.mxu0 %v872
        %1014 = vmatmul.mubr.bf16.gmra.mrb[0].mxu0 %v871
        %v1015 = vpop.f32.mrb[0].mxu0
        %v1016 = vadd.f32 0.0, %v1015
        %v1017 = vpop.f32.mrb[0].mxu0
        %v1018 = vpop.f32.mrb[0].mxu0
        %v1019 = vadd.f32 0.0, %v1018
        %v1020 = vpop.f32.mrb[0].mxu0
        %1021 = vdwg.mxu0
        %v1022 = vadd.f32 %v857, %v1008
        %v1023 = vadd.f32 %v858, %v1011
        %v1024 = vadd.f32 %v859, %v1016
        %v1025 = vadd.f32 %v860, %v1019
        %1026 = vst [vmem:[#allocation2] sm:$0xff] %v1022
        %1027 = vst [vmem:[#allocation2 + $0x8] sm:$0xff] %v1023
        %1028 = vst [vmem:[#allocation2 + $0x10] sm:$0xff] %v1024
        %1029 = vst [vmem:[#allocation2 + $0x18] sm:$0xff] %v1025
        %v1030 = vld [vmem:[%s313 + $0x8] sm:$0xe]
        %v1031 = vld [vmem:[%s313 + $0x10] sm:$0x1]
        %v1032 = vld [vmem:[%s313 + $0x20] sm:$0xe]
        %v1033 = vld [vmem:[%s313 + $0x28] sm:$0x1]
        %v1034 = vld [vmem:[%s313 + $0x38] sm:$0xe]
        %v1035 = vld [vmem:[%s313 + $0x40] sm:$0x1]
        %v1036 = vld [vmem:[%s313 + $0x50] sm:$0xe]
        %v1037 = vld [vmem:[%s313 + $0x58] sm:$0x1]
        %s1038 = scalar_lea.vmem %s3, 64
        %v1039 = vld [vmem:[%s1038] sm:$0xf]
        %v1040 = vld [vmem:[%s1038 + $0x4] sm:$0xf]
        %v1041 = vld [vmem:[%s1038 + $0x8] sm:$0xf]
        %v1042 = vld [vmem:[%s1038 + $0xc] sm:$0xf]
        %v1043 = vld [vmem:[%s1038 + $0x10] sm:$0xf]
        %v1044 = vld [vmem:[%s1038 + $0x14] sm:$0xf]
        %v1045 = vld [vmem:[%s1038 + $0x18] sm:$0xf]
        %v1046 = vld [vmem:[%s1038 + $0x1c] sm:$0xf]
        %v1047 = vld [vmem:[%s1038 + $0x20] sm:$0xf]
        %v1048 = vld [vmem:[%s1038 + $0x24] sm:$0xf]
        %v1049 = vld [vmem:[%s1038 + $0x28] sm:$0xf]
        %v1050 = vld [vmem:[%s1038 + $0x2c] sm:$0xf]
        %v1051 = vld [vmem:[%s1038 + $0x30] sm:$0xf]
        %v1052 = vld [vmem:[%s1038 + $0x34] sm:$0xf]
        %v1053 = vld [vmem:[%s1038 + $0x38] sm:$0xf]
        %v1054 = vld [vmem:[%s1038 + $0x3c] sm:$0xf]
        %vm1063 = vcmask 1042432
        %vm1064 = vcmask 1046532
        %vm1065 = vmor %vm1063, %vm1064
        %v1066 = vrot.slane %v1030, 5
        %v1067 = vrot.slane %v1066, 4
        %v1068 = vrot.slane %v1031, 5
        %v1069 = vsel %vm1065, %v1067, %v1068
        %v1070 = vrot.slane %v1032, 5
        %v1071 = vrot.slane %v1070, 4
        %v1072 = vrot.slane %v1033, 5
        %v1073 = vsel %vm1065, %v1071, %v1072
        %v1074 = vrot.slane %v1034, 5
        %v1075 = vrot.slane %v1074, 4
        %v1076 = vrot.slane %v1035, 5
        %v1077 = vsel %vm1065, %v1075, %v1076
        %v1078 = vrot.slane %v1036, 5
        %v1079 = vrot.slane %v1078, 4
        %v1080 = vrot.slane %v1037, 5
        %v1081 = vsel %vm1065, %v1079, %v1080
        %v1082 = vld [vmem:[#allocation2] sm:$0xff]
        %v1083 = vld [vmem:[#allocation2 + $0x8] sm:$0xff]
        %v1084 = vld [vmem:[#allocation2 + $0x10] sm:$0xff]
        %v1085 = vld [vmem:[#allocation2 + $0x18] sm:$0xff]
        %v1086 = vunpack.c.l.b16 %v1069
        %v1087 = vunpack.c.l.b16 %v1073
        %v1088 = vunpack.c.l.b16 %v1077
        %v1089 = vunpack.c.l.b16 %v1081
        %v1090 = vpack.c.b16 %v1087, %v1086
        %v1091 = vpack.c.b16 %v1089, %v1088
        %v1110 = vunpack.c.l.b16 %v1039
        %v1111 = vunpack.c.l.b16 %v1040
        %v1112 = vunpack.c.l.b16 %v1041
        %v1113 = vunpack.c.l.b16 %v1042
        %v1114 = vunpack.c.l.b16 %v1043
        %v1115 = vunpack.c.l.b16 %v1044
        %v1116 = vunpack.c.l.b16 %v1045
        %v1117 = vunpack.c.l.b16 %v1046
        %v1118 = vunpack.c.l.b16 %v1047
        %v1119 = vunpack.c.l.b16 %v1048
        %v1120 = vunpack.c.l.b16 %v1049
        %v1121 = vunpack.c.l.b16 %v1050
        %v1122 = vunpack.c.l.b16 %v1051
        %v1123 = vunpack.c.l.b16 %v1052
        %v1124 = vunpack.c.l.b16 %v1053
        %v1125 = vunpack.c.l.b16 %v1054
        %v1126 = vpack.c.b16 %v1111, %v1110
        %v1127 = vpack.c.b16 %v1113, %v1112
        %v1128 = vpack.c.b16 %v1115, %v1114
        %v1129 = vpack.c.b16 %v1117, %v1116
        %v1130 = vpack.c.b16 %v1119, %v1118
        %v1131 = vpack.c.b16 %v1121, %v1120
        %v1132 = vpack.c.b16 %v1123, %v1122
        %v1133 = vpack.c.b16 %v1125, %v1124
        %1142 = vmatprep.subr.bf16.mxu0 0
        %1143 = vmatpush1.bf16.msra.mxu0 %v1126
        %1144 = vmatprep.subr.bf16.mxu0 0
        %1145 = vmatpush1.bf16.msra.mxu0 %v1127
        %1146 = vmatprep.subr.bf16.mxu0 0
        %1147 = vmatpush1.bf16.msra.mxu0 %v1128
        %1148 = vmatprep.subr.bf16.mxu0 0
        %1149 = vmatpush1.bf16.msra.mxu0 %v1129
        %1150 = vmatprep.subr.bf16.mxu0 0
        %1151 = vmatpush1.bf16.msra.mxu0 %v1130
        %1152 = vmatprep.subr.bf16.mxu0 0
        %1153 = vmatpush1.bf16.msra.mxu0 %v1131
        %1154 = vmatprep.subr.bf16.mxu0 0
        %1155 = vmatpush1.bf16.msra.mxu0 %v1132
        %1156 = vmatprep.subr.bf16.mxu0 0
        %1157 = vmatpush1.bf16.msra.mxu0 %v1133
        %1158 = vmatprep.subr.bf16.mxu0 0
        %1159 = vmatpush1.bf16.msra.mxu0 0
        %1160 = vmatprep.subr.bf16.mxu0 0
        %1161 = vmatpush1.bf16.msra.mxu0 0
        %1162 = vmatprep.subr.bf16.mxu0 0
        %1163 = vmatpush1.bf16.msra.mxu0 0
        %1164 = vmatprep.subr.bf16.mxu0 0
        %1165 = vmatpush1.bf16.msra.mxu0 0
        %1166 = vmatprep.subr.bf16.mxu0 0
        %1167 = vmatpush1.bf16.msra.mxu0 0
        %1168 = vmatprep.subr.bf16.mxu0 0
        %1169 = vmatpush1.bf16.msra.mxu0 0
        %1170 = vmatprep.subr.bf16.mxu0 0
        %1171 = vmatpush1.bf16.msra.mxu0 0
        %1172 = vmatprep.subr.bf16.mxu0 0
        %1173 = vmatpush1.bf16.msra.mxu0 0
        %1174 = vmatprep.mubr.bf16.mxu0 0
        %1175 = vmatmul.mubr.bf16.gmra.mrb[0].mxu0 %v1090
        %v1176 = vpop.f32.mrb[0].mxu0
        %v1177 = vadd.f32 0.0, %v1176
        %v1178 = vpop.f32.mrb[0].mxu0
        %v1179 = vpop.f32.mrb[0].mxu0
        %v1180 = vadd.f32 0.0, %v1179
        %v1181 = vpop.f32.mrb[0].mxu0
        %1182 = vmatprep.mubr.bf16.mxu0 0
        %1183 = vmatmul.mubr.bf16.gmra.mrb[0].mxu0 %v1091
        %v1184 = vpop.f32.mrb[0].mxu0
        %v1185 = vadd.f32 0.0, %v1184
        %v1186 = vpop.f32.mrb[0].mxu0
        %v1187 = vpop.f32.mrb[0].mxu0
        %v1188 = vadd.f32 0.0, %v1187
        %v1189 = vpop.f32.mrb[0].mxu0
        %1190 = vdwg.mxu0
        %v1191 = vadd.f32 %v1082, %v1177
        %v1192 = vadd.f32 %v1083, %v1180
        %v1193 = vadd.f32 %v1084, %v1185
        %v1194 = vadd.f32 %v1085, %v1188
        %1195 = vst [vmem:[#allocation2] sm:$0xff] %v1191
        %1196 = vst [vmem:[#allocation2 + $0x8] sm:$0xff] %v1192
        %1197 = vst [vmem:[#allocation2 + $0x10] sm:$0xff] %v1193
        %1198 = vst [vmem:[#allocation2 + $0x18] sm:$0xff] %v1194
        %s1199 = scalar_lea.vmem %s313, 24
        %v1200 = vld [vmem:[%s1199] sm:$0xff]
        %v1201 = vld [vmem:[%s1199 + $0x18] sm:$0xff]
        %v1202 = vld [vmem:[%s1199 + $0x30] sm:$0xff]
        %s1203 = scalar_lea.vmem %s2, 256
        %v1204 = vld [vmem:[%s1203] sm:$0xf]
        %v1205 = vld [vmem:[%s1203 + $0x4] sm:$0xf]
        %v1206 = vld [vmem:[%s1203 + $0x8] sm:$0xf]
        %v1207 = vld [vmem:[%s1203 + $0xc] sm:$0xf]
        %v1208 = vld [vmem:[%s1203 + $0x10] sm:$0xf]
        %v1209 = vld [vmem:[%s1203 + $0x14] sm:$0xf]
        %v1210 = vld [vmem:[%s1203 + $0x18] sm:$0xf]
        %v1211 = vld [vmem:[%s1203 + $0x1c] sm:$0xf]
        %v1212 = vld [vmem:[%s1203 + $0x20] sm:$0xf]
        %v1213 = vld [vmem:[%s1203 + $0x24] sm:$0xf]
        %v1214 = vld [vmem:[%s1203 + $0x28] sm:$0xf]
        %v1215 = vld [vmem:[%s1203 + $0x2c] sm:$0xf]
        %v1216 = vld [vmem:[%s1203 + $0x30] sm:$0xf]
        %v1217 = vld [vmem:[%s1203 + $0x34] sm:$0xf]
        %v1218 = vld [vmem:[%s1203 + $0x38] sm:$0xf]
        %v1219 = vld [vmem:[%s1203 + $0x3c] sm:$0xf]
        %v1220 = vld [vmem:[%s1203 + $0x40] sm:$0xf]
        %v1221 = vld [vmem:[%s1203 + $0x44] sm:$0xf]
        %v1222 = vld [vmem:[%s1203 + $0x48] sm:$0xf]
        %v1223 = vld [vmem:[%s1203 + $0x4c] sm:$0xf]
        %v1224 = vld [vmem:[%s1203 + $0x50] sm:$0xf]
        %v1225 = vld [vmem:[%s1203 + $0x54] sm:$0xf]
        %v1226 = vld [vmem:[%s1203 + $0x58] sm:$0xf]
        %v1227 = vld [vmem:[%s1203 + $0x5c] sm:$0xf]
        %v1228 = vld [vmem:[%s1203 + $0x60] sm:$0xf]
        %v1229 = vld [vmem:[%s1203 + $0x64] sm:$0xf]
        %v1230 = vld [vmem:[%s1203 + $0x68] sm:$0xf]
        %v1231 = vld [vmem:[%s1203 + $0x6c] sm:$0xf]
        %v1232 = vld [vmem:[%s1203 + $0x70] sm:$0xf]
        %v1233 = vld [vmem:[%s1203 + $0x74] sm:$0xf]
        %v1234 = vld [vmem:[%s1203 + $0x78] sm:$0xf]
        %v1235 = vld [vmem:[%s1203 + $0x7c] sm:$0xf]
        %v1236 = vld [vmem:[#allocation2] sm:$0xff]
        %v1237 = vld [vmem:[#allocation2 + $0x8] sm:$0xff]
        %v1238 = vld [vmem:[#allocation2 + $0x10] sm:$0xff]
        %v1242 = vunpack.c.l.b16 %v1200
        %v1243 = vunpack.c.h.b16 %v1200
        %v1244 = vunpack.c.l.b16 %v1201
        %v1245 = vunpack.c.h.b16 %v1201
        %v1246 = vunpack.c.l.b16 %v1202
        %v1247 = vunpack.c.h.b16 %v1202
        %v1248 = vpack.c.b16 %v1244, %v1242
        %v1249 = vpack.c.b16 %v1245, %v1243
        %v1250 = vpack.c.b16 %v1246, %v1246
        %v1251 = vpack.c.b16 %v1247, %v1247
        %v1288 = vunpack.c.l.b16 %v1204
        %v1289 = vunpack.c.l.b16 %v1205
        %v1290 = vunpack.c.l.b16 %v1206
        %v1291 = vunpack.c.l.b16 %v1207
        %v1292 = vunpack.c.l.b16 %v1208
        %v1293 = vunpack.c.l.b16 %v1209
        %v1294 = vunpack.c.l.b16 %v1210
        %v1295 = vunpack.c.l.b16 %v1211
        %v1296 = vunpack.c.l.b16 %v1212
        %v1297 = vunpack.c.l.b16 %v1213
        %v1298 = vunpack.c.l.b16 %v1214
        %v1299 = vunpack.c.l.b16 %v1215
        %v1300 = vunpack.c.l.b16 %v1216
        %v1301 = vunpack.c.l.b16 %v1217
        %v1302 = vunpack.c.l.b16 %v1218
        %v1303 = vunpack.c.l.b16 %v1219
        %v1304 = vunpack.c.l.b16 %v1220
        %v1305 = vunpack.c.l.b16 %v1221
        %v1306 = vunpack.c.l.b16 %v1222
        %v1307 = vunpack.c.l.b16 %v1223
        %v1308 = vunpack.c.l.b16 %v1224
        %v1309 = vunpack.c.l.b16 %v1225
        %v1310 = vunpack.c.l.b16 %v1226
        %v1311 = vunpack.c.l.b16 %v1227
        %v1312 = vunpack.c.l.b16 %v1228
        %v1313 = vunpack.c.l.b16 %v1229
        %v1314 = vunpack.c.l.b16 %v1230
        %v1315 = vunpack.c.l.b16 %v1231
        %v1316 = vunpack.c.l.b16 %v1232
        %v1317 = vunpack.c.l.b16 %v1233
        %v1318 = vunpack.c.l.b16 %v1234
        %v1319 = vunpack.c.l.b16 %v1235
        %v1320 = vpack.c.b16 %v1289, %v1288
        %v1321 = vpack.c.b16 %v1291, %v1290
        %v1322 = vpack.c.b16 %v1293, %v1292
        %v1323 = vpack.c.b16 %v1295, %v1294
        %v1324 = vpack.c.b16 %v1297, %v1296
        %v1325 = vpack.c.b16 %v1299, %v1298
        %v1326 = vpack.c.b16 %v1301, %v1300
        %v1327 = vpack.c.b16 %v1303, %v1302
        %v1328 = vpack.c.b16 %v1305, %v1304
        %v1329 = vpack.c.b16 %v1307, %v1306
        %v1330 = vpack.c.b16 %v1309, %v1308
        %v1331 = vpack.c.b16 %v1311, %v1310
        %v1332 = vpack.c.b16 %v1313, %v1312
        %v1333 = vpack.c.b16 %v1315, %v1314
        %v1334 = vpack.c.b16 %v1317, %v1316
        %v1335 = vpack.c.b16 %v1319, %v1318
        %1352 = vmatprep.subr.bf16.mxu0 0
        %1353 = vmatpush1.bf16.msra.mxu0 %v1320
        %1354 = vmatprep.subr.bf16.mxu0 0
        %1355 = vmatpush1.bf16.msra.mxu0 %v1321
        %1356 = vmatprep.subr.bf16.mxu0 0
        %1357 = vmatpush1.bf16.msra.mxu0 %v1322
        %1358 = vmatprep.subr.bf16.mxu0 0
        %1359 = vmatpush1.bf16.msra.mxu0 %v1323
        %1360 = vmatprep.subr.bf16.mxu0 0
        %1361 = vmatpush1.bf16.msra.mxu0 %v1324
        %1362 = vmatprep.subr.bf16.mxu0 0
        %1363 = vmatpush1.bf16.msra.mxu0 %v1325
        %1364 = vmatprep.subr.bf16.mxu0 0
        %1365 = vmatpush1.bf16.msra.mxu0 %v1326
        %1366 = vmatprep.subr.bf16.mxu0 0
        %1367 = vmatpush1.bf16.msra.mxu0 %v1327
        %1368 = vmatprep.subr.bf16.mxu0 0
        %1369 = vmatpush1.bf16.msra.mxu0 %v1328
        %1370 = vmatprep.subr.bf16.mxu0 0
        %1371 = vmatpush1.bf16.msra.mxu0 %v1329
        %1372 = vmatprep.subr.bf16.mxu0 0
        %1373 = vmatpush1.bf16.msra.mxu0 %v1330
        %1374 = vmatprep.subr.bf16.mxu0 0
        %1375 = vmatpush1.bf16.msra.mxu0 %v1331
        %1376 = vmatprep.subr.bf16.mxu0 0
        %1377 = vmatpush1.bf16.msra.mxu0 %v1332
        %1378 = vmatprep.subr.bf16.mxu0 0
        %1379 = vmatpush1.bf16.msra.mxu0 %v1333
        %1380 = vmatprep.subr.bf16.mxu0 0
        %1381 = vmatpush1.bf16.msra.mxu0 %v1334
        %1382 = vmatprep.subr.bf16.mxu0 0
        %1383 = vmatpush1.bf16.msra.mxu0 %v1335
        %1384 = vmatprep.mubr.bf16.mxu0 %v1249
        %1385 = vmatmul.mubr.bf16.gmra.mrb[0].mxu0 %v1248
        %v1386 = vpop.f32.mrb[0].mxu0
        %v1387 = vadd.f32 0.0, %v1386
        %v1388 = vpop.f32.mrb[0].mxu0
        %v1389 = vpop.f32.mrb[0].mxu0
        %v1390 = vadd.f32 0.0, %v1389
        %v1391 = vpop.f32.mrb[0].mxu0
        %1392 = vmatprep.mubr.bf16.mxu0 %v1251
        %1393 = vmatmul.mubr.bf16.gmra.mrb[0].mxu0 %v1250
        %v1394 = vpop.f32.mrb[0].mxu0
        %v1395 = vadd.f32 0.0, %v1394
        %v1396 = vpop.f32.mrb[0].mxu0
        %v1397 = vpop.f32.mrb[0].mxu0
        %v1398 = vpop.f32.mrb[0].mxu0
        %1399 = vdwg.mxu0
        %v1400 = vadd.f32 %v1236, %v1387
        %v1401 = vadd.f32 %v1237, %v1390
        %v1402 = vadd.f32 %v1238, %v1395
        %1403 = vst [vmem:[#allocation2] sm:$0xff] %v1400
        %1404 = vst [vmem:[#allocation2 + $0x8] sm:$0xff] %v1401
        %1405 = vst [vmem:[#allocation2 + $0x10] sm:$0xff] %v1402
        %v1406 = vld [vmem:[%s1199] sm:$0xf]
        %v1407 = vld [vmem:[%s1199 + $0x8] sm:$0x1]
        %v1408 = vld [vmem:[%s1199 + $0x18] sm:$0xf]
        %v1409 = vld [vmem:[%s1199 + $0x20] sm:$0x1]
        %v1410 = vld [vmem:[%s1199 + $0x30] sm:$0xf]
        %v1411 = vld [vmem:[%s1199 + $0x38] sm:$0x1]
        %s1412 = scalar_lea.vmem %s3, 128
        %v1413 = vld [vmem:[%s1412] sm:$0xf]
        %v1414 = vld [vmem:[%s1412 + $0x4] sm:$0xf]
        %v1415 = vld [vmem:[%s1412 + $0x8] sm:$0xf]
        %v1416 = vld [vmem:[%s1412 + $0xc] sm:$0xf]
        %v1417 = vld [vmem:[%s1412 + $0x10] sm:$0xf]
        %v1418 = vld [vmem:[%s1412 + $0x14] sm:$0xf]
        %v1419 = vld [vmem:[%s1412 + $0x18] sm:$0xf]
        %v1420 = vld [vmem:[%s1412 + $0x1c] sm:$0xf]
        %v1421 = vld [vmem:[%s1412 + $0x20] sm:$0xf]
        %v1422 = vld [vmem:[%s1412 + $0x24] sm:$0xf]
        %v1423 = vld [vmem:[%s1412 + $0x28] sm:$0xf]
        %v1424 = vld [vmem:[%s1412 + $0x2c] sm:$0xf]
        %v1425 = vld [vmem:[%s1412 + $0x30] sm:$0xf]
        %v1426 = vld [vmem:[%s1412 + $0x34] sm:$0xf]
        %v1427 = vld [vmem:[%s1412 + $0x38] sm:$0xf]
        %v1428 = vld [vmem:[%s1412 + $0x3c] sm:$0xf]
        %v1430 = vshrl.u32 %v1406, 16
        %v1432 = vrot.slane %v1430, 4
        %v1433 = vshll.u32 %v1406, 16
        %v1435 = vrot.slane %v1433, 5
        %v1436 = vor.u32 %v1432, %v1435
        %v1437 = vrot.slane %v1436, 4
        %v1439 = vshll.u32 %v1407, 16
        %v1441 = vrot.slane %v1439, 5
        %v1442 = vsel %vm586, %v1437, %v1441
        %v1444 = vshrl.u32 %v1408, 16
        %v1446 = vrot.slane %v1444, 4
        %v1447 = vshll.u32 %v1408, 16
        %v1449 = vrot.slane %v1447, 5
        %v1450 = vor.u32 %v1446, %v1449
        %v1451 = vrot.slane %v1450, 4
        %v1453 = vshll.u32 %v1409, 16
        %v1455 = vrot.slane %v1453, 5
        %v1456 = vsel %vm586, %v1451, %v1455
        %v1458 = vshrl.u32 %v1410, 16
        %v1460 = vrot.slane %v1458, 4
        %v1461 = vshll.u32 %v1410, 16
        %v1463 = vrot.slane %v1461, 5
        %v1464 = vor.u32 %v1460, %v1463
        %v1465 = vrot.slane %v1464, 4
        %v1467 = vshll.u32 %v1411, 16
        %v1469 = vrot.slane %v1467, 5
        %v1470 = vsel %vm586, %v1465, %v1469
        %v1471 = vld [vmem:[#allocation2] sm:$0xff]
        %v1472 = vld [vmem:[#allocation2 + $0x8] sm:$0xff]
        %v1473 = vld [vmem:[#allocation2 + $0x10] sm:$0xff]
        %v1474 = vunpack.c.l.b16 %v1442
        %v1475 = vunpack.c.l.b16 %v1456
        %v1476 = vunpack.c.l.b16 %v1470
        %v1477 = vpack.c.b16 %v1475, %v1474
        %v1478 = vpack.c.b16 %v1476, %v1476
        %v1497 = vunpack.c.l.b16 %v1413
        %v1498 = vunpack.c.l.b16 %v1414
        %v1499 = vunpack.c.l.b16 %v1415
        %v1500 = vunpack.c.l.b16 %v1416
        %v1501 = vunpack.c.l.b16 %v1417
        %v1502 = vunpack.c.l.b16 %v1418
        %v1503 = vunpack.c.l.b16 %v1419
        %v1504 = vunpack.c.l.b16 %v1420
        %v1505 = vunpack.c.l.b16 %v1421
        %v1506 = vunpack.c.l.b16 %v1422
        %v1507 = vunpack.c.l.b16 %v1423
        %v1508 = vunpack.c.l.b16 %v1424
        %v1509 = vunpack.c.l.b16 %v1425
        %v1510 = vunpack.c.l.b16 %v1426
        %v1511 = vunpack.c.l.b16 %v1427
        %v1512 = vunpack.c.l.b16 %v1428
        %v1513 = vpack.c.b16 %v1498, %v1497
        %v1514 = vpack.c.b16 %v1500, %v1499
        %v1515 = vpack.c.b16 %v1502, %v1501
        %v1516 = vpack.c.b16 %v1504, %v1503
        %v1517 = vpack.c.b16 %v1506, %v1505
        %v1518 = vpack.c.b16 %v1508, %v1507
        %v1519 = vpack.c.b16 %v1510, %v1509
        %v1520 = vpack.c.b16 %v1512, %v1511
        %1529 = vmatprep.subr.bf16.mxu0 0
        %1530 = vmatpush1.bf16.msra.mxu0 %v1513
        %1531 = vmatprep.subr.bf16.mxu0 0
        %1532 = vmatpush1.bf16.msra.mxu0 %v1514
        %1533 = vmatprep.subr.bf16.mxu0 0
        %1534 = vmatpush1.bf16.msra.mxu0 %v1515
        %1535 = vmatprep.subr.bf16.mxu0 0
        %1536 = vmatpush1.bf16.msra.mxu0 %v1516
        %1537 = vmatprep.subr.bf16.mxu0 0
        %1538 = vmatpush1.bf16.msra.mxu0 %v1517
        %1539 = vmatprep.subr.bf16.mxu0 0
        %1540 = vmatpush1.bf16.msra.mxu0 %v1518
        %1541 = vmatprep.subr.bf16.mxu0 0
        %1542 = vmatpush1.bf16.msra.mxu0 %v1519
        %1543 = vmatprep.subr.bf16.mxu0 0
        %1544 = vmatpush1.bf16.msra.mxu0 %v1520
        %1545 = vmatprep.subr.bf16.mxu0 0
        %1546 = vmatpush1.bf16.msra.mxu0 0
        %1547 = vmatprep.subr.bf16.mxu0 0
        %1548 = vmatpush1.bf16.msra.mxu0 0
        %1549 = vmatprep.subr.bf16.mxu0 0
        %1550 = vmatpush1.bf16.msra.mxu0 0
        %1551 = vmatprep.subr.bf16.mxu0 0
        %1552 = vmatpush1.bf16.msra.mxu0 0
        %1553 = vmatprep.subr.bf16.mxu0 0
        %1554 = vmatpush1.bf16.msra.mxu0 0
        %1555 = vmatprep.subr.bf16.mxu0 0
        %1556 = vmatpush1.bf16.msra.mxu0 0
        %1557 = vmatprep.subr.bf16.mxu0 0
        %1558 = vmatpush1.bf16.msra.mxu0 0
        %1559 = vmatprep.subr.bf16.mxu0 0
        %1560 = vmatpush1.bf16.msra.mxu0 0
        %1561 = vmatprep.mubr.bf16.mxu0 0
        %1562 = vmatmul.mubr.bf16.gmra.mrb[0].mxu0 %v1477
        %v1563 = vpop.f32.mrb[0].mxu0
        %v1564 = vadd.f32 0.0, %v1563
        %v1565 = vpop.f32.mrb[0].mxu0
        %v1566 = vpop.f32.mrb[0].mxu0
        %v1567 = vadd.f32 0.0, %v1566
        %v1568 = vpop.f32.mrb[0].mxu0
        %1569 = vmatprep.mubr.bf16.mxu0 0
        %1570 = vmatmul.mubr.bf16.gmra.mrb[0].mxu0 %v1478
        %v1571 = vpop.f32.mrb[0].mxu0
        %v1572 = vadd.f32 0.0, %v1571
        %v1573 = vpop.f32.mrb[0].mxu0
        %v1574 = vpop.f32.mrb[0].mxu0
        %v1575 = vpop.f32.mrb[0].mxu0
        %1576 = vdwg.mxu0
        %v1577 = vadd.f32 %v1471, %v1564
        %v1578 = vadd.f32 %v1472, %v1567
        %v1579 = vadd.f32 %v1473, %v1572
        %1580 = vst [vmem:[#allocation2] sm:$0xff] %v1577
        %1581 = vst [vmem:[#allocation2 + $0x8] sm:$0xff] %v1578
        %1582 = vst [vmem:[#allocation2 + $0x10] sm:$0xff] %v1579
        %v1583 = vld [vmem:[%s331] sm:$0xff]
        %v1584 = vld [vmem:[%s1203] sm:$0xf]
        %v1585 = vld [vmem:[%s1203 + $0x4] sm:$0xf]
        %v1586 = vld [vmem:[%s1203 + $0x8] sm:$0xf]
        %v1587 = vld [vmem:[%s1203 + $0xc] sm:$0xf]
        %v1588 = vld [vmem:[%s1203 + $0x10] sm:$0xf]
        %v1589 = vld [vmem:[%s1203 + $0x14] sm:$0xf]
        %v1590 = vld [vmem:[%s1203 + $0x18] sm:$0xf]
        %v1591 = vld [vmem:[%s1203 + $0x1c] sm:$0xf]
        %v1592 = vld [vmem:[%s1203 + $0x20] sm:$0xf]
        %v1593 = vld [vmem:[%s1203 + $0x24] sm:$0xf]
        %v1594 = vld [vmem:[%s1203 + $0x28] sm:$0xf]
        %v1595 = vld [vmem:[%s1203 + $0x2c] sm:$0xf]
        %v1596 = vld [vmem:[%s1203 + $0x30] sm:$0xf]
        %v1597 = vld [vmem:[%s1203 + $0x34] sm:$0xf]
        %v1598 = vld [vmem:[%s1203 + $0x38] sm:$0xf]
        %v1599 = vld [vmem:[%s1203 + $0x3c] sm:$0xf]
        %v1600 = vld [vmem:[%s1203 + $0x40] sm:$0xf]
        %v1601 = vld [vmem:[%s1203 + $0x44] sm:$0xf]
        %v1602 = vld [vmem:[%s1203 + $0x48] sm:$0xf]
        %v1603 = vld [vmem:[%s1203 + $0x4c] sm:$0xf]
        %v1604 = vld [vmem:[%s1203 + $0x50] sm:$0xf]
        %v1605 = vld [vmem:[%s1203 + $0x54] sm:$0xf]
        %v1606 = vld [vmem:[%s1203 + $0x58] sm:$0xf]
        %v1607 = vld [vmem:[%s1203 + $0x5c] sm:$0xf]
        %v1608 = vld [vmem:[%s1203 + $0x60] sm:$0xf]
        %v1609 = vld [vmem:[%s1203 + $0x64] sm:$0xf]
        %v1610 = vld [vmem:[%s1203 + $0x68] sm:$0xf]
        %v1611 = vld [vmem:[%s1203 + $0x6c] sm:$0xf]
        %v1612 = vld [vmem:[%s1203 + $0x70] sm:$0xf]
        %v1613 = vld [vmem:[%s1203 + $0x74] sm:$0xf]
        %v1614 = vld [vmem:[%s1203 + $0x78] sm:$0xf]
        %v1615 = vld [vmem:[%s1203 + $0x7c] sm:$0xf]
        %v1616 = vld [vmem:[#allocation2 + $0x18] sm:$0xff]
        %v1618 = vunpack.c.l.b16 %v1583
        %v1619 = vunpack.c.h.b16 %v1583
        %v1620 = vpack.c.b16 %v1618, %v1618
        %v1621 = vpack.c.b16 %v1619, %v1619
        %v1656 = vunpack.c.l.b16 %v1584
        %v1657 = vunpack.c.l.b16 %v1585
        %v1658 = vunpack.c.l.b16 %v1586
        %v1659 = vunpack.c.l.b16 %v1587
        %v1660 = vunpack.c.l.b16 %v1588
        %v1661 = vunpack.c.l.b16 %v1589
        %v1662 = vunpack.c.l.b16 %v1590
        %v1663 = vunpack.c.l.b16 %v1591
        %v1664 = vunpack.c.l.b16 %v1592
        %v1665 = vunpack.c.l.b16 %v1593
        %v1666 = vunpack.c.l.b16 %v1594
        %v1667 = vunpack.c.l.b16 %v1595
        %v1668 = vunpack.c.l.b16 %v1596
        %v1669 = vunpack.c.l.b16 %v1597
        %v1670 = vunpack.c.l.b16 %v1598
        %v1671 = vunpack.c.l.b16 %v1599
        %v1672 = vunpack.c.l.b16 %v1600
        %v1673 = vunpack.c.l.b16 %v1601
        %v1674 = vunpack.c.l.b16 %v1602
        %v1675 = vunpack.c.l.b16 %v1603
        %v1676 = vunpack.c.l.b16 %v1604
        %v1677 = vunpack.c.l.b16 %v1605
        %v1678 = vunpack.c.l.b16 %v1606
        %v1679 = vunpack.c.l.b16 %v1607
        %v1680 = vunpack.c.l.b16 %v1608
        %v1681 = vunpack.c.l.b16 %v1609
        %v1682 = vunpack.c.l.b16 %v1610
        %v1683 = vunpack.c.l.b16 %v1611
        %v1684 = vunpack.c.l.b16 %v1612
        %v1685 = vunpack.c.l.b16 %v1613
        %v1686 = vunpack.c.l.b16 %v1614
        %v1687 = vunpack.c.l.b16 %v1615
        %v1688 = vpack.c.b16 %v1657, %v1656
        %v1689 = vpack.c.b16 %v1659, %v1658
        %v1690 = vpack.c.b16 %v1661, %v1660
        %v1691 = vpack.c.b16 %v1663, %v1662
        %v1692 = vpack.c.b16 %v1665, %v1664
        %v1693 = vpack.c.b16 %v1667, %v1666
        %v1694 = vpack.c.b16 %v1669, %v1668
        %v1695 = vpack.c.b16 %v1671, %v1670
        %v1696 = vpack.c.b16 %v1673, %v1672
        %v1697 = vpack.c.b16 %v1675, %v1674
        %v1698 = vpack.c.b16 %v1677, %v1676
        %v1699 = vpack.c.b16 %v1679, %v1678
        %v1700 = vpack.c.b16 %v1681, %v1680
        %v1701 = vpack.c.b16 %v1683, %v1682
        %v1702 = vpack.c.b16 %v1685, %v1684
        %v1703 = vpack.c.b16 %v1687, %v1686
        %1720 = vmatprep.subr.bf16.mxu0 0
        %1721 = vmatpush1.bf16.msra.mxu0 %v1688
        %1722 = vmatprep.subr.bf16.mxu0 0
        %1723 = vmatpush1.bf16.msra.mxu0 %v1689
        %1724 = vmatprep.subr.bf16.mxu0 0
        %1725 = vmatpush1.bf16.msra.mxu0 %v1690
        %1726 = vmatprep.subr.bf16.mxu0 0
        %1727 = vmatpush1.bf16.msra.mxu0 %v1691
        %1728 = vmatprep.subr.bf16.mxu0 0
        %1729 = vmatpush1.bf16.msra.mxu0 %v1692
        %1730 = vmatprep.subr.bf16.mxu0 0
        %1731 = vmatpush1.bf16.msra.mxu0 %v1693
        %1732 = vmatprep.subr.bf16.mxu0 0
        %1733 = vmatpush1.bf16.msra.mxu0 %v1694
        %1734 = vmatprep.subr.bf16.mxu0 0
        %1735 = vmatpush1.bf16.msra.mxu0 %v1695
        %1736 = vmatprep.subr.bf16.mxu0 0
        %1737 = vmatpush1.bf16.msra.mxu0 %v1696
        %1738 = vmatprep.subr.bf16.mxu0 0
        %1739 = vmatpush1.bf16.msra.mxu0 %v1697
        %1740 = vmatprep.subr.bf16.mxu0 0
        %1741 = vmatpush1.bf16.msra.mxu0 %v1698
        %1742 = vmatprep.subr.bf16.mxu0 0
        %1743 = vmatpush1.bf16.msra.mxu0 %v1699
        %1744 = vmatprep.subr.bf16.mxu0 0
        %1745 = vmatpush1.bf16.msra.mxu0 %v1700
        %1746 = vmatprep.subr.bf16.mxu0 0
        %1747 = vmatpush1.bf16.msra.mxu0 %v1701
        %1748 = vmatprep.subr.bf16.mxu0 0
        %1749 = vmatpush1.bf16.msra.mxu0 %v1702
        %1750 = vmatprep.subr.bf16.mxu0 0
        %1751 = vmatpush1.bf16.msra.mxu0 %v1703
        %1752 = vmatprep.mubr.bf16.mxu0 %v1621
        %1753 = vmatmul.mubr.bf16.gmra.mrb[0].mxu0 %v1620
        %v1754 = vpop.f32.mrb[0].mxu0
        %v1755 = vadd.f32 0.0, %v1754
        %v1756 = vpop.f32.mrb[0].mxu0
        %v1757 = vpop.f32.mrb[0].mxu0
        %v1758 = vpop.f32.mrb[0].mxu0
        %1759 = vdwg.mxu0
        %v1760 = vadd.f32 %v1616, %v1755
        %1761 = vst [vmem:[#allocation2 + $0x18] sm:$0xff] %v1760
        %v1762 = vld [vmem:[%s331] sm:$0xf]
        %v1763 = vld [vmem:[%s331 + $0x8] sm:$0x1]
        %v1764 = vld [vmem:[%s1412] sm:$0xf]
        %v1765 = vld [vmem:[%s1412 + $0x4] sm:$0xf]
        %v1766 = vld [vmem:[%s1412 + $0x8] sm:$0xf]
        %v1767 = vld [vmem:[%s1412 + $0xc] sm:$0xf]
        %v1768 = vld [vmem:[%s1412 + $0x10] sm:$0xf]
        %v1769 = vld [vmem:[%s1412 + $0x14] sm:$0xf]
        %v1770 = vld [vmem:[%s1412 + $0x18] sm:$0xf]
        %v1771 = vld [vmem:[%s1412 + $0x1c] sm:$0xf]
        %v1772 = vld [vmem:[%s1412 + $0x20] sm:$0xf]
        %v1773 = vld [vmem:[%s1412 + $0x24] sm:$0xf]
        %v1774 = vld [vmem:[%s1412 + $0x28] sm:$0xf]
        %v1775 = vld [vmem:[%s1412 + $0x2c] sm:$0xf]
        %v1776 = vld [vmem:[%s1412 + $0x30] sm:$0xf]
        %v1777 = vld [vmem:[%s1412 + $0x34] sm:$0xf]
        %v1778 = vld [vmem:[%s1412 + $0x38] sm:$0xf]
        %v1779 = vld [vmem:[%s1412 + $0x3c] sm:$0xf]
        %v1780 = vld [vmem:[#allocation2 + $0x18] sm:$0xff]
        %v1783 = vunpack.c.l.b16 %v1762
        %v1784 = vunpack.c.l.b16 %v1763
        %v1785 = vpack.c.b16 %v1784, %v1783
        %v1787 = vshrl.u32 %v1785, 16
        %v1789 = vshll.u32 %v1785, 16
        %v1791 = vrot.slane %v1789, 1
        %v1792 = vor.u32 %v1787, %v1791
        %v1810 = vunpack.c.l.b16 %v1764
        %v1811 = vunpack.c.l.b16 %v1765
        %v1812 = vunpack.c.l.b16 %v1766
        %v1813 = vunpack.c.l.b16 %v1767
        %v1814 = vunpack.c.l.b16 %v1768
        %v1815 = vunpack.c.l.b16 %v1769
        %v1816 = vunpack.c.l.b16 %v1770
        %v1817 = vunpack.c.l.b16 %v1771
        %v1818 = vunpack.c.l.b16 %v1772
        %v1819 = vunpack.c.l.b16 %v1773
        %v1820 = vunpack.c.l.b16 %v1774
        %v1821 = vunpack.c.l.b16 %v1775
        %v1822 = vunpack.c.l.b16 %v1776
        %v1823 = vunpack.c.l.b16 %v1777
        %v1824 = vunpack.c.l.b16 %v1778
        %v1825 = vunpack.c.l.b16 %v1779
        %v1826 = vpack.c.b16 %v1811, %v1810
        %v1827 = vpack.c.b16 %v1813, %v1812
        %v1828 = vpack.c.b16 %v1815, %v1814
        %v1829 = vpack.c.b16 %v1817, %v1816
        %v1830 = vpack.c.b16 %v1819, %v1818
        %v1831 = vpack.c.b16 %v1821, %v1820
        %v1832 = vpack.c.b16 %v1823, %v1822
        %v1833 = vpack.c.b16 %v1825, %v1824
        %1842 = vmatprep.subr.bf16.mxu0 0
        %1843 = vmatpush1.bf16.msra.mxu0 %v1826
        %1844 = vmatprep.subr.bf16.mxu0 0
        %1845 = vmatpush1.bf16.msra.mxu0 %v1827
        %1846 = vmatprep.subr.bf16.mxu0 0
        %1847 = vmatpush1.bf16.msra.mxu0 %v1828
        %1848 = vmatprep.subr.bf16.mxu0 0
        %1849 = vmatpush1.bf16.msra.mxu0 %v1829
        %1850 = vmatprep.subr.bf16.mxu0 0
        %1851 = vmatpush1.bf16.msra.mxu0 %v1830
        %1852 = vmatprep.subr.bf16.mxu0 0
        %1853 = vmatpush1.bf16.msra.mxu0 %v1831
        %1854 = vmatprep.subr.bf16.mxu0 0
        %1855 = vmatpush1.bf16.msra.mxu0 %v1832
        %1856 = vmatprep.subr.bf16.mxu0 0
        %1857 = vmatpush1.bf16.msra.mxu0 %v1833
        %1858 = vmatprep.subr.bf16.mxu0 0
        %1859 = vmatpush1.bf16.msra.mxu0 0
        %1860 = vmatprep.subr.bf16.mxu0 0
        %1861 = vmatpush1.bf16.msra.mxu0 0
        %1862 = vmatprep.subr.bf16.mxu0 0
        %1863 = vmatpush1.bf16.msra.mxu0 0
        %1864 = vmatprep.subr.bf16.mxu0 0
        %1865 = vmatpush1.bf16.msra.mxu0 0
        %1866 = vmatprep.subr.bf16.mxu0 0
        %1867 = vmatpush1.bf16.msra.mxu0 0
        %1868 = vmatprep.subr.bf16.mxu0 0
        %1869 = vmatpush1.bf16.msra.mxu0 0
        %1870 = vmatprep.subr.bf16.mxu0 0
        %1871 = vmatpush1.bf16.msra.mxu0 0
        %1872 = vmatprep.subr.bf16.mxu0 0
        %1873 = vmatpush1.bf16.msra.mxu0 0
        %1874 = vmatprep.mubr.bf16.mxu0 0
        %1875 = vmatmul.mubr.bf16.gmra.mrb[0].mxu0 %v1792
        %v1876 = vpop.f32.mrb[0].mxu0
        %v1877 = vadd.f32 0.0, %v1876
        %v1878 = vpop.f32.mrb[0].mxu0
        %v1879 = vpop.f32.mrb[0].mxu0
        %v1880 = vpop.f32.mrb[0].mxu0
        %1881 = vdwg.mxu0
        %v1882 = vadd.f32 %v1780, %v1877
        %1883 = vst [vmem:[#allocation2 + $0x18] sm:$0xff] %v1882
        %v1884 = vld [vmem:[#allocation2] sm:$0xff]
        %v1885 = vld [vmem:[#allocation2 + $0x8] sm:$0xff]
        %v1886 = vld [vmem:[#allocation2 + $0x10] sm:$0xff]
        %v1887 = vld [vmem:[#allocation2 + $0x18] sm:$0xff]
        %1888 = vst [vmem:[%s297] sm:$0xff] %v1884
        %1889 = vst [vmem:[%s297 + $0x8] sm:$0xff] %v1885
        %1890 = vst [vmem:[%s297 + $0x10] sm:$0xff] %v1886
        %1891 = vst [vmem:[%s297 + $0x18] sm:$0xff] %v1887
        %s1892 = sand.u32 %s164, 1
        %s1893 = scalar_lea.sflag [#allocation4], %s1892
        %s1894 = sand.u32 %s164, 1
        %s1895 = smul.addr %s1894, 32
        %s1896 = scalar_lea.vmem [#allocation3], %s1895
        // Predicated region
        $region41: #{tpu_custom_call.1} parent=39 // pred_check
          %p1897 = pneg %p174
        $region42: #{tpu_custom_call.1} parent=39 // pred_check_branch
          %1899 = sbr.rel (%p1897) target = $region44
        $region43: #{tpu_custom_call.1} parent=39 // pred_region
          %s1900 = smul.u32 4, %s24
          %s1902 = ssub.s32 512, 512
          %1903 = vsyncadd %s1893, %s1902
          %s1904 = smul.addr %s23, 8
          %s1905 = sadd.s32 %s1900, %s1904
          %s1906 = smul.addr %s1905, 128
          %s1907 = scalar_lea.hbm %s5, %s1906
          %s1908 = sshll.u32 %s1896, 4
          %s1909 = int_to_ptr.vmem [resolvable:$true] %s1908
          %1914 = dma.vmem_to_hbm [thread:$0]  %s1909, 512, %s1907, %s1893, 128, 128, 8
        $region44: #{tpu_custom_call.1} parent=39 // pred_fallthru
          _
      $region40: #{tpu_custom_call.1} parent=5 // pred_fallthru
        _
      %p1915 = scmp.le.s32.totalorder 2, %s14
      // Predicated region
      $region45: #{tpu_custom_call.1} parent=5 // pred_check
        %p1916 = pneg %p1915
      $region46: #{tpu_custom_call.1} parent=5 // pred_check_branch
        %1918 = sbr.rel (%p1916) target = $region48
      $region47: #{tpu_custom_call.1} parent=5 // pred_region
        %s1919 = ssub.s32 %s14, 2
        // Predicated region
        $region49: #{tpu_custom_call.1} parent=47 // pred_check
          %p1920 = pneg %p180
        $region50: #{tpu_custom_call.1} parent=47 // pred_check_branch
          %1922 = sbr.rel (%p1920) target = $region52
        $region51: #{tpu_custom_call.1} parent=47 // pred_region
          %s1923 = sand.u32 %s165, 1
          %s1924 = scalar_lea.sflag [#allocation4], %s1923
          %s1925 = sand.u32 %s165, 1
          %s1926 = smul.addr %s1925, 32
          %s1927 = scalar_lea.vmem [#allocation3], %s1926
          %1928 = dma.done %s1924, 512
        $region52: #{tpu_custom_call.1} parent=47 // pred_fallthru
          _
      $region48: #{tpu_custom_call.1} parent=5 // pred_fallthru
        _
    $region6: #{tpu_custom_call.1} parent=1 // loop_footer
      %s18 = sadd.s32 1, %s14
    $region7: #{tpu_custom_call.1} parent=1 // loop_footer_branch
      %13 = sbr.rel target = $region3
    $region8: #{tpu_custom_call.1} parent=1 // loop_exit
      _
    %1929 = vsyncpa [#allocation4], 1
    %s1930 = scalar_lea.sflag [#allocation4], 1
    %1931 = vsyncpa %s1930, 1

// kernel: tpu_custom_call.1
$region0: #{tpu_custom_call.1}
  #allocation0 [shape = 'u32[]', space=smem, size = 0x4, offset = 0x4, fixed_abs, tag = 'smem constant byte address 0x4 - core index']
  #allocation1 [shape = 'u32[144,128]{1,0:T(1,128)}', space=vmem, size = 0x12000, scoped, tag = 'internal scratch']
  #allocation2 [shape = 'f32[32,128]{1,0:T(8,128)}', space=vmem, size = 0x4000, scoped, tag = 'scratch operand']
  %s0 = inlined_call_operand.vmem [shape: bf16[2,9,18,256], index: 0, kind: input, shape index: {}]
  %s1 = inlined_call_operand.vmem [shape: bf16[2,9,18,256], index: 1, kind: input, shape index: {}]
  %s2 = inlined_call_operand.vmem [shape: bf16[3,256,128], index: 2, kind: input, shape index: {}]
  %s3 = inlined_call_operand.vmem [shape: bf16[3,128,128], index: 3, kind: input, shape index: {}]
  %s4 = inlined_call_operand.vmem [shape: f32[1,128], index: 4, kind: input, shape index: {}]
  %s5 = inlined_call_operand.hbm [shape: f32[2,64,128], index: 5, kind: output, shape index: {}]
  %s6 = sld [smem:[#allocation0]]
  $region53: #{tpu_custom_call.1} parent=0
    _
  %s8 = ssub.s32 1, %s6
  %s9 = scalar_select 0, %s8, %s6
  $region1: #{tpu_custom_call.1} parent=0
    #allocation3 [shape = 'u8[32768]{0}', space=vmem, size = 0x8000, scoped, tag = 'output window, operand 0']
    #allocation4 [shape = 's32[2]{0}', space=sflag, size = 0x8, scoped, tag = 'scoped memory for tpu_custom_call.1']
    %10 = vsyncpa [#allocation4], 0
    %s11 = scalar_lea.sflag [#allocation4], 1
    %12 = vsyncpa %s11, 0
    loop: start=0, step=1, limit=6
    $region2: #{tpu_custom_call.1} parent=1 // loop_pre_header
      _
    $region3: #{tpu_custom_call.1} parent=1 // loop_header
      %s14 = sphi 0, %s18
      %p15 = scmp.ge.s32.totalorder %s14, 6
      %s21 = sphi 0, %s33
      %s22 = sphi 0, %s29
      %s23 = sphi 0, %s21
      %s24 = sphi 0, %s22
      %s25 = sphi 0, %s23
      %s26 = sphi 0, %s24
      %s38 = sphi 0, %s40
      %s41 = sphi 0, %s38
      %s42 = sphi 0, %s41
      %s58 = sphi 0, %s42
      %s70 = sphi 0, %s72
      %s73 = sphi 0, %s70
      %s74 = sphi 0, %s73
      %s90 = sphi 0, %s74
      %s94 = sphi 0, %s94
      %s96 = sphi 0, %s94
      %s97 = sphi 0, %s96
      %s111 = sphi 0, %s97
      %s115 = sphi 0, %s115
      %s117 = sphi 0, %s115
      %s118 = sphi 0, %s117
      %s132 = sphi 0, %s118
      %s136 = sphi 0, %s136
      %s138 = sphi 0, %s136
      %s139 = sphi 0, %s138
      %s153 = sphi 0, %s139
      %s161 = sphi 0, %s163
      %s164 = sphi 0, %s161
      %s165 = sphi 0, %s164
      %s181 = sphi 0, %s165
    $region4: #{tpu_custom_call.1} parent=1 // loop_header_branch
      %17 = sbr.rel (%p15) target = $region8
    $region5: #{tpu_custom_call.1} parent=1 // loop_body
      %s19 = ssub.s32 %s14, 1
      %s20 = ssub.s32 %s14, 2
      %s27 = sadd.s32 1, %s22
      %p28 = scmp.ge.s32.totalorder %s27, 2
      %s29 = scalar_select %p28, 0, %s27
      %s30 = sadd.s32 1, %s21
      %s31 = scalar_select %p28, %s30, %s21
      %p32 = scmp.ge.s32.totalorder %s31, 2
      %s33 = scalar_select %p32, 0, %s31
      %s34 = ssub.s32 %s21, %s33
      %s35 = ssub.s32 %s22, %s29
      %s36 = sor.u32 %s34, %s35
      %p37 = scmp.eq.s32.totalorder %s36, 0
      %s39 = sadd.s32 %s38, 1
      %s40 = scalar_select %p37, %s38, %s39
      %p43 = pneg %p37
      %p44 = scmp.eq.s32.totalorder %s14, 3
      %p45 = por %p43, %p44
      %p46 = scmp.ne.s32.totalorder %s38, %s41
      %p47 = scmp.eq.s32.totalorder %s14, 0
      %p48 = por %p46, %p47
      %p49 = scmp.ne.s32.totalorder %s38, %s41
      %p50 = scmp.eq.s32.totalorder %s19, 3
      %p51 = por %p49, %p50
      %p52 = scmp.ne.s32.totalorder %s41, %s42
      %p53 = scmp.eq.s32.totalorder %s19, 0
      %p54 = por %p52, %p53
      %p55 = scmp.ne.s32.totalorder %s41, %s42
      %p56 = scmp.eq.s32.totalorder %s20, 3
      %p57 = por %p55, %p56
      %p59 = scmp.ne.s32.totalorder %s42, %s58
      %p60 = scmp.eq.s32.totalorder %s20, 0
      %p61 = por %p59, %p60
      %s62 = sadd.s32 %s22, 1
      %s63 = smul.u32 %s62, 4
      %s64 = sadd.s32 %s29, 1
      %s65 = smul.u32 %s64, 4
      %s66 = ssub.s32 %s21, %s33
      %s67 = ssub.s32 %s63, %s65
      %s68 = sor.u32 %s66, %s67
      %p69 = scmp.eq.s32.totalorder %s68, 0
      %s71 = sadd.s32 %s70, 1
      %s72 = scalar_select %p69, %s70, %s71
      %p75 = pneg %p69
      %p76 = scmp.eq.s32.totalorder %s14, 3
      %p77 = por %p75, %p76
      %p78 = scmp.ne.s32.totalorder %s70, %s73
      %p79 = scmp.eq.s32.totalorder %s14, 0
      %p80 = por %p78, %p79
      %p81 = scmp.ne.s32.totalorder %s70, %s73
      %p82 = scmp.eq.s32.totalorder %s19, 3
      %p83 = por %p81, %p82
      %p84 = scmp.ne.s32.totalorder %s73, %s74
      %p85 = scmp.eq.s32.totalorder %s19, 0
      %p86 = por %p84, %p85
      %p87 = scmp.ne.s32.totalorder %s73, %s74
      %p88 = scmp.eq.s32.totalorder %s20, 3
      %p89 = por %p87, %p88
      %p91 = scmp.ne.s32.totalorder %s74, %s90
      %p92 = scmp.eq.s32.totalorder %s20, 0
      %p93 = por %p91, %p92
      %s95 = sadd.s32 %s94, 1
      %p98 = scmp.eq.s32.totalorder %s14, 3
      %p99 = scmp.ne.s32.totalorder %s94, %s96
      %p100 = scmp.eq.s32.totalorder %s14, 0
      %p101 = por %p99, %p100
      %p102 = scmp.ne.s32.totalorder %s94, %s96
      %p103 = scmp.eq.s32.totalorder %s19, 3
      %p104 = por %p102, %p103
      %p105 = scmp.ne.s32.totalorder %s96, %s97
      %p106 = scmp.eq.s32.totalorder %s19, 0
      %p107 = por %p105, %p106
      %p108 = scmp.ne.s32.totalorder %s96, %s97
      %p109 = scmp.eq.s32.totalorder %s20, 3
      %p110 = por %p108, %p109
      %p112 = scmp.ne.s32.totalorder %s97, %s111
      %p113 = scmp.eq.s32.totalorder %s20, 0
      %p114 = por %p112, %p113
      %s116 = sadd.s32 %s115, 1
      %p119 = scmp.eq.s32.totalorder %s14, 3
      %p120 = scmp.ne.s32.totalorder %s115, %s117
      %p121 = scmp.eq.s32.totalorder %s14, 0
      %p122 = por %p120, %p121
      %p123 = scmp.ne.s32.totalorder %s115, %s117
      %p124 = scmp.eq.s32.totalorder %s19, 3
      %p125 = por %p123, %p124
      %p126 = scmp.ne.s32.totalorder %s117, %s118
      %p127 = scmp.eq.s32.totalorder %s19, 0
      %p128 = por %p126, %p127
      %p129 = scmp.ne.s32.totalorder %s117, %s118
      %p130 = scmp.eq.s32.totalorder %s20, 3
      %p131 = por %p129, %p130
      %p133 = scmp.ne.s32.totalorder %s118, %s132
      %p134 = scmp.eq.s32.totalorder %s20, 0
      %p135 = por %p133, %p134
      %s137 = sadd.s32 %s136, 1
      %p140 = scmp.eq.s32.totalorder %s14, 3
      %p141 = scmp.ne.s32.totalorder %s136, %s138
      %p142 = scmp.eq.s32.totalorder %s14, 0
      %p143 = por %p141, %p142
      %p144 = scmp.ne.s32.totalorder %s136, %s138
      %p145 = scmp.eq.s32.totalorder %s19, 3
      %p146 = por %p144, %p145
      %p147 = scmp.ne.s32.totalorder %s138, %s139
      %p148 = scmp.eq.s32.totalorder %s19, 0
      %p149 = por %p147, %p148
      %p150 = scmp.ne.s32.totalorder %s138, %s139
      %p151 = scmp.eq.s32.totalorder %s20, 3
      %p152 = por %p150, %p151
      %p154 = scmp.ne.s32.totalorder %s139, %s153
      %p155 = scmp.eq.s32.totalorder %s20, 0
      %p156 = por %p154, %p155
      %s157 = ssub.s32 %s21, %s33
      %s158 = ssub.s32 %s22, %s29
      %s159 = sor.u32 %s157, %s158
      %p160 = scmp.eq.s32.totalorder %s159, 0
      %s162 = sadd.s32 %s161, 1
      %s163 = scalar_select %p160, %s161, %s162
      %p166 = pneg %p160
      %p167 = scmp.eq.s32.totalorder %s14, 3
      %p168 = por %p166, %p167
      %p169 = scmp.ne.s32.totalorder %s161, %s164
      %p170 = scmp.eq.s32.totalorder %s14, 0
      %p171 = por %p169, %p170
      %p172 = scmp.ne.s32.totalorder %s161, %s164
      %p173 = scmp.eq.s32.totalorder %s19, 3
      %p174 = por %p172, %p173
      %p175 = scmp.ne.s32.totalorder %s164, %s165
      %p176 = scmp.eq.s32.totalorder %s19, 0
      %p177 = por %p175, %p176
      %p178 = scmp.ne.s32.totalorder %s164, %s165
      %p179 = scmp.eq.s32.totalorder %s20, 3
      %p180 = por %p178, %p179
      %p182 = scmp.ne.s32.totalorder %s165, %s181
      %p183 = scmp.eq.s32.totalorder %s20, 0
      %p184 = por %p182, %p183
      %p185 = scmp.le.s32.totalorder 1, %s14
      %p186 = scmp.lt.s32.totalorder %s14, 5
      %p187 = pnand %p185, %p186
      %p188 = pneg %p187
      // Predicated region
      $region9: #{tpu_custom_call.1} parent=5 // pred_check
        _
      $region10: #{tpu_custom_call.1} parent=5 // pred_check_branch
        %190 = sbr.rel (%p187) target = $region12
      $region11: #{tpu_custom_call.1} parent=5 // pred_region
        %s191 = ssub.s32 %s14, 1
        // Predicated region
        $region13: #{tpu_custom_call.1} parent=11 // pred_check
          %p192 = pneg %p107
        $region14: #{tpu_custom_call.1} parent=11 // pred_check_branch
          %194 = sbr.rel (%p192) target = $region16
        $region15: #{tpu_custom_call.1} parent=11 // pred_region
          _
        $region16: #{tpu_custom_call.1} parent=11 // pred_fallthru
          _
        // Predicated region
        $region17: #{tpu_custom_call.1} parent=11 // pred_check
          %p195 = pneg %p128
        $region18: #{tpu_custom_call.1} parent=11 // pred_check_branch
          %197 = sbr.rel (%p195) target = $region20
        $region19: #{tpu_custom_call.1} parent=11 // pred_region
          _
        $region20: #{tpu_custom_call.1} parent=11 // pred_fallthru
          _
        // Predicated region
        $region21: #{tpu_custom_call.1} parent=11 // pred_check
          %p198 = pneg %p149
        $region22: #{tpu_custom_call.1} parent=11 // pred_check_branch
          %200 = sbr.rel (%p198) target = $region24
        $region23: #{tpu_custom_call.1} parent=11 // pred_region
          _
        $region24: #{tpu_custom_call.1} parent=11 // pred_fallthru
          _
      $region12: #{tpu_custom_call.1} parent=5 // pred_fallthru
        _
      %p201 = scmp.lt.s32.totalorder %s14, 4
      // Predicated region
      $region25: #{tpu_custom_call.1} parent=5 // pred_check
        %p202 = pneg %p201
      $region26: #{tpu_custom_call.1} parent=5 // pred_check_branch
        %204 = sbr.rel (%p202) target = $region28
      $region27: #{tpu_custom_call.1} parent=5 // pred_region
        // Predicated region
        $region29: #{tpu_custom_call.1} parent=27 // pred_check
          %p205 = pneg %p48
        $region30: #{tpu_custom_call.1} parent=27 // pred_check_branch
          %207 = sbr.rel (%p205) target = $region32
        $region31: #{tpu_custom_call.1} parent=27 // pred_region
          %s208 = smul.u32 4, %s22
          %s209 = ssub.s32 9, %s208
          %p210 = scmp.lt.s32.totalorder %s209, 4
          %s211 = scalar_select %p210, %s209, 4
          %s212 = smul.u32 64, %s211
          %s213 = smul.u32 %s212, 3
          %s214 = smul.u32 %s213, 2
          %p215 = scmp.lt.s32.totalorder %s21, 1
          %s216 = scalar_select %p215, %s21, 1
          %p217 = scmp.lt.s32.totalorder %s208, 8
          %s218 = scalar_select %p217, %s208, 8
          %s219 = smul.addr %s218, 6
          %s220 = smul.addr %s216, 54
          %s221 = sadd.s32 %s219, %s220
          %s222 = smul.addr %s221, 4
          %s223 = scalar_lea.vmem %s0, %s222
          %s224 = smul.u32 4, %s22
          %s225 = ssub.s32 9, %s224
          %p226 = scmp.lt.s32.totalorder %s225, 4
          %s227 = scalar_select %p226, %s225, 4
          %s228 = smul.u32 64, %s227
          %s229 = smul.u32 %s228, 3
          %s230 = smul.u32 %s229, 2
        $region32: #{tpu_custom_call.1} parent=27 // pred_fallthru
          _
        // Predicated region
        $region33: #{tpu_custom_call.1} parent=27 // pred_check
          %p231 = pneg %p80
        $region34: #{tpu_custom_call.1} parent=27 // pred_check_branch
          %233 = sbr.rel (%p231) target = $region36
        $region35: #{tpu_custom_call.1} parent=27 // pred_region
          %s234 = sadd.s32 %s22, 1
          %s235 = smul.u32 %s234, 4
          %p236 = scmp.lt.s32.totalorder %s21, 1
          %s237 = scalar_select %p236, %s21, 1
          %p238 = scmp.lt.s32.totalorder %s235, 8
          %s239 = scalar_select %p238, %s235, 8
          %s240 = smul.addr %s239, 6
          %s241 = smul.addr %s237, 54
          %s242 = sadd.s32 %s240, %s241
          %s243 = smul.addr %s242, 4
          %s244 = scalar_lea.vmem %s1, %s243
          %s245 = sadd.s32 %s22, 1
          %s246 = smul.u32 %s245, 4
        $region36: #{tpu_custom_call.1} parent=27 // pred_fallthru
          _
      $region28: #{tpu_custom_call.1} parent=5 // pred_fallthru
        _
      %p247 = scmp.le.s32.totalorder 1, %s14
      %p248 = scmp.lt.s32.totalorder %s14, 5
      %p249 = pnand %p247, %p248
      %p250 = pneg %p249
      // Predicated region
      $region37: #{tpu_custom_call.1} parent=5 // pred_check
        _
      $region38: #{tpu_custom_call.1} parent=5 // pred_check_branch
        %252 = sbr.rel (%p249) target = $region40
      $region39: #{tpu_custom_call.1} parent=5 // pred_region
        %s253 = ssub.s32 %s14, 1
        %s254 = smul.u32 4, %s24
        %s255 = ssub.s32 9, %s254
        %p256 = scmp.lt.s32.totalorder %s255, 4
        %s257 = scalar_select %p256, %s255, 4
        %s258 = smul.u32 64, %s257
        %s259 = smul.u32 %s258, 3
        %s260 = smul.u32 %s259, 2
        %p261 = scmp.lt.s32.totalorder %s23, 1
        %s262 = scalar_select %p261, %s23, 1
        %p263 = scmp.lt.s32.totalorder %s254, 8
        %s264 = scalar_select %p263, %s254, 8
        %s265 = smul.addr %s264, 6
        %s266 = smul.addr %s262, 54
        %s267 = sadd.s32 %s265, %s266
        %s268 = smul.addr %s267, 4
        %s269 = scalar_lea.vmem %s0, %s268
        %p270 = pneg %p54
        %p271 = pneg %p51
        %s272 = sadd.s32 %s24, 1
        %s273 = smul.u32 %s272, 4
        %p274 = scmp.lt.s32.totalorder %s23, 1
        %s275 = scalar_select %p274, %s23, 1
        %p276 = scmp.lt.s32.totalorder %s273, 8
        %s277 = scalar_select %p276, %s273, 8
        %s278 = smul.addr %s277, 6
        %s279 = smul.addr %s275, 54
        %s280 = sadd.s32 %s278, %s279
        %s281 = smul.addr %s280, 4
        %s282 = scalar_lea.vmem %s1, %s281
        %p283 = pneg %p86
        %p284 = pneg %p83
        %p285 = pneg %p107
        %p286 = pneg %p104
        %p287 = pneg %p128
        %p288 = pneg %p125
        %p289 = pneg %p149
        %p290 = pneg %p146
        %p291 = pneg %p177
        %p292 = pneg %p174
        %s293 = sand.u32 %s164, 1
        %s294 = scalar_lea.sflag [#allocation4], %s293
        %s295 = sand.u32 %s164, 1
        %s296 = smul.addr %s295, 32
        %s297 = scalar_lea.vmem [#allocation3], %s296
        %s298 = smul.u32 4, %s24
        %s299 = ssub.s32 9, %s298
        %p300 = scmp.lt.s32.totalorder %s299, 4
        %s301 = scalar_select %p300, %s299, 4
        %s302 = smul.u32 64, %s301
        %s303 = smul.u32 %s302, 3
        %s304 = smul.u32 %s303, 2
        %p305 = scmp.lt.s32.totalorder %s23, 1
        %s306 = scalar_select %p305, %s23, 1
        %p307 = scmp.lt.s32.totalorder %s298, 8
        %s308 = scalar_select %p307, %s298, 8
        %s309 = smul.addr %s308, 6
        %s310 = smul.addr %s306, 54
        %s311 = sadd.s32 %s309, %s310
        %s312 = smul.addr %s311, 4
        %s313 = scalar_lea.vmem %s0, %s312
        %s314 = smul.u32 4, %s24
        %s315 = ssub.s32 9, %s314
        %p316 = scmp.lt.s32.totalorder %s315, 4
        %s317 = scalar_select %p316, %s315, 4
        %s318 = smul.u32 64, %s317
        %s319 = smul.u32 %s318, 3
        %s320 = smul.u32 %s319, 2
        %s321 = sadd.s32 %s24, 1
        %s322 = smul.u32 %s321, 4
        %p323 = scmp.lt.s32.totalorder %s23, 1
        %s324 = scalar_select %p323, %s23, 1
        %p325 = scmp.lt.s32.totalorder %s322, 8
        %s326 = scalar_select %p325, %s322, 8
        %s327 = smul.addr %s326, 6
        %s328 = smul.addr %s324, 54
        %s329 = sadd.s32 %s327, %s328
        %s330 = smul.addr %s329, 4
        %s331 = scalar_lea.vmem %s1, %s330
        %s332 = sadd.s32 %s24, 1
        %s333 = smul.u32 %s332, 4
        %s334 = smul.u32 4, %s24
        %v336 = vld [vmem:[%s4] sm:$0x1]
        %v338 = vlaneseq
        %v339 = vshrl.u32 %v338, 7
        %v340 = vsub.s32 0, %v339
        %v341 = vrot.slane %v336, %v340
        %343 = vst [vmem:[#allocation2] sm:$0xff] %v341
        %344 = vst [vmem:[#allocation2 + $0x8] sm:$0xff] %v341
        %345 = vst [vmem:[#allocation2 + $0x10] sm:$0xff] %v341
        %346 = vst [vmem:[#allocation2 + $0x18] sm:$0xff] %v341
        %v347 = vld [vmem:[%s313] sm:$0xff]
        %v348 = vld [vmem:[%s313 + $0x18] sm:$0xff]
        %v349 = vld [vmem:[%s313 + $0x30] sm:$0xff]
        %v350 = vld [vmem:[%s313 + $0x48] sm:$0xff]
        %v351 = vld [vmem:[%s2] sm:$0xf]
        %v352 = vld [vmem:[%s2 + $0x4] sm:$0xf]
        %v353 = vld [vmem:[%s2 + $0x8] sm:$0xf]
        %v354 = vld [vmem:[%s2 + $0xc] sm:$0xf]
        %v355 = vld [vmem:[%s2 + $0x10] sm:$0xf]
        %v356 = vld [vmem:[%s2 + $0x14] sm:$0xf]
        %v357 = vld [vmem:[%s2 + $0x18] sm:$0xf]
        %v358 = vld [vmem:[%s2 + $0x1c] sm:$0xf]
        %v359 = vld [vmem:[%s2 + $0x20] sm:$0xf]
        %v360 = vld [vmem:[%s2 + $0x24] sm:$0xf]
        %v361 = vld [vmem:[%s2 + $0x28] sm:$0xf]
        %v362 = vld [vmem:[%s2 + $0x2c] sm:$0xf]
        %v363 = vld [vmem:[%s2 + $0x30] sm:$0xf]
        %v364 = vld [vmem:[%s2 + $0x34] sm:$0xf]
        %v365 = vld [vmem:[%s2 + $0x38] sm:$0xf]
        %v366 = vld [vmem:[%s2 + $0x3c] sm:$0xf]
        %v367 = vld [vmem:[%s2 + $0x40] sm:$0xf]
        %v368 = vld [vmem:[%s2 + $0x44] sm:$0xf]
        %v369 = vld [vmem:[%s2 + $0x48] sm:$0xf]
        %v370 = vld [vmem:[%s2 + $0x4c] sm:$0xf]
        %v371 = vld [vmem:[%s2 + $0x50] sm:$0xf]
        %v372 = vld [vmem:[%s2 + $0x54] sm:$0xf]
        %v373 = vld [vmem:[%s2 + $0x58] sm:$0xf]
        %v374 = vld [vmem:[%s2 + $0x5c] sm:$0xf]
        %v375 = vld [vmem:[%s2 + $0x60] sm:$0xf]
        %v376 = vld [vmem:[%s2 + $0x64] sm:$0xf]
        %v377 = vld [vmem:[%s2 + $0x68] sm:$0xf]
        %v378 = vld [vmem:[%s2 + $0x6c] sm:$0xf]
        %v379 = vld [vmem:[%s2 + $0x70] sm:$0xf]
        %v380 = vld [vmem:[%s2 + $0x74] sm:$0xf]
        %v381 = vld [vmem:[%s2 + $0x78] sm:$0xf]
        %v382 = vld [vmem:[%s2 + $0x7c] sm:$0xf]
        %v383 = vld [vmem:[#allocation2] sm:$0xff]
        %v384 = vld [vmem:[#allocation2 + $0x8] sm:$0xff]
        %v385 = vld [vmem:[#allocation2 + $0x10] sm:$0xff]
        %v386 = vld [vmem:[#allocation2 + $0x18] sm:$0xff]
        %v391 = vunpack.c.l.b16 %v347
        %v392 = vunpack.c.h.b16 %v347
        %v393 = vunpack.c.l.b16 %v348
        %v394 = vunpack.c.h.b16 %v348
        %v395 = vunpack.c.l.b16 %v349
        %v396 = vunpack.c.h.b16 %v349
        %v397 = vunpack.c.l.b16 %v350
        %v398 = vunpack.c.h.b16 %v350
        %v399 = vpack.c.b16 %v393, %v391
        %v400 = vpack.c.b16 %v394, %v392
        %v401 = vpack.c.b16 %v397, %v395
        %v402 = vpack.c.b16 %v398, %v396
        %v439 = vunpack.c.l.b16 %v351
        %v440 = vunpack.c.l.b16 %v352
        %v441 = vunpack.c.l.b16 %v353
        %v442 = vunpack.c.l.b16 %v354
        %v443 = vunpack.c.l.b16 %v355
        %v444 = vunpack.c.l.b16 %v356
        %v445 = vunpack.c.l.b16 %v357
        %v446 = vunpack.c.l.b16 %v358
        %v447 = vunpack.c.l.b16 %v359
        %v448 = vunpack.c.l.b16 %v360
        %v449 = vunpack.c.l.b16 %v361
        %v450 = vunpack.c.l.b16 %v362
        %v451 = vunpack.c.l.b16 %v363
        %v452 = vunpack.c.l.b16 %v364
        %v453 = vunpack.c.l.b16 %v365
        %v454 = vunpack.c.l.b16 %v366
        %v455 = vunpack.c.l.b16 %v367
        %v456 = vunpack.c.l.b16 %v368
        %v457 = vunpack.c.l.b16 %v369
        %v458 = vunpack.c.l.b16 %v370
        %v459 = vunpack.c.l.b16 %v371
        %v460 = vunpack.c.l.b16 %v372
        %v461 = vunpack.c.l.b16 %v373
        %v462 = vunpack.c.l.b16 %v374
        %v463 = vunpack.c.l.b16 %v375
        %v464 = vunpack.c.l.b16 %v376
        %v465 = vunpack.c.l.b16 %v377
        %v466 = vunpack.c.l.b16 %v378
        %v467 = vunpack.c.l.b16 %v379
        %v468 = vunpack.c.l.b16 %v380
        %v469 = vunpack.c.l.b16 %v381
        %v470 = vunpack.c.l.b16 %v382
        %v471 = vpack.c.b16 %v440, %v439
        %v472 = vpack.c.b16 %v442, %v441
        %v473 = vpack.c.b16 %v444, %v443
        %v474 = vpack.c.b16 %v446, %v445
        %v475 = vpack.c.b16 %v448, %v447
        %v476 = vpack.c.b16 %v450, %v449
        %v477 = vpack.c.b16 %v452, %v451
        %v478 = vpack.c.b16 %v454, %v453
        %v479 = vpack.c.b16 %v456, %v455
        %v480 = vpack.c.b16 %v458, %v457
        %v481 = vpack.c.b16 %v460, %v459
        %v482 = vpack.c.b16 %v462, %v461
        %v483 = vpack.c.b16 %v464, %v463
        %v484 = vpack.c.b16 %v466, %v465
        %v485 = vpack.c.b16 %v468, %v467
        %v486 = vpack.c.b16 %v470, %v469
        %503 = vmatprep.subr.bf16.mxu0 0
        %504 = vmatpush1.bf16.msra.mxu0 %v471
        %505 = vmatprep.subr.bf16.mxu0 0
        %506 = vmatpush1.bf16.msra.mxu0 %v472
        %507 = vmatprep.subr.bf16.mxu0 0
        %508 = vmatpush1.bf16.msra.mxu0 %v473
        %509 = vmatprep.subr.bf16.mxu0 0
        %510 = vmatpush1.bf16.msra.mxu0 %v474
        %511 = vmatprep.subr.bf16.mxu0 0
        %512 = vmatpush1.bf16.msra.mxu0 %v475
        %513 = vmatprep.subr.bf16.mxu0 0
        %514 = vmatpush1.bf16.msra.mxu0 %v476
        %515 = vmatprep.subr.bf16.mxu0 0
        %516 = vmatpush1.bf16.msra.mxu0 %v477
        %517 = vmatprep.subr.bf16.mxu0 0
        %518 = vmatpush1.bf16.msra.mxu0 %v478
        %519 = vmatprep.subr.bf16.mxu0 0
        %520 = vmatpush1.bf16.msra.mxu0 %v479
        %521 = vmatprep.subr.bf16.mxu0 0
        %522 = vmatpush1.bf16.msra.mxu0 %v480
        %523 = vmatprep.subr.bf16.mxu0 0
        %524 = vmatpush1.bf16.msra.mxu0 %v481
        %525 = vmatprep.subr.bf16.mxu0 0
        %526 = vmatpush1.bf16.msra.mxu0 %v482
        %527 = vmatprep.subr.bf16.mxu0 0
        %528 = vmatpush1.bf16.msra.mxu0 %v483
        %529 = vmatprep.subr.bf16.mxu0 0
        %530 = vmatpush1.bf16.msra.mxu0 %v484
        %531 = vmatprep.subr.bf16.mxu0 0
        %532 = vmatpush1.bf16.msra.mxu0 %v485
        %533 = vmatprep.subr.bf16.mxu0 0
        %534 = vmatpush1.bf16.msra.mxu0 %v486
        %535 = vmatprep.mubr.bf16.mxu0 %v400
        %536 = vmatmul.mubr.bf16.gmra.mrb[0].mxu0 %v399
        %v537 = vpop.f32.mrb[0].mxu0
        %v538 = vadd.f32 0.0, %v537
        %v539 = vpop.f32.mrb[0].mxu0
        %v540 = vpop.f32.mrb[0].mxu0
        %v541 = vadd.f32 0.0, %v540
        %v542 = vpop.f32.mrb[0].mxu0
        %543 = vmatprep.mubr.bf16.mxu0 %v402
        %544 = vmatmul.mubr.bf16.gmra.mrb[0].mxu0 %v401
        %v545 = vpop.f32.mrb[0].mxu0
        %v546 = vadd.f32 0.0, %v545
        %v547 = vpop.f32.mrb[0].mxu0
        %v548 = vpop.f32.mrb[0].mxu0
        %v549 = vadd.f32 0.0, %v548
        %v550 = vpop.f32.mrb[0].mxu0
        %551 = vdwg.mxu0
        %v552 = vadd.f32 %v383, %v538
        %v553 = vadd.f32 %v384, %v541
        %v554 = vadd.f32 %v385, %v546
        %v555 = vadd.f32 %v386, %v549
        %556 = vst [vmem:[#allocation2] sm:$0xff] %v552
        %557 = vst [vmem:[#allocation2 + $0x8] sm:$0xff] %v553
        %558 = vst [vmem:[#allocation2 + $0x10] sm:$0xff] %v554
        %559 = vst [vmem:[#allocation2 + $0x18] sm:$0xff] %v555
        %v560 = vld [vmem:[%s313] sm:$0xf]
        %v561 = vld [vmem:[%s313 + $0x8] sm:$0x1]
        %v562 = vld [vmem:[%s313 + $0x18] sm:$0xf]
        %v563 = vld [vmem:[%s313 + $0x20] sm:$0x1]
        %v564 = vld [vmem:[%s313 + $0x30] sm:$0xf]
        %v565 = vld [vmem:[%s313 + $0x38] sm:$0x1]
        %v566 = vld [vmem:[%s313 + $0x48] sm:$0xf]
        %v567 = vld [vmem:[%s313 + $0x50] sm:$0x1]
        %v568 = vld [vmem:[%s3] sm:$0xf]
        %v569 = vld [vmem:[%s3 + $0x4] sm:$0xf]
        %v570 = vld [vmem:[%s3 + $0x8] sm:$0xf]
        %v571 = vld [vmem:[%s3 + $0xc] sm:$0xf]
        %v572 = vld [vmem:[%s3 + $0x10] sm:$0xf]
        %v573 = vld [vmem:[%s3 + $0x14] sm:$0xf]
        %v574 = vld [vmem:[%s3 + $0x18] sm:$0xf]
        %v575 = vld [vmem:[%s3 + $0x1c] sm:$0xf]
        %v576 = vld [vmem:[%s3 + $0x20] sm:$0xf]
        %v577 = vld [vmem:[%s3 + $0x24] sm:$0xf]
        %v578 = vld [vmem:[%s3 + $0x28] sm:$0xf]
        %v579 = vld [vmem:[%s3 + $0x2c] sm:$0xf]
        %v580 = vld [vmem:[%s3 + $0x30] sm:$0xf]
        %v581 = vld [vmem:[%s3 + $0x34] sm:$0xf]
        %v582 = vld [vmem:[%s3 + $0x38] sm:$0xf]
        %v583 = vld [vmem:[%s3 + $0x3c] sm:$0xf]
        %vm584 = vsmask.f32 3328
        %vm585 = vsmask.f32 7440
        %vm586 = vmor %vm584, %vm585
        %v588 = vshrl.u32 %v560, 16
        %v590 = vrot.slane %v588, 4
        %v591 = vshll.u32 %v560, 16
        %v593 = vrot.slane %v591, 5
        %v594 = vor.u32 %v590, %v593
        %v595 = vrot.slane %v594, 4
        %v597 = vshll.u32 %v561, 16
        %v599 = vrot.slane %v597, 5
        %v600 = vsel %vm586, %v595, %v599
        %v602 = vshrl.u32 %v562, 16
        %v604 = vrot.slane %v602, 4
        %v605 = vshll.u32 %v562, 16
        %v607 = vrot.slane %v605, 5
        %v608 = vor.u32 %v604, %v607
        %v609 = vrot.slane %v608, 4
        %v611 = vshll.u32 %v563, 16
        %v613 = vrot.slane %v611, 5
        %v614 = vsel %vm586, %v609, %v613
        %v616 = vshrl.u32 %v564, 16
        %v618 = vrot.slane %v616, 4
        %v619 = vshll.u32 %v564, 16
        %v621 = vrot.slane %v619, 5
        %v622 = vor.u32 %v618, %v621
        %v623 = vrot.slane %v622, 4
        %v625 = vshll.u32 %v565, 16
        %v627 = vrot.slane %v625, 5
        %v628 = vsel %vm586, %v623, %v627
        %v630 = vshrl.u32 %v566, 16
        %v632 = vrot.slane %v630, 4
        %v633 = vshll.u32 %v566, 16
        %v635 = vrot.slane %v633, 5
        %v636 = vor.u32 %v632, %v635
        %v637 = vrot.slane %v636, 4
        %v639 = vshll.u32 %v567, 16
        %v641 = vrot.slane %v639, 5
        %v642 = vsel %vm586, %v637, %v641
        %v643 = vld [vmem:[#allocation2] sm:$0xff]
        %v644 = vld [vmem:[#allocation2 + $0x8] sm:$0xff]
        %v645 = vld [vmem:[#allocation2 + $0x10] sm:$0xff]
        %v646 = vld [vmem:[#allocation2 + $0x18] sm:$0xff]
        %v647 = vunpack.c.l.b16 %v600
        %v648 = vunpack.c.l.b16 %v614
        %v649 = vunpack.c.l.b16 %v628
        %v650 = vunpack.c.l.b16 %v642
        %v651 = vpack.c.b16 %v648, %v647
        %v652 = vpack.c.b16 %v650, %v649
        %v671 = vunpack.c.l.b16 %v568
        %v672 = vunpack.c.l.b16 %v569
        %v673 = vunpack.c.l.b16 %v570
        %v674 = vunpack.c.l.b16 %v571
        %v675 = vunpack.c.l.b16 %v572
        %v676 = vunpack.c.l.b16 %v573
        %v677 = vunpack.c.l.b16 %v574
        %v678 = vunpack.c.l.b16 %v575
        %v679 = vunpack.c.l.b16 %v576
        %v680 = vunpack.c.l.b16 %v577
        %v681 = vunpack.c.l.b16 %v578
        %v682 = vunpack.c.l.b16 %v579
        %v683 = vunpack.c.l.b16 %v580
        %v684 = vunpack.c.l.b16 %v581
        %v685 = vunpack.c.l.b16 %v582
        %v686 = vunpack.c.l.b16 %v583
        %v687 = vpack.c.b16 %v672, %v671
        %v688 = vpack.c.b16 %v674, %v673
        %v689 = vpack.c.b16 %v676, %v675
        %v690 = vpack.c.b16 %v678, %v677
        %v691 = vpack.c.b16 %v680, %v679
        %v692 = vpack.c.b16 %v682, %v681
        %v693 = vpack.c.b16 %v684, %v683
        %v694 = vpack.c.b16 %v686, %v685
        %703 = vmatprep.subr.bf16.mxu0 0
        %704 = vmatpush1.bf16.msra.mxu0 %v687
        %705 = vmatprep.subr.bf16.mxu0 0
        %706 = vmatpush1.bf16.msra.mxu0 %v688
        %707 = vmatprep.subr.bf16.mxu0 0
        %708 = vmatpush1.bf16.msra.mxu0 %v689
        %709 = vmatprep.subr.bf16.mxu0 0
        %710 = vmatpush1.bf16.msra.mxu0 %v690
        %711 = vmatprep.subr.bf16.mxu0 0
        %712 = vmatpush1.bf16.msra.mxu0 %v691
        %713 = vmatprep.subr.bf16.mxu0 0
        %714 = vmatpush1.bf16.msra.mxu0 %v692
        %715 = vmatprep.subr.bf16.mxu0 0
        %716 = vmatpush1.bf16.msra.mxu0 %v693
        %717 = vmatprep.subr.bf16.mxu0 0
        %718 = vmatpush1.bf16.msra.mxu0 %v694
        %719 = vmatprep.subr.bf16.mxu0 0
        %720 = vmatpush1.bf16.msra.mxu0 0
        %721 = vmatprep.subr.bf16.mxu0 0
        %722 = vmatpush1.bf16.msra.mxu0 0
        %723 = vmatprep.subr.bf16.mxu0 0
        %724 = vmatpush1.bf16.msra.mxu0 0
        %725 = vmatprep.subr.bf16.mxu0 0
        %726 = vmatpush1.bf16.msra.mxu0 0
        %727 = vmatprep.subr.bf16.mxu0 0
        %728 = vmatpush1.bf16.msra.mxu0 0
        %729 = vmatprep.subr.bf16.mxu0 0
        %730 = vmatpush1.bf16.msra.mxu0 0
        %731 = vmatprep.subr.bf16.mxu0 0
        %732 = vmatpush1.bf16.msra.mxu0 0
        %733 = vmatprep.subr.bf16.mxu0 0
        %734 = vmatpush1.bf16.msra.mxu0 0
        %735 = vmatprep.mubr.bf16.mxu0 0
        %736 = vmatmul.mubr.bf16.gmra.mrb[0].mxu0 %v651
        %v737 = vpop.f32.mrb[0].mxu0
        %v738 = vadd.f32 0.0, %v737
        %v739 = vpop.f32.mrb[0].mxu0
        %v740 = vpop.f32.mrb[0].mxu0
        %v741 = vadd.f32 0.0, %v740
        %v742 = vpop.f32.mrb[0].mxu0
        %743 = vmatprep.mubr.bf16.mxu0 0
        %744 = vmatmul.mubr.bf16.gmra.mrb[0].mxu0 %v652
        %v745 = vpop.f32.mrb[0].mxu0
        %v746 = vadd.f32 0.0, %v745
        %v747 = vpop.f32.mrb[0].mxu0
        %v748 = vpop.f32.mrb[0].mxu0
        %v749 = vadd.f32 0.0, %v748
        %v750 = vpop.f32.mrb[0].mxu0
        %751 = vdwg.mxu0
        %v752 = vadd.f32 %v643, %v738
        %v753 = vadd.f32 %v644, %v741
        %v754 = vadd.f32 %v645, %v746
        %v755 = vadd.f32 %v646, %v749
        %756 = vst [vmem:[#allocation2] sm:$0xff] %v752
        %757 = vst [vmem:[#allocation2 + $0x8] sm:$0xff] %v753
        %758 = vst [vmem:[#allocation2 + $0x10] sm:$0xff] %v754
        %759 = vst [vmem:[#allocation2 + $0x18] sm:$0xff] %v755
        %v760 = vld [vmem:[%s313 + $0x8] sm:$0xff]
        %v761 = vld [vmem:[%s313 + $0x10] sm:$0x11]
        %v762 = vld [vmem:[%s313 + $0x20] sm:$0xff]
        %v763 = vld [vmem:[%s313 + $0x28] sm:$0x11]
        %v764 = vld [vmem:[%s313 + $0x38] sm:$0xff]
        %v765 = vld [vmem:[%s313 + $0x40] sm:$0x11]
        %v766 = vld [vmem:[%s313 + $0x50] sm:$0xff]
        %v767 = vld [vmem:[%s313 + $0x58] sm:$0x11]
        %s768 = scalar_lea.vmem %s2, 128
        %v769 = vld [vmem:[%s768] sm:$0xf]
        %v770 = vld [vmem:[%s768 + $0x4] sm:$0xf]
        %v771 = vld [vmem:[%s768 + $0x8] sm:$0xf]
        %v772 = vld [vmem:[%s768 + $0xc] sm:$0xf]
        %v773 = vld [vmem:[%s768 + $0x10] sm:$0xf]
        %v774 = vld [vmem:[%s768 + $0x14] sm:$0xf]
        %v775 = vld [vmem:[%s768 + $0x18] sm:$0xf]
        %v776 = vld [vmem:[%s768 + $0x1c] sm:$0xf]
        %v777 = vld [vmem:[%s768 + $0x20] sm:$0xf]
        %v778 = vld [vmem:[%s768 + $0x24] sm:$0xf]
        %v779 = vld [vmem:[%s768 + $0x28] sm:$0xf]
        %v780 = vld [vmem:[%s768 + $0x2c] sm:$0xf]
        %v781 = vld [vmem:[%s768 + $0x30] sm:$0xf]
        %v782 = vld [vmem:[%s768 + $0x34] sm:$0xf]
        %v783 = vld [vmem:[%s768 + $0x38] sm:$0xf]
        %v784 = vld [vmem:[%s768 + $0x3c] sm:$0xf]
        %v785 = vld [vmem:[%s768 + $0x40] sm:$0xf]
        %v786 = vld [vmem:[%s768 + $0x44] sm:$0xf]
        %v787 = vld [vmem:[%s768 + $0x48] sm:$0xf]
        %v788 = vld [vmem:[%s768 + $0x4c] sm:$0xf]
        %v789 = vld [vmem:[%s768 + $0x50] sm:$0xf]
        %v790 = vld [vmem:[%s768 + $0x54] sm:$0xf]
        %v791 = vld [vmem:[%s768 + $0x58] sm:$0xf]
        %v792 = vld [vmem:[%s768 + $0x5c] sm:$0xf]
        %v793 = vld [vmem:[%s768 + $0x60] sm:$0xf]
        %v794 = vld [vmem:[%s768 + $0x64] sm:$0xf]
        %v795 = vld [vmem:[%s768 + $0x68] sm:$0xf]
        %v796 = vld [vmem:[%s768 + $0x6c] sm:$0xf]
        %v797 = vld [vmem:[%s768 + $0x70] sm:$0xf]
        %v798 = vld [vmem:[%s768 + $0x74] sm:$0xf]
        %v799 = vld [vmem:[%s768 + $0x78] sm:$0xf]
        %v800 = vld [vmem:[%s768 + $0x7c] sm:$0xf]
        %v802 = vshrl.u32 %v760, 16
        %v804 = vrot.slane %v802, 4
        %v805 = vshll.u32 %v760, 16
        %v807 = vrot.slane %v805, 5
        %v808 = vor.u32 %v804, %v807
        %v809 = vrot.slane %v808, 4
        %v811 = vshll.u32 %v761, 16
        %v813 = vrot.slane %v811, 5
        %v814 = vsel %vm586, %v809, %v813
        %v816 = vshrl.u32 %v762, 16
        %v818 = vrot.slane %v816, 4
        %v819 = vshll.u32 %v762, 16
        %v821 = vrot.slane %v819, 5
        %v822 = vor.u32 %v818, %v821
        %v823 = vrot.slane %v822, 4
        %v825 = vshll.u32 %v763, 16
        %v827 = vrot.slane %v825, 5
        %v828 = vsel %vm586, %v823, %v827
        %v830 = vshrl.u32 %v764, 16
        %v832 = vrot.slane %v830, 4
        %v833 = vshll.u32 %v764, 16
        %v835 = vrot.slane %v833, 5
        %v836 = vor.u32 %v832, %v835
        %v837 = vrot.slane %v836, 4
        %v839 = vshll.u32 %v765, 16
        %v841 = vrot.slane %v839, 5
        %v842 = vsel %vm586, %v837, %v841
        %v844 = vshrl.u32 %v766, 16
        %v846 = vrot.slane %v844, 4
        %v847 = vshll.u32 %v766, 16
        %v849 = vrot.slane %v847, 5
        %v850 = vor.u32 %v846, %v849
        %v851 = vrot.slane %v850, 4
        %v853 = vshll.u32 %v767, 16
        %v855 = vrot.slane %v853, 5
        %v856 = vsel %vm586, %v851, %v855
        %v857 = vld [vmem:[#allocation2] sm:$0xff]
        %v858 = vld [vmem:[#allocation2 + $0x8] sm:$0xff]
        %v859 = vld [vmem:[#allocation2 + $0x10] sm:$0xff]
        %v860 = vld [vmem:[#allocation2 + $0x18] sm:$0xff]
        %v861 = vunpack.c.l.b16 %v814
        %v862 = vunpack.c.h.b16 %v814
        %v863 = vunpack.c.l.b16 %v828
        %v864 = vunpack.c.h.b16 %v828
        %v865 = vunpack.c.l.b16 %v842
        %v866 = vunpack.c.h.b16 %v842
        %v867 = vunpack.c.l.b16 %v856
        %v868 = vunpack.c.h.b16 %v856
        %v869 = vpack.c.b16 %v863, %v861
        %v870 = vpack.c.b16 %v864, %v862
        %v871 = vpack.c.b16 %v867, %v865
        %v872 = vpack.c.b16 %v868, %v866
        %v909 = vunpack.c.l.b16 %v769
        %v910 = vunpack.c.l.b16 %v770
        %v911 = vunpack.c.l.b16 %v771
        %v912 = vunpack.c.l.b16 %v772
        %v913 = vunpack.c.l.b16 %v773
        %v914 = vunpack.c.l.b16 %v774
        %v915 = vunpack.c.l.b16 %v775
        %v916 = vunpack.c.l.b16 %v776
        %v917 = vunpack.c.l.b16 %v777
        %v918 = vunpack.c.l.b16 %v778
        %v919 = vunpack.c.l.b16 %v779
        %v920 = vunpack.c.l.b16 %v780
        %v921 = vunpack.c.l.b16 %v781
        %v922 = vunpack.c.l.b16 %v782
        %v923 = vunpack.c.l.b16 %v783
        %v924 = vunpack.c.l.b16 %v784
        %v925 = vunpack.c.l.b16 %v785
        %v926 = vunpack.c.l.b16 %v786
        %v927 = vunpack.c.l.b16 %v787
        %v928 = vunpack.c.l.b16 %v788
        %v929 = vunpack.c.l.b16 %v789
        %v930 = vunpack.c.l.b16 %v790
        %v931 = vunpack.c.l.b16 %v791
        %v932 = vunpack.c.l.b16 %v792
        %v933 = vunpack.c.l.b16 %v793
        %v934 = vunpack.c.l.b16 %v794
        %v935 = vunpack.c.l.b16 %v795
        %v936 = vunpack.c.l.b16 %v796
        %v937 = vunpack.c.l.b16 %v797
        %v938 = vunpack.c.l.b16 %v798
        %v939 = vunpack.c.l.b16 %v799
        %v940 = vunpack.c.l.b16 %v800
        %v941 = vpack.c.b16 %v910, %v909
        %v942 = vpack.c.b16 %v912, %v911
        %v943 = vpack.c.b16 %v914, %v913
        %v944 = vpack.c.b16 %v916, %v915
        %v945 = vpack.c.b16 %v918, %v917
        %v946 = vpack.c.b16 %v920, %v919
        %v947 = vpack.c.b16 %v922, %v921
        %v948 = vpack.c.b16 %v924, %v923
        %v949 = vpack.c.b16 %v926, %v925
        %v950 = vpack.c.b16 %v928, %v927
        %v951 = vpack.c.b16 %v930, %v929
        %v952 = vpack.c.b16 %v932, %v931
        %v953 = vpack.c.b16 %v934, %v933
        %v954 = vpack.c.b16 %v936, %v935
        %v955 = vpack.c.b16 %v938, %v937
        %v956 = vpack.c.b16 %v940, %v939
        %973 = vmatprep.subr.bf16.mxu0 0
        %974 = vmatpush1.bf16.msra.mxu0 %v941
        %975 = vmatprep.subr.bf16.mxu0 0
        %976 = vmatpush1.bf16.msra.mxu0 %v942
        %977 = vmatprep.subr.bf16.mxu0 0
        %978 = vmatpush1.bf16.msra.mxu0 %v943
        %979 = vmatprep.subr.bf16.mxu0 0
        %980 = vmatpush1.bf16.msra.mxu0 %v944
        %981 = vmatprep.subr.bf16.mxu0 0
        %982 = vmatpush1.bf16.msra.mxu0 %v945
        %983 = vmatprep.subr.bf16.mxu0 0
        %984 = vmatpush1.bf16.msra.mxu0 %v946
        %985 = vmatprep.subr.bf16.mxu0 0
        %986 = vmatpush1.bf16.msra.mxu0 %v947
        %987 = vmatprep.subr.bf16.mxu0 0
        %988 = vmatpush1.bf16.msra.mxu0 %v948
        %989 = vmatprep.subr.bf16.mxu0 0
        %990 = vmatpush1.bf16.msra.mxu0 %v949
        %991 = vmatprep.subr.bf16.mxu0 0
        %992 = vmatpush1.bf16.msra.mxu0 %v950
        %993 = vmatprep.subr.bf16.mxu0 0
        %994 = vmatpush1.bf16.msra.mxu0 %v951
        %995 = vmatprep.subr.bf16.mxu0 0
        %996 = vmatpush1.bf16.msra.mxu0 %v952
        %997 = vmatprep.subr.bf16.mxu0 0
        %998 = vmatpush1.bf16.msra.mxu0 %v953
        %999 = vmatprep.subr.bf16.mxu0 0
        %1000 = vmatpush1.bf16.msra.mxu0 %v954
        %1001 = vmatprep.subr.bf16.mxu0 0
        %1002 = vmatpush1.bf16.msra.mxu0 %v955
        %1003 = vmatprep.subr.bf16.mxu0 0
        %1004 = vmatpush1.bf16.msra.mxu0 %v956
        %1005 = vmatprep.mubr.bf16.mxu0 %v870
        %1006 = vmatmul.mubr.bf16.gmra.mrb[0].mxu0 %v869
        %v1007 = vpop.f32.mrb[0].mxu0
        %v1008 = vadd.f32 0.0, %v1007
        %v1009 = vpop.f32.mrb[0].mxu0
        %v1010 = vpop.f32.mrb[0].mxu0
        %v1011 = vadd.f32 0.0, %v1010
        %v1012 = vpop.f32.mrb[0].mxu0
        %1013 = vmatprep.mubr.bf16.mxu0 %v872
        %1014 = vmatmul.mubr.bf16.gmra.mrb[0].mxu0 %v871
        %v1015 = vpop.f32.mrb[0].mxu0
        %v1016 = vadd.f32 0.0, %v1015
        %v1017 = vpop.f32.mrb[0].mxu0
        %v1018 = vpop.f32.mrb[0].mxu0
        %v1019 = vadd.f32 0.0, %v1018
        %v1020 = vpop.f32.mrb[0].mxu0
        %1021 = vdwg.mxu0
        %v1022 = vadd.f32 %v857, %v1008
        %v1023 = vadd.f32 %v858, %v1011
        %v1024 = vadd.f32 %v859, %v1016
        %v1025 = vadd.f32 %v860, %v1019
        %1026 = vst [vmem:[#allocation2] sm:$0xff] %v1022
        %1027 = vst [vmem:[#allocation2 + $0x8] sm:$0xff] %v1023
        %1028 = vst [vmem:[#allocation2 + $0x10] sm:$0xff] %v1024
        %1029 = vst [vmem:[#allocation2 + $0x18] sm:$0xff] %v1025
        %v1030 = vld [vmem:[%s313 + $0x8] sm:$0xe]
        %v1031 = vld [vmem:[%s313 + $0x10] sm:$0x1]
        %v1032 = vld [vmem:[%s313 + $0x20] sm:$0xe]
        %v1033 = vld [vmem:[%s313 + $0x28] sm:$0x1]
        %v1034 = vld [vmem:[%s313 + $0x38] sm:$0xe]
        %v1035 = vld [vmem:[%s313 + $0x40] sm:$0x1]
        %v1036 = vld [vmem:[%s313 + $0x50] sm:$0xe]
        %v1037 = vld [vmem:[%s313 + $0x58] sm:$0x1]
        %s1038 = scalar_lea.vmem %s3, 64
        %v1039 = vld [vmem:[%s1038] sm:$0xf]
        %v1040 = vld [vmem:[%s1038 + $0x4] sm:$0xf]
        %v1041 = vld [vmem:[%s1038 + $0x8] sm:$0xf]
        %v1042 = vld [vmem:[%s1038 + $0xc] sm:$0xf]
        %v1043 = vld [vmem:[%s1038 + $0x10] sm:$0xf]
        %v1044 = vld [vmem:[%s1038 + $0x14] sm:$0xf]
        %v1045 = vld [vmem:[%s1038 + $0x18] sm:$0xf]
        %v1046 = vld [vmem:[%s1038 + $0x1c] sm:$0xf]
        %v1047 = vld [vmem:[%s1038 + $0x20] sm:$0xf]
        %v1048 = vld [vmem:[%s1038 + $0x24] sm:$0xf]
        %v1049 = vld [vmem:[%s1038 + $0x28] sm:$0xf]
        %v1050 = vld [vmem:[%s1038 + $0x2c] sm:$0xf]
        %v1051 = vld [vmem:[%s1038 + $0x30] sm:$0xf]
        %v1052 = vld [vmem:[%s1038 + $0x34] sm:$0xf]
        %v1053 = vld [vmem:[%s1038 + $0x38] sm:$0xf]
        %v1054 = vld [vmem:[%s1038 + $0x3c] sm:$0xf]
        %vm1063 = vcmask 1042432
        %vm1064 = vcmask 1046532
        %vm1065 = vmor %vm1063, %vm1064
        %v1066 = vrot.slane %v1030, 5
        %v1067 = vrot.slane %v1066, 4
        %v1068 = vrot.slane %v1031, 5
        %v1069 = vsel %vm1065, %v1067, %v1068
        %v1070 = vrot.slane %v1032, 5
        %v1071 = vrot.slane %v1070, 4
        %v1072 = vrot.slane %v1033, 5
        %v1073 = vsel %vm1065, %v1071, %v1072
        %v1074 = vrot.slane %v1034, 5
        %v1075 = vrot.slane %v1074, 4
        %v1076 = vrot.slane %v1035, 5
        %v1077 = vsel %vm1065, %v1075, %v1076
        %v1078 = vrot.slane %v1036, 5
        %v1079 = vrot.slane %v1078, 4
        %v1080 = vrot.slane %v1037, 5
        %v1081 = vsel %vm1065, %v1079, %v1080
        %v1082 = vld [vmem:[#allocation2] sm:$0xff]
        %v1083 = vld [vmem:[#allocation2 + $0x8] sm:$0xff]
        %v1084 = vld [vmem:[#allocation2 + $0x10] sm:$0xff]
        %v1085 = vld [vmem:[#allocation2 + $0x18] sm:$0xff]
        %v1086 = vunpack.c.l.b16 %v1069
        %v1087 = vunpack.c.l.b16 %v1073
        %v1088 = vunpack.c.l.b16 %v1077
        %v1089 = vunpack.c.l.b16 %v1081
        %v1090 = vpack.c.b16 %v1087, %v1086
        %v1091 = vpack.c.b16 %v1089, %v1088
        %v1110 = vunpack.c.l.b16 %v1039
        %v1111 = vunpack.c.l.b16 %v1040
        %v1112 = vunpack.c.l.b16 %v1041
        %v1113 = vunpack.c.l.b16 %v1042
        %v1114 = vunpack.c.l.b16 %v1043
        %v1115 = vunpack.c.l.b16 %v1044
        %v1116 = vunpack.c.l.b16 %v1045
        %v1117 = vunpack.c.l.b16 %v1046
        %v1118 = vunpack.c.l.b16 %v1047
        %v1119 = vunpack.c.l.b16 %v1048
        %v1120 = vunpack.c.l.b16 %v1049
        %v1121 = vunpack.c.l.b16 %v1050
        %v1122 = vunpack.c.l.b16 %v1051
        %v1123 = vunpack.c.l.b16 %v1052
        %v1124 = vunpack.c.l.b16 %v1053
        %v1125 = vunpack.c.l.b16 %v1054
        %v1126 = vpack.c.b16 %v1111, %v1110
        %v1127 = vpack.c.b16 %v1113, %v1112
        %v1128 = vpack.c.b16 %v1115, %v1114
        %v1129 = vpack.c.b16 %v1117, %v1116
        %v1130 = vpack.c.b16 %v1119, %v1118
        %v1131 = vpack.c.b16 %v1121, %v1120
        %v1132 = vpack.c.b16 %v1123, %v1122
        %v1133 = vpack.c.b16 %v1125, %v1124
        %1142 = vmatprep.subr.bf16.mxu0 0
        %1143 = vmatpush1.bf16.msra.mxu0 %v1126
        %1144 = vmatprep.subr.bf16.mxu0 0
        %1145 = vmatpush1.bf16.msra.mxu0 %v1127
        %1146 = vmatprep.subr.bf16.mxu0 0
        %1147 = vmatpush1.bf16.msra.mxu0 %v1128
        %1148 = vmatprep.subr.bf16.mxu0 0
        %1149 = vmatpush1.bf16.msra.mxu0 %v1129
        %1150 = vmatprep.subr.bf16.mxu0 0
        %1151 = vmatpush1.bf16.msra.mxu0 %v1130
        %1152 = vmatprep.subr.bf16.mxu0 0
        %1153 = vmatpush1.bf16.msra.mxu0 %v1131
        %1154 = vmatprep.subr.bf16.mxu0 0
        %1155 = vmatpush1.bf16.msra.mxu0 %v1132
        %1156 = vmatprep.subr.bf16.mxu0 0
        %1157 = vmatpush1.bf16.msra.mxu0 %v1133
        %1158 = vmatprep.subr.bf16.mxu0 0
        %1159 = vmatpush1.bf16.msra.mxu0 0
        %1160 = vmatprep.subr.bf16.mxu0 0
        %1161 = vmatpush1.bf16.msra.mxu0 0
        %1162 = vmatprep.subr.bf16.mxu0 0
        %1163 = vmatpush1.bf16.msra.mxu0 0
        %1164 = vmatprep.subr.bf16.mxu0 0
        %1165 = vmatpush1.bf16.msra.mxu0 0
        %1166 = vmatprep.subr.bf16.mxu0 0
        %1167 = vmatpush1.bf16.msra.mxu0 0
        %1168 = vmatprep.subr.bf16.mxu0 0
        %1169 = vmatpush1.bf16.msra.mxu0 0
        %1170 = vmatprep.subr.bf16.mxu0 0
        %1171 = vmatpush1.bf16.msra.mxu0 0
        %1172 = vmatprep.subr.bf16.mxu0 0
        %1173 = vmatpush1.bf16.msra.mxu0 0
        %1174 = vmatprep.mubr.bf16.mxu0 0
        %1175 = vmatmul.mubr.bf16.gmra.mrb[0].mxu0 %v1090
        %v1176 = vpop.f32.mrb[0].mxu0
        %v1177 = vadd.f32 0.0, %v1176
        %v1178 = vpop.f32.mrb[0].mxu0
        %v1179 = vpop.f32.mrb[0].mxu0
        %v1180 = vadd.f32 0.0, %v1179
        %v1181 = vpop.f32.mrb[0].mxu0
        %1182 = vmatprep.mubr.bf16.mxu0 0
        %1183 = vmatmul.mubr.bf16.gmra.mrb[0].mxu0 %v1091
        %v1184 = vpop.f32.mrb[0].mxu0
        %v1185 = vadd.f32 0.0, %v1184
        %v1186 = vpop.f32.mrb[0].mxu0
        %v1187 = vpop.f32.mrb[0].mxu0
        %v1188 = vadd.f32 0.0, %v1187
        %v1189 = vpop.f32.mrb[0].mxu0
        %1190 = vdwg.mxu0
        %v1191 = vadd.f32 %v1082, %v1177
        %v1192 = vadd.f32 %v1083, %v1180
        %v1193 = vadd.f32 %v1084, %v1185
        %v1194 = vadd.f32 %v1085, %v1188
        %1195 = vst [vmem:[#allocation2] sm:$0xff] %v1191
        %1196 = vst [vmem:[#allocation2 + $0x8] sm:$0xff] %v1192
        %1197 = vst [vmem:[#allocation2 + $0x10] sm:$0xff] %v1193
        %1198 = vst [vmem:[#allocation2 + $0x18] sm:$0xff] %v1194
        %s1199 = scalar_lea.vmem %s313, 24
        %v1200 = vld [vmem:[%s1199] sm:$0xff]
        %v1201 = vld [vmem:[%s1199 + $0x18] sm:$0xff]
        %v1202 = vld [vmem:[%s1199 + $0x30] sm:$0xff]
        %s1203 = scalar_lea.vmem %s2, 256
        %v1204 = vld [vmem:[%s1203] sm:$0xf]
        %v1205 = vld [vmem:[%s1203 + $0x4] sm:$0xf]
        %v1206 = vld [vmem:[%s1203 + $0x8] sm:$0xf]
        %v1207 = vld [vmem:[%s1203 + $0xc] sm:$0xf]
        %v1208 = vld [vmem:[%s1203 + $0x10] sm:$0xf]
        %v1209 = vld [vmem:[%s1203 + $0x14] sm:$0xf]
        %v1210 = vld [vmem:[%s1203 + $0x18] sm:$0xf]
        %v1211 = vld [vmem:[%s1203 + $0x1c] sm:$0xf]
        %v1212 = vld [vmem:[%s1203 + $0x20] sm:$0xf]
        %v1213 = vld [vmem:[%s1203 + $0x24] sm:$0xf]
        %v1214 = vld [vmem:[%s1203 + $0x28] sm:$0xf]
        %v1215 = vld [vmem:[%s1203 + $0x2c] sm:$0xf]
        %v1216 = vld [vmem:[%s1203 + $0x30] sm:$0xf]
        %v1217 = vld [vmem:[%s1203 + $0x34] sm:$0xf]
        %v1218 = vld [vmem:[%s1203 + $0x38] sm:$0xf]
        %v1219 = vld [vmem:[%s1203 + $0x3c] sm:$0xf]
        %v1220 = vld [vmem:[%s1203 + $0x40] sm:$0xf]
        %v1221 = vld [vmem:[%s1203 + $0x44] sm:$0xf]
        %v1222 = vld [vmem:[%s1203 + $0x48] sm:$0xf]
        %v1223 = vld [vmem:[%s1203 + $0x4c] sm:$0xf]
        %v1224 = vld [vmem:[%s1203 + $0x50] sm:$0xf]
        %v1225 = vld [vmem:[%s1203 + $0x54] sm:$0xf]
        %v1226 = vld [vmem:[%s1203 + $0x58] sm:$0xf]
        %v1227 = vld [vmem:[%s1203 + $0x5c] sm:$0xf]
        %v1228 = vld [vmem:[%s1203 + $0x60] sm:$0xf]
        %v1229 = vld [vmem:[%s1203 + $0x64] sm:$0xf]
        %v1230 = vld [vmem:[%s1203 + $0x68] sm:$0xf]
        %v1231 = vld [vmem:[%s1203 + $0x6c] sm:$0xf]
        %v1232 = vld [vmem:[%s1203 + $0x70] sm:$0xf]
        %v1233 = vld [vmem:[%s1203 + $0x74] sm:$0xf]
        %v1234 = vld [vmem:[%s1203 + $0x78] sm:$0xf]
        %v1235 = vld [vmem:[%s1203 + $0x7c] sm:$0xf]
        %v1236 = vld [vmem:[#allocation2] sm:$0xff]
        %v1237 = vld [vmem:[#allocation2 + $0x8] sm:$0xff]
        %v1238 = vld [vmem:[#allocation2 + $0x10] sm:$0xff]
        %v1242 = vunpack.c.l.b16 %v1200
        %v1243 = vunpack.c.h.b16 %v1200
        %v1244 = vunpack.c.l.b16 %v1201
        %v1245 = vunpack.c.h.b16 %v1201
        %v1246 = vunpack.c.l.b16 %v1202
        %v1247 = vunpack.c.h.b16 %v1202
        %v1248 = vpack.c.b16 %v1244, %v1242
        %v1249 = vpack.c.b16 %v1245, %v1243
        %v1250 = vpack.c.b16 %v1246, %v1246
        %v1251 = vpack.c.b16 %v1247, %v1247
        %v1288 = vunpack.c.l.b16 %v1204
        %v1289 = vunpack.c.l.b16 %v1205
        %v1290 = vunpack.c.l.b16 %v1206
        %v1291 = vunpack.c.l.b16 %v1207
        %v1292 = vunpack.c.l.b16 %v1208
        %v1293 = vunpack.c.l.b16 %v1209
        %v1294 = vunpack.c.l.b16 %v1210
        %v1295 = vunpack.c.l.b16 %v1211
        %v1296 = vunpack.c.l.b16 %v1212
        %v1297 = vunpack.c.l.b16 %v1213
        %v1298 = vunpack.c.l.b16 %v1214
        %v1299 = vunpack.c.l.b16 %v1215
        %v1300 = vunpack.c.l.b16 %v1216
        %v1301 = vunpack.c.l.b16 %v1217
        %v1302 = vunpack.c.l.b16 %v1218
        %v1303 = vunpack.c.l.b16 %v1219
        %v1304 = vunpack.c.l.b16 %v1220
        %v1305 = vunpack.c.l.b16 %v1221
        %v1306 = vunpack.c.l.b16 %v1222
        %v1307 = vunpack.c.l.b16 %v1223
        %v1308 = vunpack.c.l.b16 %v1224
        %v1309 = vunpack.c.l.b16 %v1225
        %v1310 = vunpack.c.l.b16 %v1226
        %v1311 = vunpack.c.l.b16 %v1227
        %v1312 = vunpack.c.l.b16 %v1228
        %v1313 = vunpack.c.l.b16 %v1229
        %v1314 = vunpack.c.l.b16 %v1230
        %v1315 = vunpack.c.l.b16 %v1231
        %v1316 = vunpack.c.l.b16 %v1232
        %v1317 = vunpack.c.l.b16 %v1233
        %v1318 = vunpack.c.l.b16 %v1234
        %v1319 = vunpack.c.l.b16 %v1235
        %v1320 = vpack.c.b16 %v1289, %v1288
        %v1321 = vpack.c.b16 %v1291, %v1290
        %v1322 = vpack.c.b16 %v1293, %v1292
        %v1323 = vpack.c.b16 %v1295, %v1294
        %v1324 = vpack.c.b16 %v1297, %v1296
        %v1325 = vpack.c.b16 %v1299, %v1298
        %v1326 = vpack.c.b16 %v1301, %v1300
        %v1327 = vpack.c.b16 %v1303, %v1302
        %v1328 = vpack.c.b16 %v1305, %v1304
        %v1329 = vpack.c.b16 %v1307, %v1306
        %v1330 = vpack.c.b16 %v1309, %v1308
        %v1331 = vpack.c.b16 %v1311, %v1310
        %v1332 = vpack.c.b16 %v1313, %v1312
        %v1333 = vpack.c.b16 %v1315, %v1314
        %v1334 = vpack.c.b16 %v1317, %v1316
        %v1335 = vpack.c.b16 %v1319, %v1318
        %1352 = vmatprep.subr.bf16.mxu0 0
        %1353 = vmatpush1.bf16.msra.mxu0 %v1320
        %1354 = vmatprep.subr.bf16.mxu0 0
        %1355 = vmatpush1.bf16.msra.mxu0 %v1321
        %1356 = vmatprep.subr.bf16.mxu0 0
        %1357 = vmatpush1.bf16.msra.mxu0 %v1322
        %1358 = vmatprep.subr.bf16.mxu0 0
        %1359 = vmatpush1.bf16.msra.mxu0 %v1323
        %1360 = vmatprep.subr.bf16.mxu0 0
        %1361 = vmatpush1.bf16.msra.mxu0 %v1324
        %1362 = vmatprep.subr.bf16.mxu0 0
        %1363 = vmatpush1.bf16.msra.mxu0 %v1325
        %1364 = vmatprep.subr.bf16.mxu0 0
        %1365 = vmatpush1.bf16.msra.mxu0 %v1326
        %1366 = vmatprep.subr.bf16.mxu0 0
        %1367 = vmatpush1.bf16.msra.mxu0 %v1327
        %1368 = vmatprep.subr.bf16.mxu0 0
        %1369 = vmatpush1.bf16.msra.mxu0 %v1328
        %1370 = vmatprep.subr.bf16.mxu0 0
        %1371 = vmatpush1.bf16.msra.mxu0 %v1329
        %1372 = vmatprep.subr.bf16.mxu0 0
        %1373 = vmatpush1.bf16.msra.mxu0 %v1330
        %1374 = vmatprep.subr.bf16.mxu0 0
        %1375 = vmatpush1.bf16.msra.mxu0 %v1331
        %1376 = vmatprep.subr.bf16.mxu0 0
        %1377 = vmatpush1.bf16.msra.mxu0 %v1332
        %1378 = vmatprep.subr.bf16.mxu0 0
        %1379 = vmatpush1.bf16.msra.mxu0 %v1333
        %1380 = vmatprep.subr.bf16.mxu0 0
        %1381 = vmatpush1.bf16.msra.mxu0 %v1334
        %1382 = vmatprep.subr.bf16.mxu0 0
        %1383 = vmatpush1.bf16.msra.mxu0 %v1335
        %1384 = vmatprep.mubr.bf16.mxu0 %v1249
        %1385 = vmatmul.mubr.bf16.gmra.mrb[0].mxu0 %v1248
        %v1386 = vpop.f32.mrb[0].mxu0
        %v1387 = vadd.f32 0.0, %v1386
        %v1388 = vpop.f32.mrb[0].mxu0
        %v1389 = vpop.f32.mrb[0].mxu0
        %v1390 = vadd.f32 0.0, %v1389
        %v1391 = vpop.f32.mrb[0].mxu0
        %1392 = vmatprep.mubr.bf16.mxu0 %v1251
        %1393 = vmatmul.mubr.bf16.gmra.mrb[0].mxu0 %v1250
        %v1394 = vpop.f32.mrb[0].mxu0
        %v1395 = vadd.f32 0.0, %v1394
        %v1396 = vpop.f32.mrb[0].mxu0
        %v1397 = vpop.f32.mrb[0].mxu0
        %v1398 = vpop.f32.mrb[0].mxu0
        %1399 = vdwg.mxu0
        %v1400 = vadd.f32 %v1236, %v1387
        %v1401 = vadd.f32 %v1237, %v1390
        %v1402 = vadd.f32 %v1238, %v1395
        %1403 = vst [vmem:[#allocation2] sm:$0xff] %v1400
        %1404 = vst [vmem:[#allocation2 + $0x8] sm:$0xff] %v1401
        %1405 = vst [vmem:[#allocation2 + $0x10] sm:$0xff] %v1402
        %v1406 = vld [vmem:[%s1199] sm:$0xf]
        %v1407 = vld [vmem:[%s1199 + $0x8] sm:$0x1]
        %v1408 = vld [vmem:[%s1199 + $0x18] sm:$0xf]
        %v1409 = vld [vmem:[%s1199 + $0x20] sm:$0x1]
        %v1410 = vld [vmem:[%s1199 + $0x30] sm:$0xf]
        %v1411 = vld [vmem:[%s1199 + $0x38] sm:$0x1]
        %s1412 = scalar_lea.vmem %s3, 128
        %v1413 = vld [vmem:[%s1412] sm:$0xf]
        %v1414 = vld [vmem:[%s1412 + $0x4] sm:$0xf]
        %v1415 = vld [vmem:[%s1412 + $0x8] sm:$0xf]
        %v1416 = vld [vmem:[%s1412 + $0xc] sm:$0xf]
        %v1417 = vld [vmem:[%s1412 + $0x10] sm:$0xf]
        %v1418 = vld [vmem:[%s1412 + $0x14] sm:$0xf]
        %v1419 = vld [vmem:[%s1412 + $0x18] sm:$0xf]
        %v1420 = vld [vmem:[%s1412 + $0x1c] sm:$0xf]
        %v1421 = vld [vmem:[%s1412 + $0x20] sm:$0xf]
        %v1422 = vld [vmem:[%s1412 + $0x24] sm:$0xf]
        %v1423 = vld [vmem:[%s1412 + $0x28] sm:$0xf]
        %v1424 = vld [vmem:[%s1412 + $0x2c] sm:$0xf]
        %v1425 = vld [vmem:[%s1412 + $0x30] sm:$0xf]
        %v1426 = vld [vmem:[%s1412 + $0x34] sm:$0xf]
        %v1427 = vld [vmem:[%s1412 + $0x38] sm:$0xf]
        %v1428 = vld [vmem:[%s1412 + $0x3c] sm:$0xf]
        %v1430 = vshrl.u32 %v1406, 16
        %v1432 = vrot.slane %v1430, 4
        %v1433 = vshll.u32 %v1406, 16
        %v1435 = vrot.slane %v1433, 5
        %v1436 = vor.u32 %v1432, %v1435
        %v1437 = vrot.slane %v1436, 4
        %v1439 = vshll.u32 %v1407, 16
        %v1441 = vrot.slane %v1439, 5
        %v1442 = vsel %vm586, %v1437, %v1441
        %v1444 = vshrl.u32 %v1408, 16
        %v1446 = vrot.slane %v1444, 4
        %v1447 = vshll.u32 %v1408, 16
        %v1449 = vrot.slane %v1447, 5
        %v1450 = vor.u32 %v1446, %v1449
        %v1451 = vrot.slane %v1450, 4
        %v1453 = vshll.u32 %v1409, 16
        %v1455 = vrot.slane %v1453, 5
        %v1456 = vsel %vm586, %v1451, %v1455
        %v1458 = vshrl.u32 %v1410, 16
        %v1460 = vrot.slane %v1458, 4
        %v1461 = vshll.u32 %v1410, 16
        %v1463 = vrot.slane %v1461, 5
        %v1464 = vor.u32 %v1460, %v1463
        %v1465 = vrot.slane %v1464, 4
        %v1467 = vshll.u32 %v1411, 16
        %v1469 = vrot.slane %v1467, 5
        %v1470 = vsel %vm586, %v1465, %v1469
        %v1471 = vld [vmem:[#allocation2] sm:$0xff]
        %v1472 = vld [vmem:[#allocation2 + $0x8] sm:$0xff]
        %v1473 = vld [vmem:[#allocation2 + $0x10] sm:$0xff]
        %v1474 = vunpack.c.l.b16 %v1442
        %v1475 = vunpack.c.l.b16 %v1456
        %v1476 = vunpack.c.l.b16 %v1470
        %v1477 = vpack.c.b16 %v1475, %v1474
        %v1478 = vpack.c.b16 %v1476, %v1476
        %v1497 = vunpack.c.l.b16 %v1413
        %v1498 = vunpack.c.l.b16 %v1414
        %v1499 = vunpack.c.l.b16 %v1415
        %v1500 = vunpack.c.l.b16 %v1416
        %v1501 = vunpack.c.l.b16 %v1417
        %v1502 = vunpack.c.l.b16 %v1418
        %v1503 = vunpack.c.l.b16 %v1419
        %v1504 = vunpack.c.l.b16 %v1420
        %v1505 = vunpack.c.l.b16 %v1421
        %v1506 = vunpack.c.l.b16 %v1422
        %v1507 = vunpack.c.l.b16 %v1423
        %v1508 = vunpack.c.l.b16 %v1424
        %v1509 = vunpack.c.l.b16 %v1425
        %v1510 = vunpack.c.l.b16 %v1426
        %v1511 = vunpack.c.l.b16 %v1427
        %v1512 = vunpack.c.l.b16 %v1428
        %v1513 = vpack.c.b16 %v1498, %v1497
        %v1514 = vpack.c.b16 %v1500, %v1499
        %v1515 = vpack.c.b16 %v1502, %v1501
        %v1516 = vpack.c.b16 %v1504, %v1503
        %v1517 = vpack.c.b16 %v1506, %v1505
        %v1518 = vpack.c.b16 %v1508, %v1507
        %v1519 = vpack.c.b16 %v1510, %v1509
        %v1520 = vpack.c.b16 %v1512, %v1511
        %1529 = vmatprep.subr.bf16.mxu0 0
        %1530 = vmatpush1.bf16.msra.mxu0 %v1513
        %1531 = vmatprep.subr.bf16.mxu0 0
        %1532 = vmatpush1.bf16.msra.mxu0 %v1514
        %1533 = vmatprep.subr.bf16.mxu0 0
        %1534 = vmatpush1.bf16.msra.mxu0 %v1515
        %1535 = vmatprep.subr.bf16.mxu0 0
        %1536 = vmatpush1.bf16.msra.mxu0 %v1516
        %1537 = vmatprep.subr.bf16.mxu0 0
        %1538 = vmatpush1.bf16.msra.mxu0 %v1517
        %1539 = vmatprep.subr.bf16.mxu0 0
        %1540 = vmatpush1.bf16.msra.mxu0 %v1518
        %1541 = vmatprep.subr.bf16.mxu0 0
        %1542 = vmatpush1.bf16.msra.mxu0 %v1519
        %1543 = vmatprep.subr.bf16.mxu0 0
        %1544 = vmatpush1.bf16.msra.mxu0 %v1520
        %1545 = vmatprep.subr.bf16.mxu0 0
        %1546 = vmatpush1.bf16.msra.mxu0 0
        %1547 = vmatprep.subr.bf16.mxu0 0
        %1548 = vmatpush1.bf16.msra.mxu0 0
        %1549 = vmatprep.subr.bf16.mxu0 0
        %1550 = vmatpush1.bf16.msra.mxu0 0
        %1551 = vmatprep.subr.bf16.mxu0 0
        %1552 = vmatpush1.bf16.msra.mxu0 0
        %1553 = vmatprep.subr.bf16.mxu0 0
        %1554 = vmatpush1.bf16.msra.mxu0 0
        %1555 = vmatprep.subr.bf16.mxu0 0
        %1556 = vmatpush1.bf16.msra.mxu0 0
        %1557 = vmatprep.subr.bf16.mxu0 0
        %1558 = vmatpush1.bf16.msra.mxu0 0
        %1559 = vmatprep.subr.bf16.mxu0 0
        %1560 = vmatpush1.bf16.msra.mxu0 0
        %1561 = vmatprep.mubr.bf16.mxu0 0
        %1562 = vmatmul.mubr.bf16.gmra.mrb[0].mxu0 %v1477
        %v1563 = vpop.f32.mrb[0].mxu0
        %v1564 = vadd.f32 0.0, %v1563
        %v1565 = vpop.f32.mrb[0].mxu0
        %v1566 = vpop.f32.mrb[0].mxu0
        %v1567 = vadd.f32 0.0, %v1566
        %v1568 = vpop.f32.mrb[0].mxu0
        %1569 = vmatprep.mubr.bf16.mxu0 0
        %1570 = vmatmul.mubr.bf16.gmra.mrb[0].mxu0 %v1478
        %v1571 = vpop.f32.mrb[0].mxu0
        %v1572 = vadd.f32 0.0, %v1571
        %v1573 = vpop.f32.mrb[0].mxu0
        %v1574 = vpop.f32.mrb[0].mxu0
        %v1575 = vpop.f32.mrb[0].mxu0
        %1576 = vdwg.mxu0
        %v1577 = vadd.f32 %v1471, %v1564
        %v1578 = vadd.f32 %v1472, %v1567
        %v1579 = vadd.f32 %v1473, %v1572
        %1580 = vst [vmem:[#allocation2] sm:$0xff] %v1577
        %1581 = vst [vmem:[#allocation2 + $0x8] sm:$0xff] %v1578
        %1582 = vst [vmem:[#allocation2 + $0x10] sm:$0xff] %v1579
        %v1583 = vld [vmem:[%s331] sm:$0xff]
        %v1584 = vld [vmem:[%s1203] sm:$0xf]
        %v1585 = vld [vmem:[%s1203 + $0x4] sm:$0xf]
        %v1586 = vld [vmem:[%s1203 + $0x8] sm:$0xf]
        %v1587 = vld [vmem:[%s1203 + $0xc] sm:$0xf]
        %v1588 = vld [vmem:[%s1203 + $0x10] sm:$0xf]
        %v1589 = vld [vmem:[%s1203 + $0x14] sm:$0xf]
        %v1590 = vld [vmem:[%s1203 + $0x18] sm:$0xf]
        %v1591 = vld [vmem:[%s1203 + $0x1c] sm:$0xf]
        %v1592 = vld [vmem:[%s1203 + $0x20] sm:$0xf]
        %v1593 = vld [vmem:[%s1203 + $0x24] sm:$0xf]
        %v1594 = vld [vmem:[%s1203 + $0x28] sm:$0xf]
        %v1595 = vld [vmem:[%s1203 + $0x2c] sm:$0xf]
        %v1596 = vld [vmem:[%s1203 + $0x30] sm:$0xf]
        %v1597 = vld [vmem:[%s1203 + $0x34] sm:$0xf]
        %v1598 = vld [vmem:[%s1203 + $0x38] sm:$0xf]
        %v1599 = vld [vmem:[%s1203 + $0x3c] sm:$0xf]
        %v1600 = vld [vmem:[%s1203 + $0x40] sm:$0xf]
        %v1601 = vld [vmem:[%s1203 + $0x44] sm:$0xf]
        %v1602 = vld [vmem:[%s1203 + $0x48] sm:$0xf]
        %v1603 = vld [vmem:[%s1203 + $0x4c] sm:$0xf]
        %v1604 = vld [vmem:[%s1203 + $0x50] sm:$0xf]
        %v1605 = vld [vmem:[%s1203 + $0x54] sm:$0xf]
        %v1606 = vld [vmem:[%s1203 + $0x58] sm:$0xf]
        %v1607 = vld [vmem:[%s1203 + $0x5c] sm:$0xf]
        %v1608 = vld [vmem:[%s1203 + $0x60] sm:$0xf]
        %v1609 = vld [vmem:[%s1203 + $0x64] sm:$0xf]
        %v1610 = vld [vmem:[%s1203 + $0x68] sm:$0xf]
        %v1611 = vld [vmem:[%s1203 + $0x6c] sm:$0xf]
        %v1612 = vld [vmem:[%s1203 + $0x70] sm:$0xf]
        %v1613 = vld [vmem:[%s1203 + $0x74] sm:$0xf]
        %v1614 = vld [vmem:[%s1203 + $0x78] sm:$0xf]
        %v1615 = vld [vmem:[%s1203 + $0x7c] sm:$0xf]
        %v1616 = vld [vmem:[#allocation2 + $0x18] sm:$0xff]
        %v1618 = vunpack.c.l.b16 %v1583
        %v1619 = vunpack.c.h.b16 %v1583
        %v1620 = vpack.c.b16 %v1618, %v1618
        %v1621 = vpack.c.b16 %v1619, %v1619
        %v1656 = vunpack.c.l.b16 %v1584
        %v1657 = vunpack.c.l.b16 %v1585
        %v1658 = vunpack.c.l.b16 %v1586
        %v1659 = vunpack.c.l.b16 %v1587
        %v1660 = vunpack.c.l.b16 %v1588
        %v1661 = vunpack.c.l.b16 %v1589
        %v1662 = vunpack.c.l.b16 %v1590
        %v1663 = vunpack.c.l.b16 %v1591
        %v1664 = vunpack.c.l.b16 %v1592
        %v1665 = vunpack.c.l.b16 %v1593
        %v1666 = vunpack.c.l.b16 %v1594
        %v1667 = vunpack.c.l.b16 %v1595
        %v1668 = vunpack.c.l.b16 %v1596
        %v1669 = vunpack.c.l.b16 %v1597
        %v1670 = vunpack.c.l.b16 %v1598
        %v1671 = vunpack.c.l.b16 %v1599
        %v1672 = vunpack.c.l.b16 %v1600
        %v1673 = vunpack.c.l.b16 %v1601
        %v1674 = vunpack.c.l.b16 %v1602
        %v1675 = vunpack.c.l.b16 %v1603
        %v1676 = vunpack.c.l.b16 %v1604
        %v1677 = vunpack.c.l.b16 %v1605
        %v1678 = vunpack.c.l.b16 %v1606
        %v1679 = vunpack.c.l.b16 %v1607
        %v1680 = vunpack.c.l.b16 %v1608
        %v1681 = vunpack.c.l.b16 %v1609
        %v1682 = vunpack.c.l.b16 %v1610
        %v1683 = vunpack.c.l.b16 %v1611
        %v1684 = vunpack.c.l.b16 %v1612
        %v1685 = vunpack.c.l.b16 %v1613
        %v1686 = vunpack.c.l.b16 %v1614
        %v1687 = vunpack.c.l.b16 %v1615
        %v1688 = vpack.c.b16 %v1657, %v1656
        %v1689 = vpack.c.b16 %v1659, %v1658
        %v1690 = vpack.c.b16 %v1661, %v1660
        %v1691 = vpack.c.b16 %v1663, %v1662
        %v1692 = vpack.c.b16 %v1665, %v1664
        %v1693 = vpack.c.b16 %v1667, %v1666
        %v1694 = vpack.c.b16 %v1669, %v1668
        %v1695 = vpack.c.b16 %v1671, %v1670
        %v1696 = vpack.c.b16 %v1673, %v1672
        %v1697 = vpack.c.b16 %v1675, %v1674
        %v1698 = vpack.c.b16 %v1677, %v1676
        %v1699 = vpack.c.b16 %v1679, %v1678
        %v1700 = vpack.c.b16 %v1681, %v1680
        %v1701 = vpack.c.b16 %v1683, %v1682
        %v1702 = vpack.c.b16 %v1685, %v1684
        %v1703 = vpack.c.b16 %v1687, %v1686
        %1720 = vmatprep.subr.bf16.mxu0 0
        %1721 = vmatpush1.bf16.msra.mxu0 %v1688
        %1722 = vmatprep.subr.bf16.mxu0 0
        %1723 = vmatpush1.bf16.msra.mxu0 %v1689
        %1724 = vmatprep.subr.bf16.mxu0 0
        %1725 = vmatpush1.bf16.msra.mxu0 %v1690
        %1726 = vmatprep.subr.bf16.mxu0 0
        %1727 = vmatpush1.bf16.msra.mxu0 %v1691
        %1728 = vmatprep.subr.bf16.mxu0 0
        %1729 = vmatpush1.bf16.msra.mxu0 %v1692
        %1730 = vmatprep.subr.bf16.mxu0 0
        %1731 = vmatpush1.bf16.msra.mxu0 %v1693
        %1732 = vmatprep.subr.bf16.mxu0 0
        %1733 = vmatpush1.bf16.msra.mxu0 %v1694
        %1734 = vmatprep.subr.bf16.mxu0 0
        %1735 = vmatpush1.bf16.msra.mxu0 %v1695
        %1736 = vmatprep.subr.bf16.mxu0 0
        %1737 = vmatpush1.bf16.msra.mxu0 %v1696
        %1738 = vmatprep.subr.bf16.mxu0 0
        %1739 = vmatpush1.bf16.msra.mxu0 %v1697
        %1740 = vmatprep.subr.bf16.mxu0 0
        %1741 = vmatpush1.bf16.msra.mxu0 %v1698
        %1742 = vmatprep.subr.bf16.mxu0 0
        %1743 = vmatpush1.bf16.msra.mxu0 %v1699
        %1744 = vmatprep.subr.bf16.mxu0 0
        %1745 = vmatpush1.bf16.msra.mxu0 %v1700
        %1746 = vmatprep.subr.bf16.mxu0 0
        %1747 = vmatpush1.bf16.msra.mxu0 %v1701
        %1748 = vmatprep.subr.bf16.mxu0 0
        %1749 = vmatpush1.bf16.msra.mxu0 %v1702
        %1750 = vmatprep.subr.bf16.mxu0 0
        %1751 = vmatpush1.bf16.msra.mxu0 %v1703
        %1752 = vmatprep.mubr.bf16.mxu0 %v1621
        %1753 = vmatmul.mubr.bf16.gmra.mrb[0].mxu0 %v1620
        %v1754 = vpop.f32.mrb[0].mxu0
        %v1755 = vadd.f32 0.0, %v1754
        %v1756 = vpop.f32.mrb[0].mxu0
        %v1757 = vpop.f32.mrb[0].mxu0
        %v1758 = vpop.f32.mrb[0].mxu0
        %1759 = vdwg.mxu0
        %v1760 = vadd.f32 %v1616, %v1755
        %1761 = vst [vmem:[#allocation2 + $0x18] sm:$0xff] %v1760
        %v1762 = vld [vmem:[%s331] sm:$0xf]
        %v1763 = vld [vmem:[%s331 + $0x8] sm:$0x1]
        %v1764 = vld [vmem:[%s1412] sm:$0xf]
        %v1765 = vld [vmem:[%s1412 + $0x4] sm:$0xf]
        %v1766 = vld [vmem:[%s1412 + $0x8] sm:$0xf]
        %v1767 = vld [vmem:[%s1412 + $0xc] sm:$0xf]
        %v1768 = vld [vmem:[%s1412 + $0x10] sm:$0xf]
        %v1769 = vld [vmem:[%s1412 + $0x14] sm:$0xf]
        %v1770 = vld [vmem:[%s1412 + $0x18] sm:$0xf]
        %v1771 = vld [vmem:[%s1412 + $0x1c] sm:$0xf]
        %v1772 = vld [vmem:[%s1412 + $0x20] sm:$0xf]
        %v1773 = vld [vmem:[%s1412 + $0x24] sm:$0xf]
        %v1774 = vld [vmem:[%s1412 + $0x28] sm:$0xf]
        %v1775 = vld [vmem:[%s1412 + $0x2c] sm:$0xf]
        %v1776 = vld [vmem:[%s1412 + $0x30] sm:$0xf]
        %v1777 = vld [vmem:[%s1412 + $0x34] sm:$0xf]
        %v1778 = vld [vmem:[%s1412 + $0x38] sm:$0xf]
        %v1779 = vld [vmem:[%s1412 + $0x3c] sm:$0xf]
        %v1780 = vld [vmem:[#allocation2 + $0x18] sm:$0xff]
        %v1783 = vunpack.c.l.b16 %v1762
        %v1784 = vunpack.c.l.b16 %v1763
        %v1785 = vpack.c.b16 %v1784, %v1783
        %v1787 = vshrl.u32 %v1785, 16
        %v1789 = vshll.u32 %v1785, 16
        %v1791 = vrot.slane %v1789, 1
        %v1792 = vor.u32 %v1787, %v1791
        %v1810 = vunpack.c.l.b16 %v1764
        %v1811 = vunpack.c.l.b16 %v1765
        %v1812 = vunpack.c.l.b16 %v1766
        %v1813 = vunpack.c.l.b16 %v1767
        %v1814 = vunpack.c.l.b16 %v1768
        %v1815 = vunpack.c.l.b16 %v1769
        %v1816 = vunpack.c.l.b16 %v1770
        %v1817 = vunpack.c.l.b16 %v1771
        %v1818 = vunpack.c.l.b16 %v1772
        %v1819 = vunpack.c.l.b16 %v1773
        %v1820 = vunpack.c.l.b16 %v1774
        %v1821 = vunpack.c.l.b16 %v1775
        %v1822 = vunpack.c.l.b16 %v1776
        %v1823 = vunpack.c.l.b16 %v1777
        %v1824 = vunpack.c.l.b16 %v1778
        %v1825 = vunpack.c.l.b16 %v1779
        %v1826 = vpack.c.b16 %v1811, %v1810
        %v1827 = vpack.c.b16 %v1813, %v1812
        %v1828 = vpack.c.b16 %v1815, %v1814
        %v1829 = vpack.c.b16 %v1817, %v1816
        %v1830 = vpack.c.b16 %v1819, %v1818
        %v1831 = vpack.c.b16 %v1821, %v1820
        %v1832 = vpack.c.b16 %v1823, %v1822
        %v1833 = vpack.c.b16 %v1825, %v1824
        %1842 = vmatprep.subr.bf16.mxu0 0
        %1843 = vmatpush1.bf16.msra.mxu0 %v1826
        %1844 = vmatprep.subr.bf16.mxu0 0
        %1845 = vmatpush1.bf16.msra.mxu0 %v1827
        %1846 = vmatprep.subr.bf16.mxu0 0
        %1847 = vmatpush1.bf16.msra.mxu0 %v1828
        %1848 = vmatprep.subr.bf16.mxu0 0
        %1849 = vmatpush1.bf16.msra.mxu0 %v1829
        %1850 = vmatprep.subr.bf16.mxu0 0
        %1851 = vmatpush1.bf16.msra.mxu0 %v1830
        %1852 = vmatprep.subr.bf16.mxu0 0
        %1853 = vmatpush1.bf16.msra.mxu0 %v1831
        %1854 = vmatprep.subr.bf16.mxu0 0
        %1855 = vmatpush1.bf16.msra.mxu0 %v1832
        %1856 = vmatprep.subr.bf16.mxu0 0
        %1857 = vmatpush1.bf16.msra.mxu0 %v1833
        %1858 = vmatprep.subr.bf16.mxu0 0
        %1859 = vmatpush1.bf16.msra.mxu0 0
        %1860 = vmatprep.subr.bf16.mxu0 0
        %1861 = vmatpush1.bf16.msra.mxu0 0
        %1862 = vmatprep.subr.bf16.mxu0 0
        %1863 = vmatpush1.bf16.msra.mxu0 0
        %1864 = vmatprep.subr.bf16.mxu0 0
        %1865 = vmatpush1.bf16.msra.mxu0 0
        %1866 = vmatprep.subr.bf16.mxu0 0
        %1867 = vmatpush1.bf16.msra.mxu0 0
        %1868 = vmatprep.subr.bf16.mxu0 0
        %1869 = vmatpush1.bf16.msra.mxu0 0
        %1870 = vmatprep.subr.bf16.mxu0 0
        %1871 = vmatpush1.bf16.msra.mxu0 0
        %1872 = vmatprep.subr.bf16.mxu0 0
        %1873 = vmatpush1.bf16.msra.mxu0 0
        %1874 = vmatprep.mubr.bf16.mxu0 0
        %1875 = vmatmul.mubr.bf16.gmra.mrb[0].mxu0 %v1792
        %v1876 = vpop.f32.mrb[0].mxu0
        %v1877 = vadd.f32 0.0, %v1876
        %v1878 = vpop.f32.mrb[0].mxu0
        %v1879 = vpop.f32.mrb[0].mxu0
        %v1880 = vpop.f32.mrb[0].mxu0
        %1881 = vdwg.mxu0
        %v1882 = vadd.f32 %v1780, %v1877
        %1883 = vst [vmem:[#allocation2 + $0x18] sm:$0xff] %v1882
        %v1884 = vld [vmem:[#allocation2] sm:$0xff]
        %v1885 = vld [vmem:[#allocation2 + $0x8] sm:$0xff]
        %v1886 = vld [vmem:[#allocation2 + $0x10] sm:$0xff]
        %v1887 = vld [vmem:[#allocation2 + $0x18] sm:$0xff]
        %1888 = vst [vmem:[%s297] sm:$0xff] %v1884
        %1889 = vst [vmem:[%s297 + $0x8] sm:$0xff] %v1885
        %1890 = vst [vmem:[%s297 + $0x10] sm:$0xff] %v1886
        %1891 = vst [vmem:[%s297 + $0x18] sm:$0xff] %v1887
        %s1892 = sand.u32 %s164, 1
        %s1893 = scalar_lea.sflag [#allocation4], %s1892
        %s1894 = sand.u32 %s164, 1
        %s1895 = smul.addr %s1894, 32
        %s1896 = scalar_lea.vmem [#allocation3], %s1895
        // Predicated region
        $region41: #{tpu_custom_call.1} parent=39 // pred_check
          %p1897 = pneg %p174
        $region42: #{tpu_custom_call.1} parent=39 // pred_check_branch
          %1899 = sbr.rel (%p1897) target = $region44
        $region43: #{tpu_custom_call.1} parent=39 // pred_region
          %s1900 = smul.u32 4, %s24
          %s1902 = ssub.s32 512, 512
          %1903 = vsyncadd %s1893, %s1902
          %s1904 = smul.addr %s23, 8
          %s1905 = sadd.s32 %s1900, %s1904
          %s1906 = smul.addr %s1905, 128
          %s1907 = scalar_lea.hbm %s5, %s1906
          %s1908 = sshll.u32 %s1896, 4
          %s1909 = int_to_ptr.vmem [resolvable:$true] %s1908
          %1914 = dma.vmem_to_hbm [thread:$0]  %s1909, 512, %s1907, %s1893, 128, 128, 8
        $region44: #{tpu_custom_call.1} parent=39 // pred_fallthru
          _
      $region40: #{tpu_custom_call.1} parent=5 // pred_fallthru
        _
      %p1915 = scmp.le.s32.totalorder 2, %s14
      // Predicated region
      $region45: #{tpu_custom_call.1} parent=5 // pred_check
        %p1916 = pneg %p1915
      $region46: #{tpu_custom_call.1} parent=5 // pred_check_branch
        %1918 = sbr.rel (%p1916) target = $region48
      $region47: #{tpu_custom_call.1} parent=5 // pred_region
        %s1919 = ssub.s32 %s14, 2
        // Predicated region
        $region49: #{tpu_custom_call.1} parent=47 // pred_check
          %p1920 = pneg %p180
        $region50: #{tpu_custom_call.1} parent=47 // pred_check_branch
          %1922 = sbr.rel (%p1920) target = $region52
        $region51: #{tpu_custom_call.1} parent=47 // pred_region
          %s1923 = sand.u32 %s165, 1
          %s1924 = scalar_lea.sflag [#allocation4], %s1923
          %s1925 = sand.u32 %s165, 1
          %s1926 = smul.addr %s1925, 32
          %s1927 = scalar_lea.vmem [#allocation3], %s1926
          %1928 = dma.done %s1924, 512
        $region52: #{tpu_custom_call.1} parent=47 // pred_fallthru
          _
      $region48: #{tpu_custom_call.1} parent=5 // pred_fallthru
        _
    $region6: #{tpu_custom_call.1} parent=1 // loop_footer
      %s18 = sadd.s32 1, %s14
    $region7: #{tpu_custom_call.1} parent=1 // loop_footer_branch
      %13 = sbr.rel target = $region3
    $region8: #{tpu_custom_call.1} parent=1 // loop_exit
      _
    %1929 = vsyncpa [#allocation4], 1
    %s1930 = scalar_lea.sflag [#allocation4], 1
    %1931 = vsyncpa %s1930, 1

</llo_original>
